<compile_context>
chip_gen: v6e
topology: v6e:2x2x1
jax: 0.10.0
libtpu: 0.0.40
codegen_flags: <defaults>
</compile_context>

<pallas_src>
import functools
import math

import jax
import jax.numpy as jnp
from jax import lax
from jax.experimental import pallas as pl
from jax.experimental.pallas import tpu as pltpu


_CDT = jnp.bfloat16   # matmul operand dtype; accumulation stays f32 everywhere


# ----------------------------- kernel helpers -----------------------------

def _layer_norm(y, gamma, beta, eps):
    mean = jnp.mean(y, axis=-1, keepdims=True)
    var = jnp.mean((y - mean) ** 2, axis=-1, keepdims=True)   # biased variance
    return (y - mean) * lax.rsqrt(var + eps) * gamma + beta


def _mm(a, w, b=None):
    """bf16-operand matmul with f32 accumulation (+ optional f32 bias)."""
    out = jnp.dot(a.astype(w.dtype), w, preferred_element_type=jnp.float32)
    return out if b is None else out + b


# ----------------------------- fused Pallas kernel -----------------------------

def _transformer_kernel(
    src_ref,
    embed_w_ref, embed_b_ref,
    wqkv_ref, bqkv_ref, wo_ref, bo_ref,
    ln1_g_ref, ln1_b_ref,
    ffn_w1_ref, ffn_b1_ref, ffn_w2_ref, ffn_b2_ref,
    ln2_g_ref, ln2_b_ref,
    gen_w1_ref, gen_b1_ref, gen_w2_ref, gen_b2_ref,
    o_ref,
    *, n_layers, n_head, eps,
):
    B, S, IN = src_ref.shape
    D = embed_w_ref.shape[1]
    dk = D // n_head
    M = B * S

    # ---- embedding: Linear(input_size, d_model) on the whole (B*S, IN) slab ----
    x = _mm(src_ref[...].reshape(M, IN), embed_w_ref[...], embed_b_ref[...])

    # ---- encoder layers (statically unrolled; fine at small n_layers) ----
    # TODO(synk): for large n_layers move the layer loop onto a grid axis and
    # stream per-layer weights (double-buffered) instead of unrolling.
    for l in range(n_layers):
        # fused QKV projection; Q columns (weights+bias) pre-scaled by 1/sqrt(dk)
        qkv = _mm(x, wqkv_ref[l], bqkv_ref[l])             # (B*S, 3D) f32
        qkv3 = qkv.reshape(B, S, 3 * D)                    # aligned leading split

        # per-head attention, batched over the batch dim with 3-D einsums
        ctx_heads = []
        for h in range(n_head):
            c0 = h * dk
            qh = qkv3[:, :, c0:c0 + dk].astype(_CDT)                 # (B, S, dk)
            kh = qkv3[:, :, D + c0:D + c0 + dk].astype(_CDT)
            vh = qkv3[:, :, 2 * D + c0:2 * D + c0 + dk].astype(_CDT)
            s_mat = jnp.einsum('bqd,bkd->bqk', qh, kh,
                               preferred_element_type=jnp.float32)   # no kh.T
            s_mat = s_mat - jnp.max(s_mat, axis=-1, keepdims=True)
            p = jnp.exp(s_mat)
            p = p / jnp.sum(p, axis=-1, keepdims=True)               # exact softmax
            ctx_h = jnp.einsum('bqk,bkd->bqd', p.astype(_CDT), vh,
                               preferred_element_type=jnp.float32)   # (B, S, dk)
            ctx_heads.append(ctx_h)
        ctx = jnp.concatenate(ctx_heads, axis=-1).reshape(M, D)      # (B*S, D)
        attn = _mm(ctx, wo_ref[l], bo_ref[l])                        # one wide Wo matmul

        # add & LayerNorm 1 (dropout == identity at inference)
        x = _layer_norm(x + attn, ln1_g_ref[l], ln1_b_ref[l], eps)

        # position-wise FFN with ReLU
        h1 = jnp.maximum(_mm(x, ffn_w1_ref[l], ffn_b1_ref[l]), 0.0)
        h2 = _mm(h1, ffn_w2_ref[l], ffn_b2_ref[l])

        # add & LayerNorm 2
        x = _layer_norm(x + h2, ln2_g_ref[l], ln2_b_ref[l], eps)

    # ---- generator: view(B, S*D) -> Linear -> ReLU -> Linear ----
    # row-major flatten @ W1  ==  sum_s x[:, s, :] @ W1[s]   (gen_w1 is (S, D, F))
    F = gen_b1_ref.shape[-1]
    hg = jnp.zeros((B, F), jnp.float32)
    # TODO(synk): at production seq lengths replace this short static loop with a
    # single (B, S*D) @ (S*D, F) contraction (needs an s-major relayout of x).
    for s in range(S):
        xs = jnp.concatenate(
            [x[b * S + s:b * S + s + 1, :] for b in range(B)], axis=0)   # (B, D)
        hg = hg + _mm(xs, gen_w1_ref[s])
    hg = jnp.maximum(hg + gen_b1_ref[...], 0.0)
    out = _mm(hg, gen_w2_ref[...], gen_b2_ref[...])
    o_ref[...] = out.astype(o_ref.dtype)                   # single (B, OUT) store


# ----------------------------- host wrapper -----------------------------

def _prepare_weights(params, n_head, seq_len):
    """Host-side prep: fold 1/sqrt(dk) into the Q projection (weights + bias),
    reshape the generator fc1 weight to (S, D, F), cast matmul weights to bf16."""
    D = params["embed_w"].shape[1]
    dk = D // n_head
    q_scale = 1.0 / math.sqrt(dk)
    col_scale = jnp.concatenate(
        [jnp.full((D,), q_scale, jnp.float32), jnp.ones((2 * D,), jnp.float32)])
    wqkv = params["wqkv"] * col_scale
    bqkv = params["bqkv"] * col_scale
    F = params["gen_w1"].shape[1]
    gen_w1 = params["gen_w1"].reshape(seq_len, D, F)

    bf16 = lambda a: a.astype(jnp.bfloat16)
    return [
        bf16(params["embed_w"]), params["embed_b"],
        bf16(wqkv), bqkv, bf16(params["wo"]), params["bo"],
        params["ln1_g"], params["ln1_b"],
        bf16(params["ffn_w1"]), params["ffn_b1"],
        bf16(params["ffn_w2"]), params["ffn_b2"],
        params["ln2_g"], params["ln2_b"],
        bf16(gen_w1), params["gen_b1"],
        bf16(params["gen_w2"]), params["gen_b2"],
    ]


def transformer_forward(src, params, n_head, n_layers, eps=1e-12):
    B, S, IN = src.shape
    D = params["embed_w"].shape[1]
    OUT = params["gen_w2"].shape[1]
    assert D % n_head == 0
    assert params["gen_w1"].shape[0] == S * D

    weights = _prepare_weights(params, n_head=n_head, seq_len=S)

    def resident(a):            # full array, fetched once (constant block index)
        nd = a.ndim
        return pl.BlockSpec(a.shape, lambda i, _nd=nd: (0,) * _nd)

    in_specs = [resident(src)] + [resident(w) for w in weights]

    out = pl.pallas_call(
        functools.partial(_transformer_kernel,
                          n_layers=n_layers, n_head=n_head, eps=eps),
        grid=(1,),                                  # whole batch in one step
        in_specs=in_specs,
        out_specs=pl.BlockSpec((B, OUT), lambda i: (0, 0)),
        out_shape=jax.ShapeDtypeStruct((B, OUT), jnp.float32),
        compiler_params=pltpu.CompilerParams(
            dimension_semantics=("arbitrary",),
            vmem_limit_bytes=32 * 1024 * 1024,      # well within v5e/v6e/v7x budgets
        ),
    )(src, *weights)
    return out


# ----------------------------- pure-JAX reference -----------------------------
# Mirrors the PyTorch module's math and the kernel's precision policy
# (bf16 matmul operands, f32 accumulation / LayerNorm / softmax).

def transformer_reference(src, params, n_head, n_layers, eps=1e-12):
    B, S, _ = src.shape
    D = params["embed_w"].shape[1]
    dk = D // n_head
    scale = 1.0 / math.sqrt(dk)
    bf16, f32 = jnp.bfloat16, jnp.float32

    def mm(a, w):
        return jnp.matmul(a.astype(bf16), w.astype(bf16), preferred_element_type=f32)

    def ln(y, g, b):
        m = jnp.mean(y, -1, keepdims=True)
        v = jnp.mean((y - m) ** 2, -1, keepdims=True)
        return (y - m) / jnp.sqrt(v + eps) * g + b

    x = mm(src, params["embed_w"]) + params["embed_b"][0]
    for l in range(n_layers):
        qkv = mm(x, params["wqkv"][l]) + params["bqkv"][l][0]
        q, k, v = qkv[..., :D], qkv[..., D:2 * D], qkv[..., 2 * D:]
        split = lambda t: t.reshape(B, S, n_head, dk).transpose(0, 2, 1, 3)
        qh, kh, vh = split(q), split(k), split(v)
        s_ = jnp.einsum('bhqd,bhkd->bhqk', qh.astype(bf16), kh.astype(bf16),
                        preferred_element_type=f32) * scale
        s_ = s_ - jnp.max(s_, axis=-1, keepdims=True)
        p = jnp.exp(s_)
        p = p / jnp.sum(p, axis=-1, keepdims=True)
        ctx = jnp.einsum('bhqk,bhkd->bhqd', p.astype(bf16), vh.astype(bf16),
                         preferred_element_type=f32)
        ctx = ctx.transpose(0, 2, 1, 3).reshape(B, S, D)
        attn = mm(ctx, params["wo"][l]) + params["bo"][l][0]
        x = ln(x + attn, params["ln1_g"][l][0], params["ln1_b"][l][0])
        h1 = jax.nn.relu(mm(x, params["ffn_w1"][l]) + params["ffn_b1"][l][0])
        h2 = mm(h1, params["ffn_w2"][l]) + params["ffn_b2"][l][0]
        x = ln(x + h2, params["ln2_g"][l][0], params["ln2_b"][l][0])
    flat = x.reshape(B, -1)
    hg = jax.nn.relu(mm(flat, params["gen_w1"]) + params["gen_b1"][0])
    return mm(hg, params["gen_w2"]) + params["gen_b2"][0]


# ----------------------------- parameter init -----------------------------

def init_params(key, input_size, d_model, n_head, ffn_hidden, n_layers, seq_len,
                output_size):
    keys = jax.random.split(key, 20)
    ki = iter(keys)

    def w(shape, scale=0.02):
        return scale * jax.random.normal(next(ki), shape, jnp.float32)

    L, D, F = n_layers, d_model, ffn_hidden
    return {
        "embed_w": w((input_size, D)),        "embed_b": w((1, D)),
        "wqkv":    w((L, D, 3 * D)),          "bqkv":    w((L, 1, 3 * D)),
        "wo":      w((L, D, D)),              "bo":      w((L, 1, D)),
        "ln1_g":   1.0 + w((L, 1, D)),        "ln1_b":   w((L, 1, D)),
        "ffn_w1":  w((L, D, F)),              "ffn_b1":  w((L, 1, F)),
        "ffn_w2":  w((L, F, D)),              "ffn_b2":  w((L, 1, D)),
        "ln2_g":   1.0 + w((L, 1, D)),        "ln2_b":   w((L, 1, D)),
        "gen_w1":  w((seq_len * D, F)),       "gen_b1":  w((1, F)),
        "gen_w2":  w((F, output_size)),       "gen_b2":  w((1, output_size)),
    }


# ----------------------------- demo -----------------------------

if __name__ == "__main__":
    # Small shapes consistent with the module: generator_input_size == seq * d_model.
    B, S, IN = 2, 8, 16
    D, H, FFN, L, OUT = 32, 4, 64, 2, 3

    key = jax.random.PRNGKey(0)
    k_x, k_p = jax.random.split(key)
    src = jax.random.normal(k_x, (B, S, IN), jnp.float32)
    params = init_params(k_p, IN, D, H, FFN, L, S, OUT)

    out = transformer_forward(src, params, n_head=H, n_layers=L)
    out = jax.block_until_ready(out)
    assert out.shape == (B, OUT), out.shape
    assert bool(jnp.all(jnp.isfinite(out)))

    ref = transformer_reference(src, params, n_head=H, n_layers=L)
    err = float(jnp.max(jnp.abs(out - ref)))
    assert err < 1e-2, f"mismatch vs reference: max abs err = {err}"

    print("KERNEL_OK")
</pallas_src>

<mosaic_0001>
module attributes {stable_mosaic.version = 11 : i64} {
  func.func @_transformer_kernel(%arg0: i32, %arg1: memref<2x8x16xf32, #tpu.memory_space<vmem>>, %arg2: memref<16x32xbf16, #tpu.memory_space<vmem>>, %arg3: memref<1x32xf32, #tpu.memory_space<vmem>>, %arg4: memref<2x32x96xbf16, #tpu.memory_space<vmem>>, %arg5: memref<2x1x96xf32, #tpu.memory_space<vmem>>, %arg6: memref<2x32x32xbf16, #tpu.memory_space<vmem>>, %arg7: memref<2x1x32xf32, #tpu.memory_space<vmem>>, %arg8: memref<2x1x32xf32, #tpu.memory_space<vmem>>, %arg9: memref<2x1x32xf32, #tpu.memory_space<vmem>>, %arg10: memref<2x32x64xbf16, #tpu.memory_space<vmem>>, %arg11: memref<2x1x64xf32, #tpu.memory_space<vmem>>, %arg12: memref<2x64x32xbf16, #tpu.memory_space<vmem>>, %arg13: memref<2x1x32xf32, #tpu.memory_space<vmem>>, %arg14: memref<2x1x32xf32, #tpu.memory_space<vmem>>, %arg15: memref<2x1x32xf32, #tpu.memory_space<vmem>>, %arg16: memref<8x32x64xbf16, #tpu.memory_space<vmem>>, %arg17: memref<1x64xf32, #tpu.memory_space<vmem>>, %arg18: memref<64x3xbf16, #tpu.memory_space<vmem>>, %arg19: memref<1x3xf32, #tpu.memory_space<vmem>>, %arg20: memref<2x3xf32, #tpu.memory_space<vmem>>) attributes {dimension_semantics = [#tpu.dimension_semantics<arbitrary>], iteration_bounds = array<i64: 1>, scalar_prefetch = 0 : i64, scratch_operands = 0 : i64, tpu.core_type = #tpu.core_type<tc>, window_params = [{pipeline_mode = #tpu.pipeline_mode<synchronous>, transform_indices = @transform_0, window_bounds = array<i64: 2, 8, 16>}, {pipeline_mode = #tpu.pipeline_mode<synchronous>, transform_indices = @transform_1, window_bounds = array<i64: 16, 32>}, {pipeline_mode = #tpu.pipeline_mode<synchronous>, transform_indices = @transform_2, window_bounds = array<i64: 1, 32>}, {pipeline_mode = #tpu.pipeline_mode<synchronous>, transform_indices = @transform_3, window_bounds = array<i64: 2, 32, 96>}, {pipeline_mode = #tpu.pipeline_mode<synchronous>, transform_indices = @transform_4, window_bounds = array<i64: 2, 1, 96>}, {pipeline_mode = #tpu.pipeline_mode<synchronous>, transform_indices = @transform_5, window_bounds = array<i64: 2, 32, 32>}, {pipeline_mode = #tpu.pipeline_mode<synchronous>, transform_indices = @transform_6, window_bounds = array<i64: 2, 1, 32>}, {pipeline_mode = #tpu.pipeline_mode<synchronous>, transform_indices = @transform_7, window_bounds = array<i64: 2, 1, 32>}, {pipeline_mode = #tpu.pipeline_mode<synchronous>, transform_indices = @transform_8, window_bounds = array<i64: 2, 1, 32>}, {pipeline_mode = #tpu.pipeline_mode<synchronous>, transform_indices = @transform_9, window_bounds = array<i64: 2, 32, 64>}, {pipeline_mode = #tpu.pipeline_mode<synchronous>, transform_indices = @transform_10, window_bounds = array<i64: 2, 1, 64>}, {pipeline_mode = #tpu.pipeline_mode<synchronous>, transform_indices = @transform_11, window_bounds = array<i64: 2, 64, 32>}, {pipeline_mode = #tpu.pipeline_mode<synchronous>, transform_indices = @transform_12, window_bounds = array<i64: 2, 1, 32>}, {pipeline_mode = #tpu.pipeline_mode<synchronous>, transform_indices = @transform_13, window_bounds = array<i64: 2, 1, 32>}, {pipeline_mode = #tpu.pipeline_mode<synchronous>, transform_indices = @transform_14, window_bounds = array<i64: 2, 1, 32>}, {pipeline_mode = #tpu.pipeline_mode<synchronous>, transform_indices = @transform_15, window_bounds = array<i64: 8, 32, 64>}, {pipeline_mode = #tpu.pipeline_mode<synchronous>, transform_indices = @transform_16, window_bounds = array<i64: 1, 64>}, {pipeline_mode = #tpu.pipeline_mode<synchronous>, transform_indices = @transform_17, window_bounds = array<i64: 64, 3>}, {pipeline_mode = #tpu.pipeline_mode<synchronous>, transform_indices = @transform_18, window_bounds = array<i64: 1, 3>}, {pipeline_mode = #tpu.pipeline_mode<synchronous>, transform_indices = @transform_19, window_bounds = array<i64: 2, 3>}]} {
    %c0 = arith.constant 0 : index
    %c0_0 = arith.constant 0 : index
    %c0_1 = arith.constant 0 : index
    %0 = vector.load %arg1[%c0, %c0_0, %c0_1] : memref<2x8x16xf32, #tpu.memory_space<vmem>>, vector<2x8x16xf32>
    %1 = vector.shape_cast %0 : vector<2x8x16xf32> to vector<16x16xf32>
    %c0_2 = arith.constant 0 : index
    %c0_3 = arith.constant 0 : index
    %2 = vector.load %arg2[%c0_2, %c0_3] : memref<16x32xbf16, #tpu.memory_space<vmem>>, vector<16x32xbf16>
    %c0_4 = arith.constant 0 : index
    %c0_5 = arith.constant 0 : index
    %3 = vector.load %arg3[%c0_4, %c0_5] : memref<1x32xf32, #tpu.memory_space<vmem>>, vector<1x32xf32>
    %4 = arith.truncf %1 : vector<16x16xf32> to vector<16x16xbf16>
    %cst = arith.constant dense<0.000000e+00> : vector<16x32xf32>
    %5 = tpu.matmul %4, %2, %cst {dimension_numbers = #tpu.dot_dimension_numbers<[1], [0], [0], [1], [0, 0, 1, 1], [], []>} : vector<16x16xbf16>, vector<16x32xbf16>, vector<16x32xf32> -> vector<16x32xf32>
    %6 = vector.broadcast %3 : vector<1x32xf32> to vector<16x32xf32>
    %7 = arith.addf %5, %6 : vector<16x32xf32>
    %c0_6 = arith.constant 0 : index
    %c0_7 = arith.constant 0 : index
    %c0_8 = arith.constant 0 : index
    %8 = vector.load %arg4[%c0_6, %c0_7, %c0_8] : memref<2x32x96xbf16, #tpu.memory_space<vmem>>, vector<1x32x96xbf16>
    %9 = vector.shape_cast %8 : vector<1x32x96xbf16> to vector<32x96xbf16>
    %c0_9 = arith.constant 0 : index
    %c0_10 = arith.constant 0 : index
    %c0_11 = arith.constant 0 : index
    %10 = vector.load %arg5[%c0_9, %c0_10, %c0_11] : memref<2x1x96xf32, #tpu.memory_space<vmem>>, vector<1x1x96xf32>
    %11 = vector.shape_cast %10 : vector<1x1x96xf32> to vector<1x96xf32>
    %12 = arith.truncf %7 : vector<16x32xf32> to vector<16x32xbf16>
    %cst_12 = arith.constant dense<0.000000e+00> : vector<16x96xf32>
    %13 = tpu.matmul %12, %9, %cst_12 {dimension_numbers = #tpu.dot_dimension_numbers<[1], [0], [0], [1], [0, 0, 1, 1], [], []>} : vector<16x32xbf16>, vector<32x96xbf16>, vector<16x96xf32> -> vector<16x96xf32>
    %14 = vector.broadcast %11 : vector<1x96xf32> to vector<16x96xf32>
    %15 = arith.addf %13, %14 : vector<16x96xf32>
    %16 = vector.shape_cast %15 : vector<16x96xf32> to vector<2x8x96xf32>
    %17 = vector.extract_strided_slice %16 {offsets = [0, 0, 0], sizes = [2, 8, 8], strides = [1, 1, 1]} : vector<2x8x96xf32> to vector<2x8x8xf32>
    %18 = arith.truncf %17 : vector<2x8x8xf32> to vector<2x8x8xbf16>
    %19 = vector.extract_strided_slice %16 {offsets = [0, 0, 32], sizes = [2, 8, 8], strides = [1, 1, 1]} : vector<2x8x96xf32> to vector<2x8x8xf32>
    %20 = arith.truncf %19 : vector<2x8x8xf32> to vector<2x8x8xbf16>
    %21 = vector.extract_strided_slice %16 {offsets = [0, 0, 64], sizes = [2, 8, 8], strides = [1, 1, 1]} : vector<2x8x96xf32> to vector<2x8x8xf32>
    %22 = arith.truncf %21 : vector<2x8x8xf32> to vector<2x8x8xbf16>
    "tpu.trace_start"() <{level = 10 : i32, message = "bqd,bkd->bqk"}> : () -> ()
    %cst_13 = arith.constant dense<0.000000e+00> : vector<2x8x8xf32>
    %23 = tpu.matmul %18, %20, %cst_13 {dimension_numbers = #tpu.dot_dimension_numbers<[2], [2], [1], [1], [0, 0, 0, 1, 1, 1], [0], [0]>} : vector<2x8x8xbf16>, vector<2x8x8xbf16>, vector<2x8x8xf32> -> vector<2x8x8xf32>
    "tpu.trace_stop"() : () -> ()
    %cst_14 = arith.constant dense<0xFF800000> : vector<2x8xf32>
    %24 = vector.multi_reduction <maximumf>, %23, %cst_14 [2] : vector<2x8x8xf32> to vector<2x8xf32>
    %25 = vector.shape_cast %24 : vector<2x8xf32> to vector<2x8x1xf32>
    %26 = vector.broadcast %25 : vector<2x8x1xf32> to vector<2x8x8xf32>
    %27 = arith.subf %23, %26 : vector<2x8x8xf32>
    %28 = math.exp %27 : vector<2x8x8xf32>
    %cst_15 = arith.constant dense<0.000000e+00> : vector<2x8xf32>
    %29 = vector.multi_reduction <add>, %28, %cst_15 [2] : vector<2x8x8xf32> to vector<2x8xf32>
    %30 = vector.shape_cast %29 : vector<2x8xf32> to vector<2x8x1xf32>
    %31 = vector.broadcast %30 : vector<2x8x1xf32> to vector<2x8x8xf32>
    %32 = arith.divf %28, %31 : vector<2x8x8xf32>
    %33 = arith.truncf %32 : vector<2x8x8xf32> to vector<2x8x8xbf16>
    "tpu.trace_start"() <{level = 10 : i32, message = "bqk,bkd->bqd"}> : () -> ()
    %cst_16 = arith.constant dense<0.000000e+00> : vector<2x8x8xf32>
    %34 = tpu.matmul %33, %22, %cst_16 {dimension_numbers = #tpu.dot_dimension_numbers<[2], [1], [1], [2], [0, 0, 0, 1, 1, 2], [0], [0]>} : vector<2x8x8xbf16>, vector<2x8x8xbf16>, vector<2x8x8xf32> -> vector<2x8x8xf32>
    "tpu.trace_stop"() : () -> ()
    %35 = vector.extract_strided_slice %16 {offsets = [0, 0, 8], sizes = [2, 8, 8], strides = [1, 1, 1]} : vector<2x8x96xf32> to vector<2x8x8xf32>
    %36 = arith.truncf %35 : vector<2x8x8xf32> to vector<2x8x8xbf16>
    %37 = vector.extract_strided_slice %16 {offsets = [0, 0, 40], sizes = [2, 8, 8], strides = [1, 1, 1]} : vector<2x8x96xf32> to vector<2x8x8xf32>
    %38 = arith.truncf %37 : vector<2x8x8xf32> to vector<2x8x8xbf16>
    %39 = vector.extract_strided_slice %16 {offsets = [0, 0, 72], sizes = [2, 8, 8], strides = [1, 1, 1]} : vector<2x8x96xf32> to vector<2x8x8xf32>
    %40 = arith.truncf %39 : vector<2x8x8xf32> to vector<2x8x8xbf16>
    "tpu.trace_start"() <{level = 10 : i32, message = "bqd,bkd->bqk"}> : () -> ()
    %cst_17 = arith.constant dense<0.000000e+00> : vector<2x8x8xf32>
    %41 = tpu.matmul %36, %38, %cst_17 {dimension_numbers = #tpu.dot_dimension_numbers<[2], [2], [1], [1], [0, 0, 0, 1, 1, 1], [0], [0]>} : vector<2x8x8xbf16>, vector<2x8x8xbf16>, vector<2x8x8xf32> -> vector<2x8x8xf32>
    "tpu.trace_stop"() : () -> ()
    %cst_18 = arith.constant dense<0xFF800000> : vector<2x8xf32>
    %42 = vector.multi_reduction <maximumf>, %41, %cst_18 [2] : vector<2x8x8xf32> to vector<2x8xf32>
    %43 = vector.shape_cast %42 : vector<2x8xf32> to vector<2x8x1xf32>
    %44 = vector.broadcast %43 : vector<2x8x1xf32> to vector<2x8x8xf32>
    %45 = arith.subf %41, %44 : vector<2x8x8xf32>
    %46 = math.exp %45 : vector<2x8x8xf32>
    %cst_19 = arith.constant dense<0.000000e+00> : vector<2x8xf32>
    %47 = vector.multi_reduction <add>, %46, %cst_19 [2] : vector<2x8x8xf32> to vector<2x8xf32>
    %48 = vector.shape_cast %47 : vector<2x8xf32> to vector<2x8x1xf32>
    %49 = vector.broadcast %48 : vector<2x8x1xf32> to vector<2x8x8xf32>
    %50 = arith.divf %46, %49 : vector<2x8x8xf32>
    %51 = arith.truncf %50 : vector<2x8x8xf32> to vector<2x8x8xbf16>
    "tpu.trace_start"() <{level = 10 : i32, message = "bqk,bkd->bqd"}> : () -> ()
    %cst_20 = arith.constant dense<0.000000e+00> : vector<2x8x8xf32>
    %52 = tpu.matmul %51, %40, %cst_20 {dimension_numbers = #tpu.dot_dimension_numbers<[2], [1], [1], [2], [0, 0, 0, 1, 1, 2], [0], [0]>} : vector<2x8x8xbf16>, vector<2x8x8xbf16>, vector<2x8x8xf32> -> vector<2x8x8xf32>
    "tpu.trace_stop"() : () -> ()
    %53 = vector.extract_strided_slice %16 {offsets = [0, 0, 16], sizes = [2, 8, 8], strides = [1, 1, 1]} : vector<2x8x96xf32> to vector<2x8x8xf32>
    %54 = arith.truncf %53 : vector<2x8x8xf32> to vector<2x8x8xbf16>
    %55 = vector.extract_strided_slice %16 {offsets = [0, 0, 48], sizes = [2, 8, 8], strides = [1, 1, 1]} : vector<2x8x96xf32> to vector<2x8x8xf32>
    %56 = arith.truncf %55 : vector<2x8x8xf32> to vector<2x8x8xbf16>
    %57 = vector.extract_strided_slice %16 {offsets = [0, 0, 80], sizes = [2, 8, 8], strides = [1, 1, 1]} : vector<2x8x96xf32> to vector<2x8x8xf32>
    %58 = arith.truncf %57 : vector<2x8x8xf32> to vector<2x8x8xbf16>
    "tpu.trace_start"() <{level = 10 : i32, message = "bqd,bkd->bqk"}> : () -> ()
    %cst_21 = arith.constant dense<0.000000e+00> : vector<2x8x8xf32>
    %59 = tpu.matmul %54, %56, %cst_21 {dimension_numbers = #tpu.dot_dimension_numbers<[2], [2], [1], [1], [0, 0, 0, 1, 1, 1], [0], [0]>} : vector<2x8x8xbf16>, vector<2x8x8xbf16>, vector<2x8x8xf32> -> vector<2x8x8xf32>
    "tpu.trace_stop"() : () -> ()
    %cst_22 = arith.constant dense<0xFF800000> : vector<2x8xf32>
    %60 = vector.multi_reduction <maximumf>, %59, %cst_22 [2] : vector<2x8x8xf32> to vector<2x8xf32>
    %61 = vector.shape_cast %60 : vector<2x8xf32> to vector<2x8x1xf32>
    %62 = vector.broadcast %61 : vector<2x8x1xf32> to vector<2x8x8xf32>
    %63 = arith.subf %59, %62 : vector<2x8x8xf32>
    %64 = math.exp %63 : vector<2x8x8xf32>
    %cst_23 = arith.constant dense<0.000000e+00> : vector<2x8xf32>
    %65 = vector.multi_reduction <add>, %64, %cst_23 [2] : vector<2x8x8xf32> to vector<2x8xf32>
    %66 = vector.shape_cast %65 : vector<2x8xf32> to vector<2x8x1xf32>
    %67 = vector.broadcast %66 : vector<2x8x1xf32> to vector<2x8x8xf32>
    %68 = arith.divf %64, %67 : vector<2x8x8xf32>
    %69 = arith.truncf %68 : vector<2x8x8xf32> to vector<2x8x8xbf16>
    "tpu.trace_start"() <{level = 10 : i32, message = "bqk,bkd->bqd"}> : () -> ()
    %cst_24 = arith.constant dense<0.000000e+00> : vector<2x8x8xf32>
    %70 = tpu.matmul %69, %58, %cst_24 {dimension_numbers = #tpu.dot_dimension_numbers<[2], [1], [1], [2], [0, 0, 0, 1, 1, 2], [0], [0]>} : vector<2x8x8xbf16>, vector<2x8x8xbf16>, vector<2x8x8xf32> -> vector<2x8x8xf32>
    "tpu.trace_stop"() : () -> ()
    %71 = vector.extract_strided_slice %16 {offsets = [0, 0, 24], sizes = [2, 8, 8], strides = [1, 1, 1]} : vector<2x8x96xf32> to vector<2x8x8xf32>
    %72 = arith.truncf %71 : vector<2x8x8xf32> to vector<2x8x8xbf16>
    %73 = vector.extract_strided_slice %16 {offsets = [0, 0, 56], sizes = [2, 8, 8], strides = [1, 1, 1]} : vector<2x8x96xf32> to vector<2x8x8xf32>
    %74 = arith.truncf %73 : vector<2x8x8xf32> to vector<2x8x8xbf16>
    %75 = vector.extract_strided_slice %16 {offsets = [0, 0, 88], sizes = [2, 8, 8], strides = [1, 1, 1]} : vector<2x8x96xf32> to vector<2x8x8xf32>
    %76 = arith.truncf %75 : vector<2x8x8xf32> to vector<2x8x8xbf16>
    "tpu.trace_start"() <{level = 10 : i32, message = "bqd,bkd->bqk"}> : () -> ()
    %cst_25 = arith.constant dense<0.000000e+00> : vector<2x8x8xf32>
    %77 = tpu.matmul %72, %74, %cst_25 {dimension_numbers = #tpu.dot_dimension_numbers<[2], [2], [1], [1], [0, 0, 0, 1, 1, 1], [0], [0]>} : vector<2x8x8xbf16>, vector<2x8x8xbf16>, vector<2x8x8xf32> -> vector<2x8x8xf32>
    "tpu.trace_stop"() : () -> ()
    %cst_26 = arith.constant dense<0xFF800000> : vector<2x8xf32>
    %78 = vector.multi_reduction <maximumf>, %77, %cst_26 [2] : vector<2x8x8xf32> to vector<2x8xf32>
    %79 = vector.shape_cast %78 : vector<2x8xf32> to vector<2x8x1xf32>
    %80 = vector.broadcast %79 : vector<2x8x1xf32> to vector<2x8x8xf32>
    %81 = arith.subf %77, %80 : vector<2x8x8xf32>
    %82 = math.exp %81 : vector<2x8x8xf32>
    %cst_27 = arith.constant dense<0.000000e+00> : vector<2x8xf32>
    %83 = vector.multi_reduction <add>, %82, %cst_27 [2] : vector<2x8x8xf32> to vector<2x8xf32>
    %84 = vector.shape_cast %83 : vector<2x8xf32> to vector<2x8x1xf32>
    %85 = vector.broadcast %84 : vector<2x8x1xf32> to vector<2x8x8xf32>
    %86 = arith.divf %82, %85 : vector<2x8x8xf32>
    %87 = arith.truncf %86 : vector<2x8x8xf32> to vector<2x8x8xbf16>
    "tpu.trace_start"() <{level = 10 : i32, message = "bqk,bkd->bqd"}> : () -> ()
    %cst_28 = arith.constant dense<0.000000e+00> : vector<2x8x8xf32>
    %88 = tpu.matmul %87, %76, %cst_28 {dimension_numbers = #tpu.dot_dimension_numbers<[2], [1], [1], [2], [0, 0, 0, 1, 1, 2], [0], [0]>} : vector<2x8x8xbf16>, vector<2x8x8xbf16>, vector<2x8x8xf32> -> vector<2x8x8xf32>
    "tpu.trace_stop"() : () -> ()
    %89 = tpu.concatenate %34, %52, %70, %88 in 2 : vector<2x8x8xf32>, vector<2x8x8xf32>, vector<2x8x8xf32>, vector<2x8x8xf32> -> vector<2x8x32xf32>
    %90 = vector.shape_cast %89 : vector<2x8x32xf32> to vector<16x32xf32>
    %c0_29 = arith.constant 0 : index
    %c0_30 = arith.constant 0 : index
    %c0_31 = arith.constant 0 : index
    %91 = vector.load %arg6[%c0_29, %c0_30, %c0_31] : memref<2x32x32xbf16, #tpu.memory_space<vmem>>, vector<1x32x32xbf16>
    %92 = vector.shape_cast %91 : vector<1x32x32xbf16> to vector<32x32xbf16>
    %c0_32 = arith.constant 0 : index
    %c0_33 = arith.constant 0 : index
    %c0_34 = arith.constant 0 : index
    %93 = vector.load %arg7[%c0_32, %c0_33, %c0_34] : memref<2x1x32xf32, #tpu.memory_space<vmem>>, vector<1x1x32xf32>
    %94 = vector.shape_cast %93 : vector<1x1x32xf32> to vector<1x32xf32>
    %95 = arith.truncf %90 : vector<16x32xf32> to vector<16x32xbf16>
    %cst_35 = arith.constant dense<0.000000e+00> : vector<16x32xf32>
    %96 = tpu.matmul %95, %92, %cst_35 {dimension_numbers = #tpu.dot_dimension_numbers<[1], [0], [0], [1], [0, 0, 1, 1], [], []>} : vector<16x32xbf16>, vector<32x32xbf16>, vector<16x32xf32> -> vector<16x32xf32>
    %97 = vector.broadcast %94 : vector<1x32xf32> to vector<16x32xf32>
    %98 = arith.addf %96, %97 : vector<16x32xf32>
    %99 = arith.addf %7, %98 : vector<16x32xf32>
    %c0_36 = arith.constant 0 : index
    %c0_37 = arith.constant 0 : index
    %c0_38 = arith.constant 0 : index
    %100 = vector.load %arg8[%c0_36, %c0_37, %c0_38] : memref<2x1x32xf32, #tpu.memory_space<vmem>>, vector<1x1x32xf32>
    %101 = vector.shape_cast %100 : vector<1x1x32xf32> to vector<1x32xf32>
    %c0_39 = arith.constant 0 : index
    %c0_40 = arith.constant 0 : index
    %c0_41 = arith.constant 0 : index
    %102 = vector.load %arg9[%c0_39, %c0_40, %c0_41] : memref<2x1x32xf32, #tpu.memory_space<vmem>>, vector<1x1x32xf32>
    %103 = vector.shape_cast %102 : vector<1x1x32xf32> to vector<1x32xf32>
    %cst_42 = arith.constant dense<0.000000e+00> : vector<16xf32>
    %104 = vector.multi_reduction <add>, %99, %cst_42 [1] : vector<16x32xf32> to vector<16xf32>
    %105 = vector.shape_cast %104 : vector<16xf32> to vector<16x1xf32>
    %cst_43 = arith.constant 3.200000e+01 : f32
    %106 = vector.broadcast %cst_43 : f32 to vector<16x1xf32>
    %107 = arith.divf %105, %106 : vector<16x1xf32>
    %108 = vector.broadcast %107 : vector<16x1xf32> to vector<16x32xf32>
    %109 = arith.subf %99, %108 : vector<16x32xf32>
    %110 = arith.mulf %109, %109 : vector<16x32xf32>
    %cst_44 = arith.constant dense<0.000000e+00> : vector<16xf32>
    %111 = vector.multi_reduction <add>, %110, %cst_44 [1] : vector<16x32xf32> to vector<16xf32>
    %112 = vector.shape_cast %111 : vector<16xf32> to vector<16x1xf32>
    %cst_45 = arith.constant 3.200000e+01 : f32
    %113 = vector.broadcast %cst_45 : f32 to vector<16x1xf32>
    %114 = arith.divf %112, %113 : vector<16x1xf32>
    %115 = vector.broadcast %107 : vector<16x1xf32> to vector<16x32xf32>
    %116 = arith.subf %99, %115 : vector<16x32xf32>
    %cst_46 = arith.constant 9.99999996E-13 : f32
    %117 = vector.broadcast %cst_46 : f32 to vector<16x1xf32>
    %118 = arith.addf %114, %117 : vector<16x1xf32>
    %119 = math.rsqrt %118 : vector<16x1xf32>
    %120 = vector.broadcast %119 : vector<16x1xf32> to vector<16x32xf32>
    %121 = arith.mulf %116, %120 : vector<16x32xf32>
    %122 = vector.broadcast %101 : vector<1x32xf32> to vector<16x32xf32>
    %123 = arith.mulf %121, %122 : vector<16x32xf32>
    %124 = vector.broadcast %103 : vector<1x32xf32> to vector<16x32xf32>
    %125 = arith.addf %123, %124 : vector<16x32xf32>
    %c0_47 = arith.constant 0 : index
    %c0_48 = arith.constant 0 : index
    %c0_49 = arith.constant 0 : index
    %126 = vector.load %arg10[%c0_47, %c0_48, %c0_49] : memref<2x32x64xbf16, #tpu.memory_space<vmem>>, vector<1x32x64xbf16>
    %127 = vector.shape_cast %126 : vector<1x32x64xbf16> to vector<32x64xbf16>
    %c0_50 = arith.constant 0 : index
    %c0_51 = arith.constant 0 : index
    %c0_52 = arith.constant 0 : index
    %128 = vector.load %arg11[%c0_50, %c0_51, %c0_52] : memref<2x1x64xf32, #tpu.memory_space<vmem>>, vector<1x1x64xf32>
    %129 = vector.shape_cast %128 : vector<1x1x64xf32> to vector<1x64xf32>
    %130 = arith.truncf %125 : vector<16x32xf32> to vector<16x32xbf16>
    %cst_53 = arith.constant dense<0.000000e+00> : vector<16x64xf32>
    %131 = tpu.matmul %130, %127, %cst_53 {dimension_numbers = #tpu.dot_dimension_numbers<[1], [0], [0], [1], [0, 0, 1, 1], [], []>} : vector<16x32xbf16>, vector<32x64xbf16>, vector<16x64xf32> -> vector<16x64xf32>
    %132 = vector.broadcast %129 : vector<1x64xf32> to vector<16x64xf32>
    %133 = arith.addf %131, %132 : vector<16x64xf32>
    %cst_54 = arith.constant 0.000000e+00 : f32
    %134 = vector.broadcast %cst_54 : f32 to vector<16x64xf32>
    %135 = arith.maximumf %133, %134 : vector<16x64xf32>
    %c0_55 = arith.constant 0 : index
    %c0_56 = arith.constant 0 : index
    %c0_57 = arith.constant 0 : index
    %136 = vector.load %arg12[%c0_55, %c0_56, %c0_57] : memref<2x64x32xbf16, #tpu.memory_space<vmem>>, vector<1x64x32xbf16>
    %137 = vector.shape_cast %136 : vector<1x64x32xbf16> to vector<64x32xbf16>
    %c0_58 = arith.constant 0 : index
    %c0_59 = arith.constant 0 : index
    %c0_60 = arith.constant 0 : index
    %138 = vector.load %arg13[%c0_58, %c0_59, %c0_60] : memref<2x1x32xf32, #tpu.memory_space<vmem>>, vector<1x1x32xf32>
    %139 = vector.shape_cast %138 : vector<1x1x32xf32> to vector<1x32xf32>
    %140 = arith.truncf %135 : vector<16x64xf32> to vector<16x64xbf16>
    %cst_61 = arith.constant dense<0.000000e+00> : vector<16x32xf32>
    %141 = tpu.matmul %140, %137, %cst_61 {dimension_numbers = #tpu.dot_dimension_numbers<[1], [0], [0], [1], [0, 0, 1, 1], [], []>} : vector<16x64xbf16>, vector<64x32xbf16>, vector<16x32xf32> -> vector<16x32xf32>
    %142 = vector.broadcast %139 : vector<1x32xf32> to vector<16x32xf32>
    %143 = arith.addf %141, %142 : vector<16x32xf32>
    %144 = arith.addf %125, %143 : vector<16x32xf32>
    %c0_62 = arith.constant 0 : index
    %c0_63 = arith.constant 0 : index
    %c0_64 = arith.constant 0 : index
    %145 = vector.load %arg14[%c0_62, %c0_63, %c0_64] : memref<2x1x32xf32, #tpu.memory_space<vmem>>, vector<1x1x32xf32>
    %146 = vector.shape_cast %145 : vector<1x1x32xf32> to vector<1x32xf32>
    %c0_65 = arith.constant 0 : index
    %c0_66 = arith.constant 0 : index
    %c0_67 = arith.constant 0 : index
    %147 = vector.load %arg15[%c0_65, %c0_66, %c0_67] : memref<2x1x32xf32, #tpu.memory_space<vmem>>, vector<1x1x32xf32>
    %148 = vector.shape_cast %147 : vector<1x1x32xf32> to vector<1x32xf32>
    %cst_68 = arith.constant dense<0.000000e+00> : vector<16xf32>
    %149 = vector.multi_reduction <add>, %144, %cst_68 [1] : vector<16x32xf32> to vector<16xf32>
    %150 = vector.shape_cast %149 : vector<16xf32> to vector<16x1xf32>
    %cst_69 = arith.constant 3.200000e+01 : f32
    %151 = vector.broadcast %cst_69 : f32 to vector<16x1xf32>
    %152 = arith.divf %150, %151 : vector<16x1xf32>
    %153 = vector.broadcast %152 : vector<16x1xf32> to vector<16x32xf32>
    %154 = arith.subf %144, %153 : vector<16x32xf32>
    %155 = arith.mulf %154, %154 : vector<16x32xf32>
    %cst_70 = arith.constant dense<0.000000e+00> : vector<16xf32>
    %156 = vector.multi_reduction <add>, %155, %cst_70 [1] : vector<16x32xf32> to vector<16xf32>
    %157 = vector.shape_cast %156 : vector<16xf32> to vector<16x1xf32>
    %cst_71 = arith.constant 3.200000e+01 : f32
    %158 = vector.broadcast %cst_71 : f32 to vector<16x1xf32>
    %159 = arith.divf %157, %158 : vector<16x1xf32>
    %160 = vector.broadcast %152 : vector<16x1xf32> to vector<16x32xf32>
    %161 = arith.subf %144, %160 : vector<16x32xf32>
    %cst_72 = arith.constant 9.99999996E-13 : f32
    %162 = vector.broadcast %cst_72 : f32 to vector<16x1xf32>
    %163 = arith.addf %159, %162 : vector<16x1xf32>
    %164 = math.rsqrt %163 : vector<16x1xf32>
    %165 = vector.broadcast %164 : vector<16x1xf32> to vector<16x32xf32>
    %166 = arith.mulf %161, %165 : vector<16x32xf32>
    %167 = vector.broadcast %146 : vector<1x32xf32> to vector<16x32xf32>
    %168 = arith.mulf %166, %167 : vector<16x32xf32>
    %169 = vector.broadcast %148 : vector<1x32xf32> to vector<16x32xf32>
    %170 = arith.addf %168, %169 : vector<16x32xf32>
    %c1 = arith.constant 1 : index
    %c0_73 = arith.constant 0 : index
    %c0_74 = arith.constant 0 : index
    %171 = vector.load %arg4[%c1, %c0_73, %c0_74] : memref<2x32x96xbf16, #tpu.memory_space<vmem>>, vector<1x32x96xbf16>
    %172 = vector.shape_cast %171 : vector<1x32x96xbf16> to vector<32x96xbf16>
    %c1_75 = arith.constant 1 : index
    %c0_76 = arith.constant 0 : index
    %c0_77 = arith.constant 0 : index
    %173 = vector.load %arg5[%c1_75, %c0_76, %c0_77] : memref<2x1x96xf32, #tpu.memory_space<vmem>>, vector<1x1x96xf32>
    %174 = vector.shape_cast %173 : vector<1x1x96xf32> to vector<1x96xf32>
    %175 = arith.truncf %170 : vector<16x32xf32> to vector<16x32xbf16>
    %cst_78 = arith.constant dense<0.000000e+00> : vector<16x96xf32>
    %176 = tpu.matmul %175, %172, %cst_78 {dimension_numbers = #tpu.dot_dimension_numbers<[1], [0], [0], [1], [0, 0, 1, 1], [], []>} : vector<16x32xbf16>, vector<32x96xbf16>, vector<16x96xf32> -> vector<16x96xf32>
    %177 = vector.broadcast %174 : vector<1x96xf32> to vector<16x96xf32>
    %178 = arith.addf %176, %177 : vector<16x96xf32>
    %179 = vector.shape_cast %178 : vector<16x96xf32> to vector<2x8x96xf32>
    %180 = vector.extract_strided_slice %179 {offsets = [0, 0, 0], sizes = [2, 8, 8], strides = [1, 1, 1]} : vector<2x8x96xf32> to vector<2x8x8xf32>
    %181 = arith.truncf %180 : vector<2x8x8xf32> to vector<2x8x8xbf16>
    %182 = vector.extract_strided_slice %179 {offsets = [0, 0, 32], sizes = [2, 8, 8], strides = [1, 1, 1]} : vector<2x8x96xf32> to vector<2x8x8xf32>
    %183 = arith.truncf %182 : vector<2x8x8xf32> to vector<2x8x8xbf16>
    %184 = vector.extract_strided_slice %179 {offsets = [0, 0, 64], sizes = [2, 8, 8], strides = [1, 1, 1]} : vector<2x8x96xf32> to vector<2x8x8xf32>
    %185 = arith.truncf %184 : vector<2x8x8xf32> to vector<2x8x8xbf16>
    "tpu.trace_start"() <{level = 10 : i32, message = "bqd,bkd->bqk"}> : () -> ()
    %cst_79 = arith.constant dense<0.000000e+00> : vector<2x8x8xf32>
    %186 = tpu.matmul %181, %183, %cst_79 {dimension_numbers = #tpu.dot_dimension_numbers<[2], [2], [1], [1], [0, 0, 0, 1, 1, 1], [0], [0]>} : vector<2x8x8xbf16>, vector<2x8x8xbf16>, vector<2x8x8xf32> -> vector<2x8x8xf32>
    "tpu.trace_stop"() : () -> ()
    %cst_80 = arith.constant dense<0xFF800000> : vector<2x8xf32>
    %187 = vector.multi_reduction <maximumf>, %186, %cst_80 [2] : vector<2x8x8xf32> to vector<2x8xf32>
    %188 = vector.shape_cast %187 : vector<2x8xf32> to vector<2x8x1xf32>
    %189 = vector.broadcast %188 : vector<2x8x1xf32> to vector<2x8x8xf32>
    %190 = arith.subf %186, %189 : vector<2x8x8xf32>
    %191 = math.exp %190 : vector<2x8x8xf32>
    %cst_81 = arith.constant dense<0.000000e+00> : vector<2x8xf32>
    %192 = vector.multi_reduction <add>, %191, %cst_81 [2] : vector<2x8x8xf32> to vector<2x8xf32>
    %193 = vector.shape_cast %192 : vector<2x8xf32> to vector<2x8x1xf32>
    %194 = vector.broadcast %193 : vector<2x8x1xf32> to vector<2x8x8xf32>
    %195 = arith.divf %191, %194 : vector<2x8x8xf32>
    %196 = arith.truncf %195 : vector<2x8x8xf32> to vector<2x8x8xbf16>
    "tpu.trace_start"() <{level = 10 : i32, message = "bqk,bkd->bqd"}> : () -> ()
    %cst_82 = arith.constant dense<0.000000e+00> : vector<2x8x8xf32>
    %197 = tpu.matmul %196, %185, %cst_82 {dimension_numbers = #tpu.dot_dimension_numbers<[2], [1], [1], [2], [0, 0, 0, 1, 1, 2], [0], [0]>} : vector<2x8x8xbf16>, vector<2x8x8xbf16>, vector<2x8x8xf32> -> vector<2x8x8xf32>
    "tpu.trace_stop"() : () -> ()
    %198 = vector.extract_strided_slice %179 {offsets = [0, 0, 8], sizes = [2, 8, 8], strides = [1, 1, 1]} : vector<2x8x96xf32> to vector<2x8x8xf32>
    %199 = arith.truncf %198 : vector<2x8x8xf32> to vector<2x8x8xbf16>
    %200 = vector.extract_strided_slice %179 {offsets = [0, 0, 40], sizes = [2, 8, 8], strides = [1, 1, 1]} : vector<2x8x96xf32> to vector<2x8x8xf32>
    %201 = arith.truncf %200 : vector<2x8x8xf32> to vector<2x8x8xbf16>
    %202 = vector.extract_strided_slice %179 {offsets = [0, 0, 72], sizes = [2, 8, 8], strides = [1, 1, 1]} : vector<2x8x96xf32> to vector<2x8x8xf32>
    %203 = arith.truncf %202 : vector<2x8x8xf32> to vector<2x8x8xbf16>
    "tpu.trace_start"() <{level = 10 : i32, message = "bqd,bkd->bqk"}> : () -> ()
    %cst_83 = arith.constant dense<0.000000e+00> : vector<2x8x8xf32>
    %204 = tpu.matmul %199, %201, %cst_83 {dimension_numbers = #tpu.dot_dimension_numbers<[2], [2], [1], [1], [0, 0, 0, 1, 1, 1], [0], [0]>} : vector<2x8x8xbf16>, vector<2x8x8xbf16>, vector<2x8x8xf32> -> vector<2x8x8xf32>
    "tpu.trace_stop"() : () -> ()
    %cst_84 = arith.constant dense<0xFF800000> : vector<2x8xf32>
    %205 = vector.multi_reduction <maximumf>, %204, %cst_84 [2] : vector<2x8x8xf32> to vector<2x8xf32>
    %206 = vector.shape_cast %205 : vector<2x8xf32> to vector<2x8x1xf32>
    %207 = vector.broadcast %206 : vector<2x8x1xf32> to vector<2x8x8xf32>
    %208 = arith.subf %204, %207 : vector<2x8x8xf32>
    %209 = math.exp %208 : vector<2x8x8xf32>
    %cst_85 = arith.constant dense<0.000000e+00> : vector<2x8xf32>
    %210 = vector.multi_reduction <add>, %209, %cst_85 [2] : vector<2x8x8xf32> to vector<2x8xf32>
    %211 = vector.shape_cast %210 : vector<2x8xf32> to vector<2x8x1xf32>
    %212 = vector.broadcast %211 : vector<2x8x1xf32> to vector<2x8x8xf32>
    %213 = arith.divf %209, %212 : vector<2x8x8xf32>
    %214 = arith.truncf %213 : vector<2x8x8xf32> to vector<2x8x8xbf16>
    "tpu.trace_start"() <{level = 10 : i32, message = "bqk,bkd->bqd"}> : () -> ()
    %cst_86 = arith.constant dense<0.000000e+00> : vector<2x8x8xf32>
    %215 = tpu.matmul %214, %203, %cst_86 {dimension_numbers = #tpu.dot_dimension_numbers<[2], [1], [1], [2], [0, 0, 0, 1, 1, 2], [0], [0]>} : vector<2x8x8xbf16>, vector<2x8x8xbf16>, vector<2x8x8xf32> -> vector<2x8x8xf32>
    "tpu.trace_stop"() : () -> ()
    %216 = vector.extract_strided_slice %179 {offsets = [0, 0, 16], sizes = [2, 8, 8], strides = [1, 1, 1]} : vector<2x8x96xf32> to vector<2x8x8xf32>
    %217 = arith.truncf %216 : vector<2x8x8xf32> to vector<2x8x8xbf16>
    %218 = vector.extract_strided_slice %179 {offsets = [0, 0, 48], sizes = [2, 8, 8], strides = [1, 1, 1]} : vector<2x8x96xf32> to vector<2x8x8xf32>
    %219 = arith.truncf %218 : vector<2x8x8xf32> to vector<2x8x8xbf16>
    %220 = vector.extract_strided_slice %179 {offsets = [0, 0, 80], sizes = [2, 8, 8], strides = [1, 1, 1]} : vector<2x8x96xf32> to vector<2x8x8xf32>
    %221 = arith.truncf %220 : vector<2x8x8xf32> to vector<2x8x8xbf16>
    "tpu.trace_start"() <{level = 10 : i32, message = "bqd,bkd->bqk"}> : () -> ()
    %cst_87 = arith.constant dense<0.000000e+00> : vector<2x8x8xf32>
    %222 = tpu.matmul %217, %219, %cst_87 {dimension_numbers = #tpu.dot_dimension_numbers<[2], [2], [1], [1], [0, 0, 0, 1, 1, 1], [0], [0]>} : vector<2x8x8xbf16>, vector<2x8x8xbf16>, vector<2x8x8xf32> -> vector<2x8x8xf32>
    "tpu.trace_stop"() : () -> ()
    %cst_88 = arith.constant dense<0xFF800000> : vector<2x8xf32>
    %223 = vector.multi_reduction <maximumf>, %222, %cst_88 [2] : vector<2x8x8xf32> to vector<2x8xf32>
    %224 = vector.shape_cast %223 : vector<2x8xf32> to vector<2x8x1xf32>
    %225 = vector.broadcast %224 : vector<2x8x1xf32> to vector<2x8x8xf32>
    %226 = arith.subf %222, %225 : vector<2x8x8xf32>
    %227 = math.exp %226 : vector<2x8x8xf32>
    %cst_89 = arith.constant dense<0.000000e+00> : vector<2x8xf32>
    %228 = vector.multi_reduction <add>, %227, %cst_89 [2] : vector<2x8x8xf32> to vector<2x8xf32>
    %229 = vector.shape_cast %228 : vector<2x8xf32> to vector<2x8x1xf32>
    %230 = vector.broadcast %229 : vector<2x8x1xf32> to vector<2x8x8xf32>
    %231 = arith.divf %227, %230 : vector<2x8x8xf32>
    %232 = arith.truncf %231 : vector<2x8x8xf32> to vector<2x8x8xbf16>
    "tpu.trace_start"() <{level = 10 : i32, message = "bqk,bkd->bqd"}> : () -> ()
    %cst_90 = arith.constant dense<0.000000e+00> : vector<2x8x8xf32>
    %233 = tpu.matmul %232, %221, %cst_90 {dimension_numbers = #tpu.dot_dimension_numbers<[2], [1], [1], [2], [0, 0, 0, 1, 1, 2], [0], [0]>} : vector<2x8x8xbf16>, vector<2x8x8xbf16>, vector<2x8x8xf32> -> vector<2x8x8xf32>
    "tpu.trace_stop"() : () -> ()
    %234 = vector.extract_strided_slice %179 {offsets = [0, 0, 24], sizes = [2, 8, 8], strides = [1, 1, 1]} : vector<2x8x96xf32> to vector<2x8x8xf32>
    %235 = arith.truncf %234 : vector<2x8x8xf32> to vector<2x8x8xbf16>
    %236 = vector.extract_strided_slice %179 {offsets = [0, 0, 56], sizes = [2, 8, 8], strides = [1, 1, 1]} : vector<2x8x96xf32> to vector<2x8x8xf32>
    %237 = arith.truncf %236 : vector<2x8x8xf32> to vector<2x8x8xbf16>
    %238 = vector.extract_strided_slice %179 {offsets = [0, 0, 88], sizes = [2, 8, 8], strides = [1, 1, 1]} : vector<2x8x96xf32> to vector<2x8x8xf32>
    %239 = arith.truncf %238 : vector<2x8x8xf32> to vector<2x8x8xbf16>
    "tpu.trace_start"() <{level = 10 : i32, message = "bqd,bkd->bqk"}> : () -> ()
    %cst_91 = arith.constant dense<0.000000e+00> : vector<2x8x8xf32>
    %240 = tpu.matmul %235, %237, %cst_91 {dimension_numbers = #tpu.dot_dimension_numbers<[2], [2], [1], [1], [0, 0, 0, 1, 1, 1], [0], [0]>} : vector<2x8x8xbf16>, vector<2x8x8xbf16>, vector<2x8x8xf32> -> vector<2x8x8xf32>
    "tpu.trace_stop"() : () -> ()
    %cst_92 = arith.constant dense<0xFF800000> : vector<2x8xf32>
    %241 = vector.multi_reduction <maximumf>, %240, %cst_92 [2] : vector<2x8x8xf32> to vector<2x8xf32>
    %242 = vector.shape_cast %241 : vector<2x8xf32> to vector<2x8x1xf32>
    %243 = vector.broadcast %242 : vector<2x8x1xf32> to vector<2x8x8xf32>
    %244 = arith.subf %240, %243 : vector<2x8x8xf32>
    %245 = math.exp %244 : vector<2x8x8xf32>
    %cst_93 = arith.constant dense<0.000000e+00> : vector<2x8xf32>
    %246 = vector.multi_reduction <add>, %245, %cst_93 [2] : vector<2x8x8xf32> to vector<2x8xf32>
    %247 = vector.shape_cast %246 : vector<2x8xf32> to vector<2x8x1xf32>
    %248 = vector.broadcast %247 : vector<2x8x1xf32> to vector<2x8x8xf32>
    %249 = arith.divf %245, %248 : vector<2x8x8xf32>
    %250 = arith.truncf %249 : vector<2x8x8xf32> to vector<2x8x8xbf16>
    "tpu.trace_start"() <{level = 10 : i32, message = "bqk,bkd->bqd"}> : () -> ()
    %cst_94 = arith.constant dense<0.000000e+00> : vector<2x8x8xf32>
    %251 = tpu.matmul %250, %239, %cst_94 {dimension_numbers = #tpu.dot_dimension_numbers<[2], [1], [1], [2], [0, 0, 0, 1, 1, 2], [0], [0]>} : vector<2x8x8xbf16>, vector<2x8x8xbf16>, vector<2x8x8xf32> -> vector<2x8x8xf32>
    "tpu.trace_stop"() : () -> ()
    %252 = tpu.concatenate %197, %215, %233, %251 in 2 : vector<2x8x8xf32>, vector<2x8x8xf32>, vector<2x8x8xf32>, vector<2x8x8xf32> -> vector<2x8x32xf32>
    %253 = vector.shape_cast %252 : vector<2x8x32xf32> to vector<16x32xf32>
    %c1_95 = arith.constant 1 : index
    %c0_96 = arith.constant 0 : index
    %c0_97 = arith.constant 0 : index
    %254 = vector.load %arg6[%c1_95, %c0_96, %c0_97] : memref<2x32x32xbf16, #tpu.memory_space<vmem>>, vector<1x32x32xbf16>
    %255 = vector.shape_cast %254 : vector<1x32x32xbf16> to vector<32x32xbf16>
    %c1_98 = arith.constant 1 : index
    %c0_99 = arith.constant 0 : index
    %c0_100 = arith.constant 0 : index
    %256 = vector.load %arg7[%c1_98, %c0_99, %c0_100] : memref<2x1x32xf32, #tpu.memory_space<vmem>>, vector<1x1x32xf32>
    %257 = vector.shape_cast %256 : vector<1x1x32xf32> to vector<1x32xf32>
    %258 = arith.truncf %253 : vector<16x32xf32> to vector<16x32xbf16>
    %cst_101 = arith.constant dense<0.000000e+00> : vector<16x32xf32>
    %259 = tpu.matmul %258, %255, %cst_101 {dimension_numbers = #tpu.dot_dimension_numbers<[1], [0], [0], [1], [0, 0, 1, 1], [], []>} : vector<16x32xbf16>, vector<32x32xbf16>, vector<16x32xf32> -> vector<16x32xf32>
    %260 = vector.broadcast %257 : vector<1x32xf32> to vector<16x32xf32>
    %261 = arith.addf %259, %260 : vector<16x32xf32>
    %262 = arith.addf %170, %261 : vector<16x32xf32>
    %c1_102 = arith.constant 1 : index
    %c0_103 = arith.constant 0 : index
    %c0_104 = arith.constant 0 : index
    %263 = vector.load %arg8[%c1_102, %c0_103, %c0_104] : memref<2x1x32xf32, #tpu.memory_space<vmem>>, vector<1x1x32xf32>
    %264 = vector.shape_cast %263 : vector<1x1x32xf32> to vector<1x32xf32>
    %c1_105 = arith.constant 1 : index
    %c0_106 = arith.constant 0 : index
    %c0_107 = arith.constant 0 : index
    %265 = vector.load %arg9[%c1_105, %c0_106, %c0_107] : memref<2x1x32xf32, #tpu.memory_space<vmem>>, vector<1x1x32xf32>
    %266 = vector.shape_cast %265 : vector<1x1x32xf32> to vector<1x32xf32>
    %cst_108 = arith.constant dense<0.000000e+00> : vector<16xf32>
    %267 = vector.multi_reduction <add>, %262, %cst_108 [1] : vector<16x32xf32> to vector<16xf32>
    %268 = vector.shape_cast %267 : vector<16xf32> to vector<16x1xf32>
    %cst_109 = arith.constant 3.200000e+01 : f32
    %269 = vector.broadcast %cst_109 : f32 to vector<16x1xf32>
    %270 = arith.divf %268, %269 : vector<16x1xf32>
    %271 = vector.broadcast %270 : vector<16x1xf32> to vector<16x32xf32>
    %272 = arith.subf %262, %271 : vector<16x32xf32>
    %273 = arith.mulf %272, %272 : vector<16x32xf32>
    %cst_110 = arith.constant dense<0.000000e+00> : vector<16xf32>
    %274 = vector.multi_reduction <add>, %273, %cst_110 [1] : vector<16x32xf32> to vector<16xf32>
    %275 = vector.shape_cast %274 : vector<16xf32> to vector<16x1xf32>
    %cst_111 = arith.constant 3.200000e+01 : f32
    %276 = vector.broadcast %cst_111 : f32 to vector<16x1xf32>
    %277 = arith.divf %275, %276 : vector<16x1xf32>
    %278 = vector.broadcast %270 : vector<16x1xf32> to vector<16x32xf32>
    %279 = arith.subf %262, %278 : vector<16x32xf32>
    %cst_112 = arith.constant 9.99999996E-13 : f32
    %280 = vector.broadcast %cst_112 : f32 to vector<16x1xf32>
    %281 = arith.addf %277, %280 : vector<16x1xf32>
    %282 = math.rsqrt %281 : vector<16x1xf32>
    %283 = vector.broadcast %282 : vector<16x1xf32> to vector<16x32xf32>
    %284 = arith.mulf %279, %283 : vector<16x32xf32>
    %285 = vector.broadcast %264 : vector<1x32xf32> to vector<16x32xf32>
    %286 = arith.mulf %284, %285 : vector<16x32xf32>
    %287 = vector.broadcast %266 : vector<1x32xf32> to vector<16x32xf32>
    %288 = arith.addf %286, %287 : vector<16x32xf32>
    %c1_113 = arith.constant 1 : index
    %c0_114 = arith.constant 0 : index
    %c0_115 = arith.constant 0 : index
    %289 = vector.load %arg10[%c1_113, %c0_114, %c0_115] : memref<2x32x64xbf16, #tpu.memory_space<vmem>>, vector<1x32x64xbf16>
    %290 = vector.shape_cast %289 : vector<1x32x64xbf16> to vector<32x64xbf16>
    %c1_116 = arith.constant 1 : index
    %c0_117 = arith.constant 0 : index
    %c0_118 = arith.constant 0 : index
    %291 = vector.load %arg11[%c1_116, %c0_117, %c0_118] : memref<2x1x64xf32, #tpu.memory_space<vmem>>, vector<1x1x64xf32>
    %292 = vector.shape_cast %291 : vector<1x1x64xf32> to vector<1x64xf32>
    %293 = arith.truncf %288 : vector<16x32xf32> to vector<16x32xbf16>
    %cst_119 = arith.constant dense<0.000000e+00> : vector<16x64xf32>
    %294 = tpu.matmul %293, %290, %cst_119 {dimension_numbers = #tpu.dot_dimension_numbers<[1], [0], [0], [1], [0, 0, 1, 1], [], []>} : vector<16x32xbf16>, vector<32x64xbf16>, vector<16x64xf32> -> vector<16x64xf32>
    %295 = vector.broadcast %292 : vector<1x64xf32> to vector<16x64xf32>
    %296 = arith.addf %294, %295 : vector<16x64xf32>
    %cst_120 = arith.constant 0.000000e+00 : f32
    %297 = vector.broadcast %cst_120 : f32 to vector<16x64xf32>
    %298 = arith.maximumf %296, %297 : vector<16x64xf32>
    %c1_121 = arith.constant 1 : index
    %c0_122 = arith.constant 0 : index
    %c0_123 = arith.constant 0 : index
    %299 = vector.load %arg12[%c1_121, %c0_122, %c0_123] : memref<2x64x32xbf16, #tpu.memory_space<vmem>>, vector<1x64x32xbf16>
    %300 = vector.shape_cast %299 : vector<1x64x32xbf16> to vector<64x32xbf16>
    %c1_124 = arith.constant 1 : index
    %c0_125 = arith.constant 0 : index
    %c0_126 = arith.constant 0 : index
    %301 = vector.load %arg13[%c1_124, %c0_125, %c0_126] : memref<2x1x32xf32, #tpu.memory_space<vmem>>, vector<1x1x32xf32>
    %302 = vector.shape_cast %301 : vector<1x1x32xf32> to vector<1x32xf32>
    %303 = arith.truncf %298 : vector<16x64xf32> to vector<16x64xbf16>
    %cst_127 = arith.constant dense<0.000000e+00> : vector<16x32xf32>
    %304 = tpu.matmul %303, %300, %cst_127 {dimension_numbers = #tpu.dot_dimension_numbers<[1], [0], [0], [1], [0, 0, 1, 1], [], []>} : vector<16x64xbf16>, vector<64x32xbf16>, vector<16x32xf32> -> vector<16x32xf32>
    %305 = vector.broadcast %302 : vector<1x32xf32> to vector<16x32xf32>
    %306 = arith.addf %304, %305 : vector<16x32xf32>
    %307 = arith.addf %288, %306 : vector<16x32xf32>
    %c1_128 = arith.constant 1 : index
    %c0_129 = arith.constant 0 : index
    %c0_130 = arith.constant 0 : index
    %308 = vector.load %arg14[%c1_128, %c0_129, %c0_130] : memref<2x1x32xf32, #tpu.memory_space<vmem>>, vector<1x1x32xf32>
    %309 = vector.shape_cast %308 : vector<1x1x32xf32> to vector<1x32xf32>
    %c1_131 = arith.constant 1 : index
    %c0_132 = arith.constant 0 : index
    %c0_133 = arith.constant 0 : index
    %310 = vector.load %arg15[%c1_131, %c0_132, %c0_133] : memref<2x1x32xf32, #tpu.memory_space<vmem>>, vector<1x1x32xf32>
    %311 = vector.shape_cast %310 : vector<1x1x32xf32> to vector<1x32xf32>
    %cst_134 = arith.constant dense<0.000000e+00> : vector<16xf32>
    %312 = vector.multi_reduction <add>, %307, %cst_134 [1] : vector<16x32xf32> to vector<16xf32>
    %313 = vector.shape_cast %312 : vector<16xf32> to vector<16x1xf32>
    %cst_135 = arith.constant 3.200000e+01 : f32
    %314 = vector.broadcast %cst_135 : f32 to vector<16x1xf32>
    %315 = arith.divf %313, %314 : vector<16x1xf32>
    %316 = vector.broadcast %315 : vector<16x1xf32> to vector<16x32xf32>
    %317 = arith.subf %307, %316 : vector<16x32xf32>
    %318 = arith.mulf %317, %317 : vector<16x32xf32>
    %cst_136 = arith.constant dense<0.000000e+00> : vector<16xf32>
    %319 = vector.multi_reduction <add>, %318, %cst_136 [1] : vector<16x32xf32> to vector<16xf32>
    %320 = vector.shape_cast %319 : vector<16xf32> to vector<16x1xf32>
    %cst_137 = arith.constant 3.200000e+01 : f32
    %321 = vector.broadcast %cst_137 : f32 to vector<16x1xf32>
    %322 = arith.divf %320, %321 : vector<16x1xf32>
    %323 = vector.broadcast %315 : vector<16x1xf32> to vector<16x32xf32>
    %324 = arith.subf %307, %323 : vector<16x32xf32>
    %cst_138 = arith.constant 9.99999996E-13 : f32
    %325 = vector.broadcast %cst_138 : f32 to vector<16x1xf32>
    %326 = arith.addf %322, %325 : vector<16x1xf32>
    %327 = math.rsqrt %326 : vector<16x1xf32>
    %328 = vector.broadcast %327 : vector<16x1xf32> to vector<16x32xf32>
    %329 = arith.mulf %324, %328 : vector<16x32xf32>
    %330 = vector.broadcast %309 : vector<1x32xf32> to vector<16x32xf32>
    %331 = arith.mulf %329, %330 : vector<16x32xf32>
    %332 = vector.broadcast %311 : vector<1x32xf32> to vector<16x32xf32>
    %333 = arith.addf %331, %332 : vector<16x32xf32>
    %cst_139 = arith.constant 0.000000e+00 : f32
    %334 = vector.broadcast %cst_139 : f32 to vector<2x64xf32>
    %335 = vector.extract_strided_slice %333 {offsets = [0, 0], sizes = [1, 32], strides = [1, 1]} : vector<16x32xf32> to vector<1x32xf32>
    %336 = vector.extract_strided_slice %333 {offsets = [8, 0], sizes = [1, 32], strides = [1, 1]} : vector<16x32xf32> to vector<1x32xf32>
    %337 = tpu.concatenate %335, %336 in 0 : vector<1x32xf32>, vector<1x32xf32> -> vector<2x32xf32>
    %c0_140 = arith.constant 0 : index
    %c0_141 = arith.constant 0 : index
    %c0_142 = arith.constant 0 : index
    %338 = vector.load %arg16[%c0_140, %c0_141, %c0_142] : memref<8x32x64xbf16, #tpu.memory_space<vmem>>, vector<1x32x64xbf16>
    %339 = vector.shape_cast %338 : vector<1x32x64xbf16> to vector<32x64xbf16>
    %340 = arith.truncf %337 : vector<2x32xf32> to vector<2x32xbf16>
    %cst_143 = arith.constant dense<0.000000e+00> : vector<2x64xf32>
    %341 = tpu.matmul %340, %339, %cst_143 {dimension_numbers = #tpu.dot_dimension_numbers<[1], [0], [0], [1], [0, 0, 1, 1], [], []>} : vector<2x32xbf16>, vector<32x64xbf16>, vector<2x64xf32> -> vector<2x64xf32>
    %342 = arith.addf %334, %341 : vector<2x64xf32>
    %343 = vector.extract_strided_slice %333 {offsets = [1, 0], sizes = [1, 32], strides = [1, 1]} : vector<16x32xf32> to vector<1x32xf32>
    %344 = vector.extract_strided_slice %333 {offsets = [9, 0], sizes = [1, 32], strides = [1, 1]} : vector<16x32xf32> to vector<1x32xf32>
    %345 = tpu.concatenate %343, %344 in 0 : vector<1x32xf32>, vector<1x32xf32> -> vector<2x32xf32>
    %c1_144 = arith.constant 1 : index
    %c0_145 = arith.constant 0 : index
    %c0_146 = arith.constant 0 : index
    %346 = vector.load %arg16[%c1_144, %c0_145, %c0_146] : memref<8x32x64xbf16, #tpu.memory_space<vmem>>, vector<1x32x64xbf16>
    %347 = vector.shape_cast %346 : vector<1x32x64xbf16> to vector<32x64xbf16>
    %348 = arith.truncf %345 : vector<2x32xf32> to vector<2x32xbf16>
    %cst_147 = arith.constant dense<0.000000e+00> : vector<2x64xf32>
    %349 = tpu.matmul %348, %347, %cst_147 {dimension_numbers = #tpu.dot_dimension_numbers<[1], [0], [0], [1], [0, 0, 1, 1], [], []>} : vector<2x32xbf16>, vector<32x64xbf16>, vector<2x64xf32> -> vector<2x64xf32>
    %350 = arith.addf %342, %349 : vector<2x64xf32>
    %351 = vector.extract_strided_slice %333 {offsets = [2, 0], sizes = [1, 32], strides = [1, 1]} : vector<16x32xf32> to vector<1x32xf32>
    %352 = vector.extract_strided_slice %333 {offsets = [10, 0], sizes = [1, 32], strides = [1, 1]} : vector<16x32xf32> to vector<1x32xf32>
    %353 = tpu.concatenate %351, %352 in 0 : vector<1x32xf32>, vector<1x32xf32> -> vector<2x32xf32>
    %c2 = arith.constant 2 : index
    %c0_148 = arith.constant 0 : index
    %c0_149 = arith.constant 0 : index
    %354 = vector.load %arg16[%c2, %c0_148, %c0_149] : memref<8x32x64xbf16, #tpu.memory_space<vmem>>, vector<1x32x64xbf16>
    %355 = vector.shape_cast %354 : vector<1x32x64xbf16> to vector<32x64xbf16>
    %356 = arith.truncf %353 : vector<2x32xf32> to vector<2x32xbf16>
    %cst_150 = arith.constant dense<0.000000e+00> : vector<2x64xf32>
    %357 = tpu.matmul %356, %355, %cst_150 {dimension_numbers = #tpu.dot_dimension_numbers<[1], [0], [0], [1], [0, 0, 1, 1], [], []>} : vector<2x32xbf16>, vector<32x64xbf16>, vector<2x64xf32> -> vector<2x64xf32>
    %358 = arith.addf %350, %357 : vector<2x64xf32>
    %359 = vector.extract_strided_slice %333 {offsets = [3, 0], sizes = [1, 32], strides = [1, 1]} : vector<16x32xf32> to vector<1x32xf32>
    %360 = vector.extract_strided_slice %333 {offsets = [11, 0], sizes = [1, 32], strides = [1, 1]} : vector<16x32xf32> to vector<1x32xf32>
    %361 = tpu.concatenate %359, %360 in 0 : vector<1x32xf32>, vector<1x32xf32> -> vector<2x32xf32>
    %c3 = arith.constant 3 : index
    %c0_151 = arith.constant 0 : index
    %c0_152 = arith.constant 0 : index
    %362 = vector.load %arg16[%c3, %c0_151, %c0_152] : memref<8x32x64xbf16, #tpu.memory_space<vmem>>, vector<1x32x64xbf16>
    %363 = vector.shape_cast %362 : vector<1x32x64xbf16> to vector<32x64xbf16>
    %364 = arith.truncf %361 : vector<2x32xf32> to vector<2x32xbf16>
    %cst_153 = arith.constant dense<0.000000e+00> : vector<2x64xf32>
    %365 = tpu.matmul %364, %363, %cst_153 {dimension_numbers = #tpu.dot_dimension_numbers<[1], [0], [0], [1], [0, 0, 1, 1], [], []>} : vector<2x32xbf16>, vector<32x64xbf16>, vector<2x64xf32> -> vector<2x64xf32>
    %366 = arith.addf %358, %365 : vector<2x64xf32>
    %367 = vector.extract_strided_slice %333 {offsets = [4, 0], sizes = [1, 32], strides = [1, 1]} : vector<16x32xf32> to vector<1x32xf32>
    %368 = vector.extract_strided_slice %333 {offsets = [12, 0], sizes = [1, 32], strides = [1, 1]} : vector<16x32xf32> to vector<1x32xf32>
    %369 = tpu.concatenate %367, %368 in 0 : vector<1x32xf32>, vector<1x32xf32> -> vector<2x32xf32>
    %c4 = arith.constant 4 : index
    %c0_154 = arith.constant 0 : index
    %c0_155 = arith.constant 0 : index
    %370 = vector.load %arg16[%c4, %c0_154, %c0_155] : memref<8x32x64xbf16, #tpu.memory_space<vmem>>, vector<1x32x64xbf16>
    %371 = vector.shape_cast %370 : vector<1x32x64xbf16> to vector<32x64xbf16>
    %372 = arith.truncf %369 : vector<2x32xf32> to vector<2x32xbf16>
    %cst_156 = arith.constant dense<0.000000e+00> : vector<2x64xf32>
    %373 = tpu.matmul %372, %371, %cst_156 {dimension_numbers = #tpu.dot_dimension_numbers<[1], [0], [0], [1], [0, 0, 1, 1], [], []>} : vector<2x32xbf16>, vector<32x64xbf16>, vector<2x64xf32> -> vector<2x64xf32>
    %374 = arith.addf %366, %373 : vector<2x64xf32>
    %375 = vector.extract_strided_slice %333 {offsets = [5, 0], sizes = [1, 32], strides = [1, 1]} : vector<16x32xf32> to vector<1x32xf32>
    %376 = vector.extract_strided_slice %333 {offsets = [13, 0], sizes = [1, 32], strides = [1, 1]} : vector<16x32xf32> to vector<1x32xf32>
    %377 = tpu.concatenate %375, %376 in 0 : vector<1x32xf32>, vector<1x32xf32> -> vector<2x32xf32>
    %c5 = arith.constant 5 : index
    %c0_157 = arith.constant 0 : index
    %c0_158 = arith.constant 0 : index
    %378 = vector.load %arg16[%c5, %c0_157, %c0_158] : memref<8x32x64xbf16, #tpu.memory_space<vmem>>, vector<1x32x64xbf16>
    %379 = vector.shape_cast %378 : vector<1x32x64xbf16> to vector<32x64xbf16>
    %380 = arith.truncf %377 : vector<2x32xf32> to vector<2x32xbf16>
    %cst_159 = arith.constant dense<0.000000e+00> : vector<2x64xf32>
    %381 = tpu.matmul %380, %379, %cst_159 {dimension_numbers = #tpu.dot_dimension_numbers<[1], [0], [0], [1], [0, 0, 1, 1], [], []>} : vector<2x32xbf16>, vector<32x64xbf16>, vector<2x64xf32> -> vector<2x64xf32>
    %382 = arith.addf %374, %381 : vector<2x64xf32>
    %383 = vector.extract_strided_slice %333 {offsets = [6, 0], sizes = [1, 32], strides = [1, 1]} : vector<16x32xf32> to vector<1x32xf32>
    %384 = vector.extract_strided_slice %333 {offsets = [14, 0], sizes = [1, 32], strides = [1, 1]} : vector<16x32xf32> to vector<1x32xf32>
    %385 = tpu.concatenate %383, %384 in 0 : vector<1x32xf32>, vector<1x32xf32> -> vector<2x32xf32>
    %c6 = arith.constant 6 : index
    %c0_160 = arith.constant 0 : index
    %c0_161 = arith.constant 0 : index
    %386 = vector.load %arg16[%c6, %c0_160, %c0_161] : memref<8x32x64xbf16, #tpu.memory_space<vmem>>, vector<1x32x64xbf16>
    %387 = vector.shape_cast %386 : vector<1x32x64xbf16> to vector<32x64xbf16>
    %388 = arith.truncf %385 : vector<2x32xf32> to vector<2x32xbf16>
    %cst_162 = arith.constant dense<0.000000e+00> : vector<2x64xf32>
    %389 = tpu.matmul %388, %387, %cst_162 {dimension_numbers = #tpu.dot_dimension_numbers<[1], [0], [0], [1], [0, 0, 1, 1], [], []>} : vector<2x32xbf16>, vector<32x64xbf16>, vector<2x64xf32> -> vector<2x64xf32>
    %390 = arith.addf %382, %389 : vector<2x64xf32>
    %391 = vector.extract_strided_slice %333 {offsets = [7, 0], sizes = [1, 32], strides = [1, 1]} : vector<16x32xf32> to vector<1x32xf32>
    %392 = vector.extract_strided_slice %333 {offsets = [15, 0], sizes = [1, 32], strides = [1, 1]} : vector<16x32xf32> to vector<1x32xf32>
    %393 = tpu.concatenate %391, %392 in 0 : vector<1x32xf32>, vector<1x32xf32> -> vector<2x32xf32>
    %c7 = arith.constant 7 : index
    %c0_163 = arith.constant 0 : index
    %c0_164 = arith.constant 0 : index
    %394 = vector.load %arg16[%c7, %c0_163, %c0_164] : memref<8x32x64xbf16, #tpu.memory_space<vmem>>, vector<1x32x64xbf16>
    %395 = vector.shape_cast %394 : vector<1x32x64xbf16> to vector<32x64xbf16>
    %396 = arith.truncf %393 : vector<2x32xf32> to vector<2x32xbf16>
    %cst_165 = arith.constant dense<0.000000e+00> : vector<2x64xf32>
    %397 = tpu.matmul %396, %395, %cst_165 {dimension_numbers = #tpu.dot_dimension_numbers<[1], [0], [0], [1], [0, 0, 1, 1], [], []>} : vector<2x32xbf16>, vector<32x64xbf16>, vector<2x64xf32> -> vector<2x64xf32>
    %398 = arith.addf %390, %397 : vector<2x64xf32>
    %c0_166 = arith.constant 0 : index
    %c0_167 = arith.constant 0 : index
    %399 = vector.load %arg17[%c0_166, %c0_167] : memref<1x64xf32, #tpu.memory_space<vmem>>, vector<1x64xf32>
    %400 = vector.broadcast %399 : vector<1x64xf32> to vector<2x64xf32>
    %401 = arith.addf %398, %400 : vector<2x64xf32>
    %cst_168 = arith.constant 0.000000e+00 : f32
    %402 = vector.broadcast %cst_168 : f32 to vector<2x64xf32>
    %403 = arith.maximumf %401, %402 : vector<2x64xf32>
    %c0_169 = arith.constant 0 : index
    %c0_170 = arith.constant 0 : index
    %404 = vector.load %arg18[%c0_169, %c0_170] : memref<64x3xbf16, #tpu.memory_space<vmem>>, vector<64x3xbf16>
    %c0_171 = arith.constant 0 : index
    %c0_172 = arith.constant 0 : index
    %405 = vector.load %arg19[%c0_171, %c0_172] : memref<1x3xf32, #tpu.memory_space<vmem>>, vector<1x3xf32>
    %406 = arith.truncf %403 : vector<2x64xf32> to vector<2x64xbf16>
    %cst_173 = arith.constant dense<0.000000e+00> : vector<2x3xf32>
    %407 = tpu.matmul %406, %404, %cst_173 {dimension_numbers = #tpu.dot_dimension_numbers<[1], [0], [0], [1], [0, 0, 1, 1], [], []>} : vector<2x64xbf16>, vector<64x3xbf16>, vector<2x3xf32> -> vector<2x3xf32>
    %408 = vector.broadcast %405 : vector<1x3xf32> to vector<2x3xf32>
    %409 = arith.addf %407, %408 : vector<2x3xf32>
    %c0_174 = arith.constant 0 : index
    %c0_175 = arith.constant 0 : index
    %410 = vector.load %arg20[%c0_174, %c0_175] : memref<2x3xf32, #tpu.memory_space<vmem>>, vector<2x3xf32>
    tpu.vector_store %arg20[%c0_174, %c0_175], %409 {strides = array<i32>} : memref<2x3xf32, #tpu.memory_space<vmem>>, vector<2x3xf32>,
    return
  }
  func.func @transform_0(%arg0: i32) -> (i32, i32, i32) {
    %c0_i32 = arith.constant 0 : i32
    %c0_i32_0 = arith.constant 0 : i32
    %c0_i32_1 = arith.constant 0 : i32
    %c0_i32_2 = arith.constant 0 : i32
    return %c0_i32, %c0_i32_0, %c0_i32_1 : i32, i32, i32
  }
  func.func @transform_1(%arg0: i32) -> (i32, i32) {
    %c0_i32 = arith.constant 0 : i32
    %c0_i32_0 = arith.constant 0 : i32
    %c0_i32_1 = arith.constant 0 : i32
    return %c0_i32, %c0_i32_0 : i32, i32
  }
  func.func @transform_2(%arg0: i32) -> (i32, i32) {
    %c0_i32 = arith.constant 0 : i32
    %c0_i32_0 = arith.constant 0 : i32
    %c0_i32_1 = arith.constant 0 : i32
    return %c0_i32, %c0_i32_0 : i32, i32
  }
  func.func @transform_3(%arg0: i32) -> (i32, i32, i32) {
    %c0_i32 = arith.constant 0 : i32
    %c0_i32_0 = arith.constant 0 : i32
    %c0_i32_1 = arith.constant 0 : i32
    %c0_i32_2 = arith.constant 0 : i32
    return %c0_i32, %c0_i32_0, %c0_i32_1 : i32, i32, i32
  }
  func.func @transform_4(%arg0: i32) -> (i32, i32, i32) {
    %c0_i32 = arith.constant 0 : i32
    %c0_i32_0 = arith.constant 0 : i32
    %c0_i32_1 = arith.constant 0 : i32
    %c0_i32_2 = arith.constant 0 : i32
    return %c0_i32, %c0_i32_0, %c0_i32_1 : i32, i32, i32
  }
  func.func @transform_5(%arg0: i32) -> (i32, i32, i32) {
    %c0_i32 = arith.constant 0 : i32
    %c0_i32_0 = arith.constant 0 : i32
    %c0_i32_1 = arith.constant 0 : i32
    %c0_i32_2 = arith.constant 0 : i32
    return %c0_i32, %c0_i32_0, %c0_i32_1 : i32, i32, i32
  }
  func.func @transform_6(%arg0: i32) -> (i32, i32, i32) {
    %c0_i32 = arith.constant 0 : i32
    %c0_i32_0 = arith.constant 0 : i32
    %c0_i32_1 = arith.constant 0 : i32
    %c0_i32_2 = arith.constant 0 : i32
    return %c0_i32, %c0_i32_0, %c0_i32_1 : i32, i32, i32
  }
  func.func @transform_7(%arg0: i32) -> (i32, i32, i32) {
    %c0_i32 = arith.constant 0 : i32
    %c0_i32_0 = arith.constant 0 : i32
    %c0_i32_1 = arith.constant 0 : i32
    %c0_i32_2 = arith.constant 0 : i32
    return %c0_i32, %c0_i32_0, %c0_i32_1 : i32, i32, i32
  }
  func.func @transform_8(%arg0: i32) -> (i32, i32, i32) {
    %c0_i32 = arith.constant 0 : i32
    %c0_i32_0 = arith.constant 0 : i32
    %c0_i32_1 = arith.constant 0 : i32
    %c0_i32_2 = arith.constant 0 : i32
    return %c0_i32, %c0_i32_0, %c0_i32_1 : i32, i32, i32
  }
  func.func @transform_9(%arg0: i32) -> (i32, i32, i32) {
    %c0_i32 = arith.constant 0 : i32
    %c0_i32_0 = arith.constant 0 : i32
    %c0_i32_1 = arith.constant 0 : i32
    %c0_i32_2 = arith.constant 0 : i32
    return %c0_i32, %c0_i32_0, %c0_i32_1 : i32, i32, i32
  }
  func.func @transform_10(%arg0: i32) -> (i32, i32, i32) {
    %c0_i32 = arith.constant 0 : i32
    %c0_i32_0 = arith.constant 0 : i32
    %c0_i32_1 = arith.constant 0 : i32
    %c0_i32_2 = arith.constant 0 : i32
    return %c0_i32, %c0_i32_0, %c0_i32_1 : i32, i32, i32
  }
  func.func @transform_11(%arg0: i32) -> (i32, i32, i32) {
    %c0_i32 = arith.constant 0 : i32
    %c0_i32_0 = arith.constant 0 : i32
    %c0_i32_1 = arith.constant 0 : i32
    %c0_i32_2 = arith.constant 0 : i32
    return %c0_i32, %c0_i32_0, %c0_i32_1 : i32, i32, i32
  }
  func.func @transform_12(%arg0: i32) -> (i32, i32, i32) {
    %c0_i32 = arith.constant 0 : i32
    %c0_i32_0 = arith.constant 0 : i32
    %c0_i32_1 = arith.constant 0 : i32
    %c0_i32_2 = arith.constant 0 : i32
    return %c0_i32, %c0_i32_0, %c0_i32_1 : i32, i32, i32
  }
  func.func @transform_13(%arg0: i32) -> (i32, i32, i32) {
    %c0_i32 = arith.constant 0 : i32
    %c0_i32_0 = arith.constant 0 : i32
    %c0_i32_1 = arith.constant 0 : i32
    %c0_i32_2 = arith.constant 0 : i32
    return %c0_i32, %c0_i32_0, %c0_i32_1 : i32, i32, i32
  }
  func.func @transform_14(%arg0: i32) -> (i32, i32, i32) {
    %c0_i32 = arith.constant 0 : i32
    %c0_i32_0 = arith.constant 0 : i32
    %c0_i32_1 = arith.constant 0 : i32
    %c0_i32_2 = arith.constant 0 : i32
    return %c0_i32, %c0_i32_0, %c0_i32_1 : i32, i32, i32
  }
  func.func @transform_15(%arg0: i32) -> (i32, i32, i32) {
    %c0_i32 = arith.constant 0 : i32
    %c0_i32_0 = arith.constant 0 : i32
    %c0_i32_1 = arith.constant 0 : i32
    %c0_i32_2 = arith.constant 0 : i32
    return %c0_i32, %c0_i32_0, %c0_i32_1 : i32, i32, i32
  }
  func.func @transform_16(%arg0: i32) -> (i32, i32) {
    %c0_i32 = arith.constant 0 : i32
    %c0_i32_0 = arith.constant 0 : i32
    %c0_i32_1 = arith.constant 0 : i32
    return %c0_i32, %c0_i32_0 : i32, i32
  }
  func.func @transform_17(%arg0: i32) -> (i32, i32) {
    %c0_i32 = arith.constant 0 : i32
    %c0_i32_0 = arith.constant 0 : i32
    %c0_i32_1 = arith.constant 0 : i32
    return %c0_i32, %c0_i32_0 : i32, i32
  }
  func.func @transform_18(%arg0: i32) -> (i32, i32) {
    %c0_i32 = arith.constant 0 : i32
    %c0_i32_0 = arith.constant 0 : i32
    %c0_i32_1 = arith.constant 0 : i32
    return %c0_i32, %c0_i32_0 : i32, i32
  }
  func.func @transform_19(%arg0: i32) -> (i32, i32) {
    %c0_i32 = arith.constant 0 : i32
    %c0_i32_0 = arith.constant 0 : i32
    %c0_i32_1 = arith.constant 0 : i32
    return %c0_i32, %c0_i32_0 : i32, i32
  }
}

</mosaic_0001>

<llo_original>
// kernel: tpu_custom_call.1
$region0: #{tpu_custom_call.1}
  #allocation0 [shape = 'u32[]', space=smem, size = 0x4, offset = 0x4, fixed_abs, tag = 'smem constant byte address 0x4 - core index']
  #allocation1 [shape = 'u32[144,128]{1,0:T(1,128)}', space=vmem, size = 0x12000, scoped, tag = 'internal scratch']
  %s0 = inlined_call_operand.vmem [shape: f32[2,8,16], index: 0, kind: input, shape index: {}]
  %s1 = inlined_call_operand.vmem [shape: bf16[16,32], index: 1, kind: input, shape index: {}]
  %s2 = inlined_call_operand.vmem [shape: f32[1,32], index: 2, kind: input, shape index: {}]
  %s3 = inlined_call_operand.hbm [shape: bf16[2,32,96], index: 3, kind: input, shape index: {}]
  %s4 = inlined_call_operand.vmem [shape: f32[2,1,96], index: 4, kind: input, shape index: {}]
  %s5 = inlined_call_operand.hbm [shape: bf16[2,32,32], index: 5, kind: input, shape index: {}]
  %s6 = inlined_call_operand.vmem [shape: f32[2,1,32], index: 6, kind: input, shape index: {}]
  %s7 = inlined_call_operand.hbm [shape: f32[2,1,32], index: 7, kind: input, shape index: {}]
  %s8 = inlined_call_operand.hbm [shape: f32[2,1,32], index: 8, kind: input, shape index: {}]
  %s9 = inlined_call_operand.hbm [shape: bf16[2,32,64], index: 9, kind: input, shape index: {}]
  %s10 = inlined_call_operand.hbm [shape: f32[2,1,64], index: 10, kind: input, shape index: {}]
  %s11 = inlined_call_operand.vmem [shape: bf16[2,64,32], index: 11, kind: input, shape index: {}]
  %s12 = inlined_call_operand.hbm [shape: f32[2,1,32], index: 12, kind: input, shape index: {}]
  %s13 = inlined_call_operand.hbm [shape: f32[2,1,32], index: 13, kind: input, shape index: {}]
  %s14 = inlined_call_operand.hbm [shape: f32[2,1,32], index: 14, kind: input, shape index: {}]
  %s15 = inlined_call_operand.vmem [shape: bf16[8,32,64], index: 15, kind: input, shape index: {}]
  %s16 = inlined_call_operand.hbm [shape: f32[1,64], index: 16, kind: input, shape index: {}]
  %s17 = inlined_call_operand.vmem [shape: bf16[64,3], index: 17, kind: input, shape index: {}]
  %s18 = inlined_call_operand.vmem [shape: f32[1,3], index: 18, kind: input, shape index: {}]
  %s19 = inlined_call_operand.hbm [shape: f32[2,3], index: 19, kind: output, shape index: {}]
  %s20 = sld [smem:[#allocation0]]
  $region126: #{tpu_custom_call.1} parent=0
    _
  %s22 = ssub.s32 1, %s20
  %s23 = scalar_select 0, %s22, %s20
  $region1: #{tpu_custom_call.1} parent=0
    #allocation2 [shape = 'u8[16384]{0}', space=vmem, size = 0x4000, scoped, tag = 'input window, operand 3, single buffered']
    #allocation3 [shape = 's32[1]{0}', space=sflag, size = 0x4, scoped, tag = 'scoped memory for tpu_custom_call.1']
    #allocation4 [shape = 's32[1]{0}', space=sflag, size = 0x4, scoped, tag = 'scoped memory for tpu_custom_call.1']
    #allocation5 [shape = 'u8[16384]{0}', space=vmem, size = 0x4000, scoped, tag = 'input window, operand 5, single buffered']
    #allocation6 [shape = 's32[1]{0}', space=sflag, size = 0x4, scoped, tag = 'scoped memory for tpu_custom_call.1']
    #allocation7 [shape = 'u8[1024]{0}', space=vmem, size = 0x400, scoped, tag = 'input window, operand 7, single buffered']
    #allocation8 [shape = 'u8[1024]{0}', space=vmem, size = 0x400, scoped, tag = 'input window, operand 8, single buffered']
    #allocation9 [shape = 's32[1]{0}', space=sflag, size = 0x4, scoped, tag = 'scoped memory for tpu_custom_call.1']
    #allocation10 [shape = 'u8[16384]{0}', space=vmem, size = 0x4000, scoped, tag = 'input window, operand 9, single buffered']
    #allocation11 [shape = 'u8[1024]{0}', space=vmem, size = 0x400, scoped, tag = 'input window, operand 10, single buffered']
    #allocation12 [shape = 's32[1]{0}', space=sflag, size = 0x4, scoped, tag = 'scoped memory for tpu_custom_call.1']
    #allocation13 [shape = 'u8[1024]{0}', space=vmem, size = 0x400, scoped, tag = 'input window, operand 12, single buffered']
    #allocation14 [shape = 'u8[1024]{0}', space=vmem, size = 0x400, scoped, tag = 'input window, operand 13, single buffered']
    #allocation15 [shape = 's32[1]{0}', space=sflag, size = 0x4, scoped, tag = 'scoped memory for tpu_custom_call.1']
    #allocation16 [shape = 'u8[1024]{0}', space=vmem, size = 0x400, scoped, tag = 'input window, operand 14, single buffered']
    #allocation17 [shape = 'u8[512]{0}', space=vmem, size = 0x400, scoped, tag = 'input window, operand 16, single buffered']
    #allocation18 [shape = 's32[1]{0}', space=sflag, size = 0x4, scoped, tag = 'scoped memory for tpu_custom_call.1']
    #allocation19 [shape = 'u8[1024]{0}', space=vmem, size = 0x400, scoped, tag = 'output window, operand 0, single buffered']
    %24 = vsyncpa [#allocation3], 0
    %25 = vsyncpa [#allocation6], 0
    %26 = vsyncpa [#allocation9], 0
    %27 = vsyncpa [#allocation12], 0
    %28 = vsyncpa [#allocation15], 0
    %29 = vsyncpa [#allocation18], 0
    %30 = vsyncpa [#allocation4], 0
    // Predicated region
    $region2: #{tpu_custom_call.1} parent=1 // pred_check
      _
    $region3: #{tpu_custom_call.1} parent=1 // pred_check_branch
      %32 = sbr.rel (0) target = $region5
    $region4: #{tpu_custom_call.1} parent=1 // pred_region
      _
    $region5: #{tpu_custom_call.1} parent=1 // pred_fallthru
      _
    // Predicated region
    $region6: #{tpu_custom_call.1} parent=1 // pred_check
      _
    $region7: #{tpu_custom_call.1} parent=1 // pred_check_branch
      %34 = sbr.rel (0) target = $region9
    $region8: #{tpu_custom_call.1} parent=1 // pred_region
      _
    $region9: #{tpu_custom_call.1} parent=1 // pred_fallthru
      _
    // Predicated region
    $region10: #{tpu_custom_call.1} parent=1 // pred_check
      _
    $region11: #{tpu_custom_call.1} parent=1 // pred_check_branch
      %36 = sbr.rel (0) target = $region13
    $region12: #{tpu_custom_call.1} parent=1 // pred_region
      _
    $region13: #{tpu_custom_call.1} parent=1 // pred_fallthru
      _
    // Predicated region
    $region14: #{tpu_custom_call.1} parent=1 // pred_check
      _
    $region15: #{tpu_custom_call.1} parent=1 // pred_check_branch
      %38 = sbr.rel (0) target = $region17
    $region16: #{tpu_custom_call.1} parent=1 // pred_region
      %s40 = ssub.s32 512, 512
      %41 = vsyncadd [#allocation3], %s40
      %s42 = sshll.u32 [#allocation2], 4
      %s43 = int_to_ptr.vmem [resolvable:$true] %s42
      %48 = dma.hbm_to_vmem [thread:$0]  %s3, 512, %s43, [#allocation3], 64, 64, 4
    $region17: #{tpu_custom_call.1} parent=1 // pred_fallthru
      _
    // Predicated region
    $region18: #{tpu_custom_call.1} parent=1 // pred_check
      _
    $region19: #{tpu_custom_call.1} parent=1 // pred_check_branch
      %50 = sbr.rel (0) target = $region21
    $region20: #{tpu_custom_call.1} parent=1 // pred_region
      _
    $region21: #{tpu_custom_call.1} parent=1 // pred_fallthru
      _
    // Predicated region
    $region22: #{tpu_custom_call.1} parent=1 // pred_check
      _
    $region23: #{tpu_custom_call.1} parent=1 // pred_check_branch
      %52 = sbr.rel (0) target = $region25
    $region24: #{tpu_custom_call.1} parent=1 // pred_region
      %s54 = ssub.s32 512, 512
      %55 = vsyncadd [#allocation6], %s54
      %s56 = sshll.u32 [#allocation5], 4
      %s57 = int_to_ptr.vmem [resolvable:$true] %s56
      %62 = dma.hbm_to_vmem [thread:$0]  %s5, 512, %s57, [#allocation6], 64, 64, 4
    $region25: #{tpu_custom_call.1} parent=1 // pred_fallthru
      _
    // Predicated region
    $region26: #{tpu_custom_call.1} parent=1 // pred_check
      _
    $region27: #{tpu_custom_call.1} parent=1 // pred_check_branch
      %64 = sbr.rel (0) target = $region29
    $region28: #{tpu_custom_call.1} parent=1 // pred_region
      _
    $region29: #{tpu_custom_call.1} parent=1 // pred_fallthru
      _
    // Predicated region
    $region30: #{tpu_custom_call.1} parent=1 // pred_check
      _
    $region31: #{tpu_custom_call.1} parent=1 // pred_check_branch
      %66 = sbr.rel (0) target = $region33
    $region32: #{tpu_custom_call.1} parent=1 // pred_region
      %s68 = ssub.s32 32, 32
      %69 = vsyncadd [#allocation6], %s68
      %s70 = sshll.u32 [#allocation7], 4
      %s71 = int_to_ptr.vmem [resolvable:$true] %s70
      %76 = dma.hbm_to_vmem [thread:$0]  %s7, 32, %s71, [#allocation6], 16, 16, 1
    $region33: #{tpu_custom_call.1} parent=1 // pred_fallthru
      _
    // Predicated region
    $region34: #{tpu_custom_call.1} parent=1 // pred_check
      _
    $region35: #{tpu_custom_call.1} parent=1 // pred_check_branch
      %78 = sbr.rel (0) target = $region37
    $region36: #{tpu_custom_call.1} parent=1 // pred_region
      %s80 = ssub.s32 32, 32
      %81 = vsyncadd [#allocation9], %s80
      %s82 = sshll.u32 [#allocation8], 4
      %s83 = int_to_ptr.vmem [resolvable:$true] %s82
      %88 = dma.hbm_to_vmem [thread:$0]  %s8, 32, %s83, [#allocation9], 16, 16, 1
    $region37: #{tpu_custom_call.1} parent=1 // pred_fallthru
      _
    // Predicated region
    $region38: #{tpu_custom_call.1} parent=1 // pred_check
      _
    $region39: #{tpu_custom_call.1} parent=1 // pred_check_branch
      %90 = sbr.rel (0) target = $region41
    $region40: #{tpu_custom_call.1} parent=1 // pred_region
      %s92 = ssub.s32 512, 512
      %93 = vsyncadd [#allocation9], %s92
      %s94 = sshll.u32 [#allocation10], 4
      %s95 = int_to_ptr.vmem [resolvable:$true] %s94
      %100 = dma.hbm_to_vmem [thread:$0]  %s9, 512, %s95, [#allocation9], 64, 64, 4
    $region41: #{tpu_custom_call.1} parent=1 // pred_fallthru
      _
    // Predicated region
    $region42: #{tpu_custom_call.1} parent=1 // pred_check
      _
    $region43: #{tpu_custom_call.1} parent=1 // pred_check_branch
      %102 = sbr.rel (0) target = $region45
    $region44: #{tpu_custom_call.1} parent=1 // pred_region
      %s104 = ssub.s32 32, 32
      %105 = vsyncadd [#allocation12], %s104
      %s106 = sshll.u32 [#allocation11], 4
      %s107 = int_to_ptr.vmem [resolvable:$true] %s106
      %112 = dma.hbm_to_vmem [thread:$0]  %s10, 32, %s107, [#allocation12], 16, 16, 1
    $region45: #{tpu_custom_call.1} parent=1 // pred_fallthru
      _
    // Predicated region
    $region46: #{tpu_custom_call.1} parent=1 // pred_check
      _
    $region47: #{tpu_custom_call.1} parent=1 // pred_check_branch
      %114 = sbr.rel (0) target = $region49
    $region48: #{tpu_custom_call.1} parent=1 // pred_region
      _
    $region49: #{tpu_custom_call.1} parent=1 // pred_fallthru
      _
    // Predicated region
    $region50: #{tpu_custom_call.1} parent=1 // pred_check
      _
    $region51: #{tpu_custom_call.1} parent=1 // pred_check_branch
      %116 = sbr.rel (0) target = $region53
    $region52: #{tpu_custom_call.1} parent=1 // pred_region
      %s118 = ssub.s32 32, 32
      %119 = vsyncadd [#allocation12], %s118
      %s120 = sshll.u32 [#allocation13], 4
      %s121 = int_to_ptr.vmem [resolvable:$true] %s120
      %126 = dma.hbm_to_vmem [thread:$0]  %s12, 32, %s121, [#allocation12], 16, 16, 1
    $region53: #{tpu_custom_call.1} parent=1 // pred_fallthru
      _
    // Predicated region
    $region54: #{tpu_custom_call.1} parent=1 // pred_check
      _
    $region55: #{tpu_custom_call.1} parent=1 // pred_check_branch
      %128 = sbr.rel (0) target = $region57
    $region56: #{tpu_custom_call.1} parent=1 // pred_region
      %s130 = ssub.s32 32, 32
      %131 = vsyncadd [#allocation15], %s130
      %s132 = sshll.u32 [#allocation14], 4
      %s133 = int_to_ptr.vmem [resolvable:$true] %s132
      %138 = dma.hbm_to_vmem [thread:$0]  %s13, 32, %s133, [#allocation15], 16, 16, 1
    $region57: #{tpu_custom_call.1} parent=1 // pred_fallthru
      _
    // Predicated region
    $region58: #{tpu_custom_call.1} parent=1 // pred_check
      _
    $region59: #{tpu_custom_call.1} parent=1 // pred_check_branch
      %140 = sbr.rel (0) target = $region61
    $region60: #{tpu_custom_call.1} parent=1 // pred_region
      %s142 = ssub.s32 32, 32
      %143 = vsyncadd [#allocation15], %s142
      %s144 = sshll.u32 [#allocation16], 4
      %s145 = int_to_ptr.vmem [resolvable:$true] %s144
      %150 = dma.hbm_to_vmem [thread:$0]  %s14, 32, %s145, [#allocation15], 16, 16, 1
    $region61: #{tpu_custom_call.1} parent=1 // pred_fallthru
      _
    // Predicated region
    $region62: #{tpu_custom_call.1} parent=1 // pred_check
      _
    $region63: #{tpu_custom_call.1} parent=1 // pred_check_branch
      %152 = sbr.rel (0) target = $region65
    $region64: #{tpu_custom_call.1} parent=1 // pred_region
      _
    $region65: #{tpu_custom_call.1} parent=1 // pred_fallthru
      _
    // Predicated region
    $region66: #{tpu_custom_call.1} parent=1 // pred_check
      _
    $region67: #{tpu_custom_call.1} parent=1 // pred_check_branch
      %154 = sbr.rel (0) target = $region69
    $region68: #{tpu_custom_call.1} parent=1 // pred_region
      %s156 = ssub.s32 16, 16
      %157 = vsyncadd [#allocation18], %s156
      %s159 = sshll.u32 [#allocation17], 4
      %s160 = int_to_ptr.vmem [resolvable:$true] %s159
      %162 = dma.hbm_to_vmem [thread:$0]  %s16, 16, %s160, [#allocation18]
    $region69: #{tpu_custom_call.1} parent=1 // pred_fallthru
      _
    // Predicated region
    $region70: #{tpu_custom_call.1} parent=1 // pred_check
      _
    $region71: #{tpu_custom_call.1} parent=1 // pred_check_branch
      %164 = sbr.rel (0) target = $region73
    $region72: #{tpu_custom_call.1} parent=1 // pred_region
      _
    $region73: #{tpu_custom_call.1} parent=1 // pred_fallthru
      _
    // Predicated region
    $region74: #{tpu_custom_call.1} parent=1 // pred_check
      _
    $region75: #{tpu_custom_call.1} parent=1 // pred_check_branch
      %166 = sbr.rel (0) target = $region77
    $region76: #{tpu_custom_call.1} parent=1 // pred_region
      _
    $region77: #{tpu_custom_call.1} parent=1 // pred_fallthru
      _
    // Predicated region
    $region78: #{tpu_custom_call.1} parent=1 // pred_check
      _
    $region79: #{tpu_custom_call.1} parent=1 // pred_check_branch
      %168 = sbr.rel (0) target = $region81
    $region80: #{tpu_custom_call.1} parent=1 // pred_region
      %169 = dma.done [#allocation3], 512
    $region81: #{tpu_custom_call.1} parent=1 // pred_fallthru
      _
    // Predicated region
    $region82: #{tpu_custom_call.1} parent=1 // pred_check
      _
    $region83: #{tpu_custom_call.1} parent=1 // pred_check_branch
      %171 = sbr.rel (0) target = $region85
    $region84: #{tpu_custom_call.1} parent=1 // pred_region
      %172 = dma.done [#allocation6], 512
    $region85: #{tpu_custom_call.1} parent=1 // pred_fallthru
      _
    // Predicated region
    $region86: #{tpu_custom_call.1} parent=1 // pred_check
      _
    $region87: #{tpu_custom_call.1} parent=1 // pred_check_branch
      %174 = sbr.rel (0) target = $region89
    $region88: #{tpu_custom_call.1} parent=1 // pred_region
      %175 = dma.done [#allocation6], 32
    $region89: #{tpu_custom_call.1} parent=1 // pred_fallthru
      _
    // Predicated region
    $region90: #{tpu_custom_call.1} parent=1 // pred_check
      _
    $region91: #{tpu_custom_call.1} parent=1 // pred_check_branch
      %177 = sbr.rel (0) target = $region93
    $region92: #{tpu_custom_call.1} parent=1 // pred_region
      %178 = dma.done [#allocation9], 32
    $region93: #{tpu_custom_call.1} parent=1 // pred_fallthru
      _
    // Predicated region
    $region94: #{tpu_custom_call.1} parent=1 // pred_check
      _
    $region95: #{tpu_custom_call.1} parent=1 // pred_check_branch
      %180 = sbr.rel (0) target = $region97
    $region96: #{tpu_custom_call.1} parent=1 // pred_region
      %181 = dma.done [#allocation9], 512
    $region97: #{tpu_custom_call.1} parent=1 // pred_fallthru
      _
    // Predicated region
    $region98: #{tpu_custom_call.1} parent=1 // pred_check
      _
    $region99: #{tpu_custom_call.1} parent=1 // pred_check_branch
      %183 = sbr.rel (0) target = $region101
    $region100: #{tpu_custom_call.1} parent=1 // pred_region
      %184 = dma.done [#allocation12], 32
    $region101: #{tpu_custom_call.1} parent=1 // pred_fallthru
      _
    // Predicated region
    $region102: #{tpu_custom_call.1} parent=1 // pred_check
      _
    $region103: #{tpu_custom_call.1} parent=1 // pred_check_branch
      %186 = sbr.rel (0) target = $region105
    $region104: #{tpu_custom_call.1} parent=1 // pred_region
      %187 = dma.done [#allocation12], 32
    $region105: #{tpu_custom_call.1} parent=1 // pred_fallthru
      _
    // Predicated region
    $region106: #{tpu_custom_call.1} parent=1 // pred_check
      _
    $region107: #{tpu_custom_call.1} parent=1 // pred_check_branch
      %189 = sbr.rel (0) target = $region109
    $region108: #{tpu_custom_call.1} parent=1 // pred_region
      %190 = dma.done [#allocation15], 32
    $region109: #{tpu_custom_call.1} parent=1 // pred_fallthru
      _
    // Predicated region
    $region110: #{tpu_custom_call.1} parent=1 // pred_check
      _
    $region111: #{tpu_custom_call.1} parent=1 // pred_check_branch
      %192 = sbr.rel (0) target = $region113
    $region112: #{tpu_custom_call.1} parent=1 // pred_region
      %193 = dma.done [#allocation15], 32
    $region113: #{tpu_custom_call.1} parent=1 // pred_fallthru
      _
    // Predicated region
    $region114: #{tpu_custom_call.1} parent=1 // pred_check
      _
    $region115: #{tpu_custom_call.1} parent=1 // pred_check_branch
      %195 = sbr.rel (0) target = $region117
    $region116: #{tpu_custom_call.1} parent=1 // pred_region
      %196 = dma.done [#allocation18], 16
    $region117: #{tpu_custom_call.1} parent=1 // pred_fallthru
      _
    %v198 = vld [vmem:[%s0] sm:$0xff]
    %v199 = vld [vmem:[%s0 + $0x8] sm:$0xff]
    %v200 = vld [vmem:[%s1] sm:$0xf]
    %v201 = vld [vmem:[%s1 + $0x4] sm:$0xf]
    %v202 = vld [vmem:[%s2] sm:$0x1]
    %v203 = vpack.c.bf16 %v199, %v198
    %v205 = vlaneseq
    %v206 = vshrl.u32 %v205, 7
    %v207 = vsub.s32 0, %v206
    %v208 = vrot.slane %v202, %v207
    %v212 = vunpack.c.l.b16 %v200
    %v213 = vunpack.c.l.b16 %v201
    %v214 = vpack.c.b16 %v213, %v212
    %vm216 = vcmask 130048
    %v218 = vsel %vm216, %v203, 0
    %220 = vmatprep.subr.bf16.mxu0 0
    %221 = vmatpush1.bf16.msra.mxu0 0
    %222 = vmatprep.subr.bf16.mxu0 0
    %223 = vmatpush1.bf16.msra.mxu0 0
    %224 = vmatprep.subr.bf16.mxu0 0
    %225 = vmatpush1.bf16.msra.mxu0 0
    %226 = vmatprep.subr.bf16.mxu0 0
    %227 = vmatpush1.bf16.msra.mxu0 0
    %228 = vmatprep.subr.bf16.mxu0 0
    %229 = vmatpush1.bf16.msra.mxu0 0
    %230 = vmatprep.subr.bf16.mxu0 0
    %231 = vmatpush1.bf16.msra.mxu0 0
    %232 = vmatprep.subr.bf16.mxu0 0
    %233 = vmatpush1.bf16.msra.mxu0 0
    %234 = vmatprep.subr.bf16.mxu0 0
    %235 = vmatpush1.bf16.msra.mxu0 %v214
    %236 = vmatprep.subr.bf16.mxu0 0
    %237 = vmatpush2.bf16.msra.mxu0 0
    %238 = vmatprep.subr.bf16.mxu0 0
    %239 = vmatpush2.bf16.msra.mxu0 0
    %240 = vmatprep.subr.bf16.mxu0 0
    %241 = vmatpush2.bf16.msra.mxu0 0
    %242 = vmatprep.subr.bf16.mxu0 0
    %243 = vmatpush2.bf16.msra.mxu0 0
    %244 = vmatprep.subr.bf16.mxu0 0
    %245 = vmatpush2.bf16.msra.mxu0 0
    %246 = vmatprep.subr.bf16.mxu0 0
    %247 = vmatpush2.bf16.msra.mxu0 0
    %248 = vmatprep.subr.bf16.mxu0 0
    %249 = vmatpush2.bf16.msra.mxu0 0
    %250 = vmatprep.subr.bf16.mxu0 0
    %251 = vmatpush2.bf16.msra.mxu0 0
    %252 = vmatprep.mubr.bf16.mxu0 0
    %253 = vmatmul.mubr.bf16.gmra.mxu0 %v218
    %v254 = vpop.f32.mrf.mxu0
    %v255 = vadd.f32 %v208, %v254
    %v256 = vpop.f32.mrf.mxu0
    %v257 = vpop.f32.mrf.mxu0
    %v258 = vadd.f32 %v208, %v257
    %v259 = vpop.f32.mrf.mxu0
    %260 = vdwg.mxu0
    %v261 = vld [vmem:[#allocation2] sm:$0xf]
    %v262 = vld [vmem:[#allocation2 + $0x4] sm:$0xf]
    %v263 = vld [vmem:[#allocation2 + $0x8] sm:$0xf]
    %v264 = vld [vmem:[#allocation2 + $0xc] sm:$0xf]
    %v265 = vld [vmem:[%s4] sm:$0x1]
    %v266 = vpack.c.bf16 %v258, %v255
    %v268 = vlaneseq
    %v269 = vshrl.u32 %v268, 7
    %v270 = vsub.s32 0, %v269
    %v271 = vrot.slane %v265, %v270
    %v277 = vunpack.c.l.b16 %v261
    %v278 = vunpack.c.l.b16 %v262
    %v279 = vunpack.c.l.b16 %v263
    %v280 = vunpack.c.l.b16 %v264
    %v281 = vpack.c.b16 %v278, %v277
    %v282 = vpack.c.b16 %v280, %v279
    %vm285 = vcmask 261120
    %v287 = vsel %vm285, %v266, 0
    %289 = vmatprep.subr.bf16.mxu0 0
    %290 = vmatpush1.bf16.msra.mxu0 0
    %291 = vmatprep.subr.bf16.mxu0 0
    %292 = vmatpush1.bf16.msra.mxu0 0
    %293 = vmatprep.subr.bf16.mxu0 0
    %294 = vmatpush1.bf16.msra.mxu0 0
    %295 = vmatprep.subr.bf16.mxu0 0
    %296 = vmatpush1.bf16.msra.mxu0 0
    %297 = vmatprep.subr.bf16.mxu0 0
    %298 = vmatpush1.bf16.msra.mxu0 0
    %299 = vmatprep.subr.bf16.mxu0 0
    %300 = vmatpush1.bf16.msra.mxu0 0
    %301 = vmatprep.subr.bf16.mxu0 0
    %302 = vmatpush1.bf16.msra.mxu0 %v282
    %303 = vmatprep.subr.bf16.mxu0 0
    %304 = vmatpush1.bf16.msra.mxu0 %v281
    %305 = vmatprep.subr.bf16.mxu0 0
    %306 = vmatpush2.bf16.msra.mxu0 0
    %307 = vmatprep.subr.bf16.mxu0 0
    %308 = vmatpush2.bf16.msra.mxu0 0
    %309 = vmatprep.subr.bf16.mxu0 0
    %310 = vmatpush2.bf16.msra.mxu0 0
    %311 = vmatprep.subr.bf16.mxu0 0
    %312 = vmatpush2.bf16.msra.mxu0 0
    %313 = vmatprep.subr.bf16.mxu0 0
    %314 = vmatpush2.bf16.msra.mxu0 0
    %315 = vmatprep.subr.bf16.mxu0 0
    %316 = vmatpush2.bf16.msra.mxu0 0
    %317 = vmatprep.subr.bf16.mxu0 0
    %318 = vmatpush2.bf16.msra.mxu0 0
    %319 = vmatprep.subr.bf16.mxu0 0
    %320 = vmatpush2.bf16.msra.mxu0 0
    %321 = vmatprep.mubr.bf16.mxu0 0
    %322 = vmatmul.mubr.bf16.gmra.mxu0 %v287
    %v323 = vpop.f32.mrf.mxu0
    %v324 = vadd.f32 %v271, %v323
    %v325 = vpop.f32.mrf.mxu0
    %v326 = vpop.f32.mrf.mxu0
    %v327 = vadd.f32 %v271, %v326
    %v328 = vpop.f32.mrf.mxu0
    %329 = vdwg.mxu0
    %v330 = vpack.c.bf16 %v324, %v324
    %v331 = vpack.c.bf16 %v327, %v327
    %333 = vrot.lane.b32.xlu0 %v330, 96
    %v334 = vpop.permute.xlu0 %333
    %vm335 = vcmask 64512
    %v337 = vsel %vm335, %v330, 0
    %v340 = vsel %vm335, %v334, 0
    %342 = vmatprep.subr.bf16.mxu0 0
    %343 = vmatpush1.bf16.xpose.msra.mxu0 0
    %344 = vmatprep.subr.bf16.mxu0 0
    %345 = vmatpush1.bf16.xpose.msra.mxu0 0
    %346 = vmatprep.subr.bf16.mxu0 0
    %347 = vmatpush1.bf16.xpose.msra.mxu0 0
    %348 = vmatprep.subr.bf16.mxu0 0
    %349 = vmatpush1.bf16.xpose.msra.mxu0 0
    %350 = vmatprep.subr.bf16.mxu0 0
    %351 = vmatpush1.bf16.xpose.msra.mxu0 0
    %352 = vmatprep.subr.bf16.mxu0 0
    %353 = vmatpush1.bf16.xpose.msra.mxu0 0
    %354 = vmatprep.subr.bf16.mxu0 0
    %355 = vmatpush1.bf16.xpose.msra.mxu0 0
    %356 = vmatprep.subr.bf16.mxu0 0
    %357 = vmatpush1.bf16.xpose.msra.mxu0 %v340
    %358 = vmatprep.subr.bf16.mxu0 0
    %359 = vmatpush2.bf16.xpose.msra.mxu0 0
    %360 = vmatprep.subr.bf16.mxu0 0
    %361 = vmatpush2.bf16.xpose.msra.mxu0 0
    %362 = vmatprep.subr.bf16.mxu0 0
    %363 = vmatpush2.bf16.xpose.msra.mxu0 0
    %364 = vmatprep.subr.bf16.mxu0 0
    %365 = vmatpush2.bf16.xpose.msra.mxu0 0
    %366 = vmatprep.subr.bf16.mxu0 0
    %367 = vmatpush2.bf16.xpose.msra.mxu0 0
    %368 = vmatprep.subr.bf16.mxu0 0
    %369 = vmatpush2.bf16.xpose.msra.mxu0 0
    %370 = vmatprep.subr.bf16.mxu0 0
    %371 = vmatpush2.bf16.xpose.msra.mxu0 0
    %372 = vmatprep.subr.bf16.mxu0 0
    %373 = vmatpush2.bf16.xpose.msra.mxu0 0
    %374 = vmatprep.mubr.bf16.mxu0 0
    %375 = vmatmul.mubr.bf16.gmra.mxu0 %v337
    %v376 = vpop.f32.mrf.mxu0
    %v377 = vadd.f32 0.0, %v376
    %v378 = vpop.f32.mrf.mxu0
    %v379 = vpop.f32.mrf.mxu0
    %v380 = vpop.f32.mrf.mxu0
    %381 = vdwg.mxu0
    %383 = vrot.lane.b32.xlu0 %v331, 96
    %v384 = vpop.permute.xlu0 %383
    %v386 = vsel %vm335, %v331, 0
    %v389 = vsel %vm335, %v384, 0
    %391 = vmatprep.subr.bf16.mxu0 0
    %392 = vmatpush1.bf16.xpose.msra.mxu0 0
    %393 = vmatprep.subr.bf16.mxu0 0
    %394 = vmatpush1.bf16.xpose.msra.mxu0 0
    %395 = vmatprep.subr.bf16.mxu0 0
    %396 = vmatpush1.bf16.xpose.msra.mxu0 0
    %397 = vmatprep.subr.bf16.mxu0 0
    %398 = vmatpush1.bf16.xpose.msra.mxu0 0
    %399 = vmatprep.subr.bf16.mxu0 0
    %400 = vmatpush1.bf16.xpose.msra.mxu0 0
    %401 = vmatprep.subr.bf16.mxu0 0
    %402 = vmatpush1.bf16.xpose.msra.mxu0 0
    %403 = vmatprep.subr.bf16.mxu0 0
    %404 = vmatpush1.bf16.xpose.msra.mxu0 0
    %405 = vmatprep.subr.bf16.mxu0 0
    %406 = vmatpush1.bf16.xpose.msra.mxu0 %v389
    %407 = vmatprep.subr.bf16.mxu0 0
    %408 = vmatpush2.bf16.xpose.msra.mxu0 0
    %409 = vmatprep.subr.bf16.mxu0 0
    %410 = vmatpush2.bf16.xpose.msra.mxu0 0
    %411 = vmatprep.subr.bf16.mxu0 0
    %412 = vmatpush2.bf16.xpose.msra.mxu0 0
    %413 = vmatprep.subr.bf16.mxu0 0
    %414 = vmatpush2.bf16.xpose.msra.mxu0 0
    %415 = vmatprep.subr.bf16.mxu0 0
    %416 = vmatpush2.bf16.xpose.msra.mxu0 0
    %417 = vmatprep.subr.bf16.mxu0 0
    %418 = vmatpush2.bf16.xpose.msra.mxu0 0
    %419 = vmatprep.subr.bf16.mxu0 0
    %420 = vmatpush2.bf16.xpose.msra.mxu0 0
    %421 = vmatprep.subr.bf16.mxu0 0
    %422 = vmatpush2.bf16.xpose.msra.mxu0 0
    %423 = vmatprep.mubr.bf16.mxu0 0
    %424 = vmatmul.mubr.bf16.gmra.mxu0 %v386
    %v425 = vpop.f32.mrf.mxu0
    %v426 = vadd.f32 0.0, %v425
    %v427 = vpop.f32.mrf.mxu0
    %v428 = vpop.f32.mrf.mxu0
    %v429 = vpop.f32.mrf.mxu0
    %430 = vdwg.mxu0
    %v431 = vsel %vm335, %v377, -inf
    %432 = vmax.xlane.f32.xlu0 %v431
    %v433 = vpop.xlane.xlu0 %432
    %v434 = vsel %vm335, %v426, -inf
    %435 = vmax.xlane.f32.xlu0 %v434
    %v436 = vpop.xlane.xlu0 %435
    %v437 = vsub.f32 %v377, %v433
    %v438 = vsub.f32 %v426, %v436
    %v439 = vmul.f32 %v437, 1.442695
    %v440 = vpow.pop %v439
    %v441 = vmul.f32 %v438, 1.442695
    %v442 = vpow.pop %v441
    %v443 = vsel %vm335, %v440, 0.0
    %444 = vadd.xlane.f32.xlu0 %v443
    %v445 = vpop.xlane.xlu0 %444
    %v446 = vsel %vm335, %v442, 0.0
    %447 = vadd.xlane.f32.xlu0 %v446
    %v448 = vpop.xlane.xlu0 %447
    %v449 = vrcp.pop %v445
    %v450 = vmul.f32 %v440, %v449
    %v451 = vrcp.pop %v448
    %v452 = vmul.f32 %v442, %v451
    %v453 = vpack.c.bf16 %v450, %v450
    %v454 = vpack.c.bf16 %v452, %v452
    %455 = vrot.lane.b32.xlu0 %v330, 64
    %v456 = vpop.permute.xlu0 %455
    %v458 = vsel %vm335, %v453, 0
    %vm460 = vcmask 1043456
    %v462 = vsel %vm460, %v456, 0
    %464 = vmatprep.subr.bf16.mxu0 0
    %465 = vmatpush1.bf16.msra.mxu0 0
    %466 = vmatprep.subr.bf16.mxu0 0
    %467 = vmatpush1.bf16.msra.mxu0 0
    %468 = vmatprep.subr.bf16.mxu0 0
    %469 = vmatpush1.bf16.msra.mxu0 0
    %470 = vmatprep.subr.bf16.mxu0 0
    %471 = vmatpush1.bf16.msra.mxu0 0
    %472 = vmatprep.subr.bf16.mxu0 0
    %473 = vmatpush1.bf16.msra.mxu0 0
    %474 = vmatprep.subr.bf16.mxu0 0
    %475 = vmatpush1.bf16.msra.mxu0 0
    %476 = vmatprep.subr.bf16.mxu0 0
    %477 = vmatpush1.bf16.msra.mxu0 0
    %478 = vmatprep.subr.bf16.mxu0 0
    %479 = vmatpush1.bf16.msra.mxu0 %v462
    %480 = vmatprep.subr.bf16.mxu0 0
    %481 = vmatpush2.bf16.msra.mxu0 0
    %482 = vmatprep.subr.bf16.mxu0 0
    %483 = vmatpush2.bf16.msra.mxu0 0
    %484 = vmatprep.subr.bf16.mxu0 0
    %485 = vmatpush2.bf16.msra.mxu0 0
    %486 = vmatprep.subr.bf16.mxu0 0
    %487 = vmatpush2.bf16.msra.mxu0 0
    %488 = vmatprep.subr.bf16.mxu0 0
    %489 = vmatpush2.bf16.msra.mxu0 0
    %490 = vmatprep.subr.bf16.mxu0 0
    %491 = vmatpush2.bf16.msra.mxu0 0
    %492 = vmatprep.subr.bf16.mxu0 0
    %493 = vmatpush2.bf16.msra.mxu0 0
    %494 = vmatprep.subr.bf16.mxu0 0
    %495 = vmatpush2.bf16.msra.mxu0 0
    %496 = vmatprep.mubr.bf16.mxu0 0
    %497 = vmatmul.mubr.bf16.gmra.mxu0 %v458
    %v498 = vpop.f32.mrf.mxu0
    %v499 = vadd.f32 0.0, %v498
    %v500 = vpop.f32.mrf.mxu0
    %v501 = vpop.f32.mrf.mxu0
    %v502 = vpop.f32.mrf.mxu0
    %503 = vdwg.mxu0
    %504 = vrot.lane.b32.xlu0 %v331, 64
    %v505 = vpop.permute.xlu0 %504
    %v507 = vsel %vm335, %v454, 0
    %v510 = vsel %vm460, %v505, 0
    %512 = vmatprep.subr.bf16.mxu0 0
    %513 = vmatpush1.bf16.msra.mxu0 0
    %514 = vmatprep.subr.bf16.mxu0 0
    %515 = vmatpush1.bf16.msra.mxu0 0
    %516 = vmatprep.subr.bf16.mxu0 0
    %517 = vmatpush1.bf16.msra.mxu0 0
    %518 = vmatprep.subr.bf16.mxu0 0
    %519 = vmatpush1.bf16.msra.mxu0 0
    %520 = vmatprep.subr.bf16.mxu0 0
    %521 = vmatpush1.bf16.msra.mxu0 0
    %522 = vmatprep.subr.bf16.mxu0 0
    %523 = vmatpush1.bf16.msra.mxu0 0
    %524 = vmatprep.subr.bf16.mxu0 0
    %525 = vmatpush1.bf16.msra.mxu0 0
    %526 = vmatprep.subr.bf16.mxu0 0
    %527 = vmatpush1.bf16.msra.mxu0 %v510
    %528 = vmatprep.subr.bf16.mxu0 0
    %529 = vmatpush2.bf16.msra.mxu0 0
    %530 = vmatprep.subr.bf16.mxu0 0
    %531 = vmatpush2.bf16.msra.mxu0 0
    %532 = vmatprep.subr.bf16.mxu0 0
    %533 = vmatpush2.bf16.msra.mxu0 0
    %534 = vmatprep.subr.bf16.mxu0 0
    %535 = vmatpush2.bf16.msra.mxu0 0
    %536 = vmatprep.subr.bf16.mxu0 0
    %537 = vmatpush2.bf16.msra.mxu0 0
    %538 = vmatprep.subr.bf16.mxu0 0
    %539 = vmatpush2.bf16.msra.mxu0 0
    %540 = vmatprep.subr.bf16.mxu0 0
    %541 = vmatpush2.bf16.msra.mxu0 0
    %542 = vmatprep.subr.bf16.mxu0 0
    %543 = vmatpush2.bf16.msra.mxu0 0
    %544 = vmatprep.mubr.bf16.mxu0 0
    %545 = vmatmul.mubr.bf16.gmra.mxu0 %v507
    %v546 = vpop.f32.mrf.mxu0
    %v547 = vadd.f32 0.0, %v546
    %v548 = vpop.f32.mrf.mxu0
    %v549 = vpop.f32.mrf.mxu0
    %v550 = vpop.f32.mrf.mxu0
    %551 = vdwg.mxu0
    %552 = vrot.lane.b32.xlu0 %v330, 120
    %v553 = vpop.permute.xlu0 %552
    %554 = vrot.lane.b32.xlu0 %v330, 88
    %v555 = vpop.permute.xlu0 %554
    %v557 = vsel %vm335, %v553, 0
    %v560 = vsel %vm335, %v555, 0
    %562 = vmatprep.subr.bf16.mxu0 0
    %563 = vmatpush1.bf16.xpose.msra.mxu0 0
    %564 = vmatprep.subr.bf16.mxu0 0
    %565 = vmatpush1.bf16.xpose.msra.mxu0 0
    %566 = vmatprep.subr.bf16.mxu0 0
    %567 = vmatpush1.bf16.xpose.msra.mxu0 0
    %568 = vmatprep.subr.bf16.mxu0 0
    %569 = vmatpush1.bf16.xpose.msra.mxu0 0
    %570 = vmatprep.subr.bf16.mxu0 0
    %571 = vmatpush1.bf16.xpose.msra.mxu0 0
    %572 = vmatprep.subr.bf16.mxu0 0
    %573 = vmatpush1.bf16.xpose.msra.mxu0 0
    %574 = vmatprep.subr.bf16.mxu0 0
    %575 = vmatpush1.bf16.xpose.msra.mxu0 0
    %576 = vmatprep.subr.bf16.mxu0 0
    %577 = vmatpush1.bf16.xpose.msra.mxu0 %v560
    %578 = vmatprep.subr.bf16.mxu0 0
    %579 = vmatpush2.bf16.xpose.msra.mxu0 0
    %580 = vmatprep.subr.bf16.mxu0 0
    %581 = vmatpush2.bf16.xpose.msra.mxu0 0
    %582 = vmatprep.subr.bf16.mxu0 0
    %583 = vmatpush2.bf16.xpose.msra.mxu0 0
    %584 = vmatprep.subr.bf16.mxu0 0
    %585 = vmatpush2.bf16.xpose.msra.mxu0 0
    %586 = vmatprep.subr.bf16.mxu0 0
    %587 = vmatpush2.bf16.xpose.msra.mxu0 0
    %588 = vmatprep.subr.bf16.mxu0 0
    %589 = vmatpush2.bf16.xpose.msra.mxu0 0
    %590 = vmatprep.subr.bf16.mxu0 0
    %591 = vmatpush2.bf16.xpose.msra.mxu0 0
    %592 = vmatprep.subr.bf16.mxu0 0
    %593 = vmatpush2.bf16.xpose.msra.mxu0 0
    %594 = vmatprep.mubr.bf16.mxu0 0
    %595 = vmatmul.mubr.bf16.gmra.mxu0 %v557
    %v596 = vpop.f32.mrf.mxu0
    %v597 = vadd.f32 0.0, %v596
    %v598 = vpop.f32.mrf.mxu0
    %v599 = vpop.f32.mrf.mxu0
    %v600 = vpop.f32.mrf.mxu0
    %601 = vdwg.mxu0
    %602 = vrot.lane.b32.xlu0 %v331, 120
    %v603 = vpop.permute.xlu0 %602
    %604 = vrot.lane.b32.xlu0 %v331, 88
    %v605 = vpop.permute.xlu0 %604
    %v607 = vsel %vm335, %v603, 0
    %v610 = vsel %vm335, %v605, 0
    %612 = vmatprep.subr.bf16.mxu0 0
    %613 = vmatpush1.bf16.xpose.msra.mxu0 0
    %614 = vmatprep.subr.bf16.mxu0 0
    %615 = vmatpush1.bf16.xpose.msra.mxu0 0
    %616 = vmatprep.subr.bf16.mxu0 0
    %617 = vmatpush1.bf16.xpose.msra.mxu0 0
    %618 = vmatprep.subr.bf16.mxu0 0
    %619 = vmatpush1.bf16.xpose.msra.mxu0 0
    %620 = vmatprep.subr.bf16.mxu0 0
    %621 = vmatpush1.bf16.xpose.msra.mxu0 0
    %622 = vmatprep.subr.bf16.mxu0 0
    %623 = vmatpush1.bf16.xpose.msra.mxu0 0
    %624 = vmatprep.subr.bf16.mxu0 0
    %625 = vmatpush1.bf16.xpose.msra.mxu0 0
    %626 = vmatprep.subr.bf16.mxu0 0
    %627 = vmatpush1.bf16.xpose.msra.mxu0 %v610
    %628 = vmatprep.subr.bf16.mxu0 0
    %629 = vmatpush2.bf16.xpose.msra.mxu0 0
    %630 = vmatprep.subr.bf16.mxu0 0
    %631 = vmatpush2.bf16.xpose.msra.mxu0 0
    %632 = vmatprep.subr.bf16.mxu0 0
    %633 = vmatpush2.bf16.xpose.msra.mxu0 0
    %634 = vmatprep.subr.bf16.mxu0 0
    %635 = vmatpush2.bf16.xpose.msra.mxu0 0
    %636 = vmatprep.subr.bf16.mxu0 0
    %637 = vmatpush2.bf16.xpose.msra.mxu0 0
    %638 = vmatprep.subr.bf16.mxu0 0
    %639 = vmatpush2.bf16.xpose.msra.mxu0 0
    %640 = vmatprep.subr.bf16.mxu0 0
    %641 = vmatpush2.bf16.xpose.msra.mxu0 0
    %642 = vmatprep.subr.bf16.mxu0 0
    %643 = vmatpush2.bf16.xpose.msra.mxu0 0
    %644 = vmatprep.mubr.bf16.mxu0 0
    %645 = vmatmul.mubr.bf16.gmra.mxu0 %v607
    %v646 = vpop.f32.mrf.mxu0
    %v647 = vadd.f32 0.0, %v646
    %v648 = vpop.f32.mrf.mxu0
    %v649 = vpop.f32.mrf.mxu0
    %v650 = vpop.f32.mrf.mxu0
    %651 = vdwg.mxu0
    %v652 = vsel %vm335, %v597, -inf
    %653 = vmax.xlane.f32.xlu0 %v652
    %v654 = vpop.xlane.xlu0 %653
    %v655 = vsel %vm335, %v647, -inf
    %656 = vmax.xlane.f32.xlu0 %v655
    %v657 = vpop.xlane.xlu0 %656
    %v658 = vsub.f32 %v597, %v654
    %v659 = vsub.f32 %v647, %v657
    %v660 = vmul.f32 %v658, 1.442695
    %v661 = vpow.pop %v660
    %v662 = vmul.f32 %v659, 1.442695
    %v663 = vpow.pop %v662
    %v664 = vsel %vm335, %v661, 0.0
    %665 = vadd.xlane.f32.xlu0 %v664
    %v666 = vpop.xlane.xlu0 %665
    %v667 = vsel %vm335, %v663, 0.0
    %668 = vadd.xlane.f32.xlu0 %v667
    %v669 = vpop.xlane.xlu0 %668
    %v670 = vrcp.pop %v666
    %v671 = vmul.f32 %v661, %v670
    %v672 = vrcp.pop %v669
    %v673 = vmul.f32 %v663, %v672
    %v674 = vpack.c.bf16 %v671, %v671
    %v675 = vpack.c.bf16 %v673, %v673
    %676 = vrot.lane.b32.xlu0 %v330, 56
    %v677 = vpop.permute.xlu0 %676
    %v679 = vsel %vm335, %v674, 0
    %v682 = vsel %vm460, %v677, 0
    %684 = vmatprep.subr.bf16.mxu0 0
    %685 = vmatpush1.bf16.msra.mxu0 0
    %686 = vmatprep.subr.bf16.mxu0 0
    %687 = vmatpush1.bf16.msra.mxu0 0
    %688 = vmatprep.subr.bf16.mxu0 0
    %689 = vmatpush1.bf16.msra.mxu0 0
    %690 = vmatprep.subr.bf16.mxu0 0
    %691 = vmatpush1.bf16.msra.mxu0 0
    %692 = vmatprep.subr.bf16.mxu0 0
    %693 = vmatpush1.bf16.msra.mxu0 0
    %694 = vmatprep.subr.bf16.mxu0 0
    %695 = vmatpush1.bf16.msra.mxu0 0
    %696 = vmatprep.subr.bf16.mxu0 0
    %697 = vmatpush1.bf16.msra.mxu0 0
    %698 = vmatprep.subr.bf16.mxu0 0
    %699 = vmatpush1.bf16.msra.mxu0 %v682
    %700 = vmatprep.subr.bf16.mxu0 0
    %701 = vmatpush2.bf16.msra.mxu0 0
    %702 = vmatprep.subr.bf16.mxu0 0
    %703 = vmatpush2.bf16.msra.mxu0 0
    %704 = vmatprep.subr.bf16.mxu0 0
    %705 = vmatpush2.bf16.msra.mxu0 0
    %706 = vmatprep.subr.bf16.mxu0 0
    %707 = vmatpush2.bf16.msra.mxu0 0
    %708 = vmatprep.subr.bf16.mxu0 0
    %709 = vmatpush2.bf16.msra.mxu0 0
    %710 = vmatprep.subr.bf16.mxu0 0
    %711 = vmatpush2.bf16.msra.mxu0 0
    %712 = vmatprep.subr.bf16.mxu0 0
    %713 = vmatpush2.bf16.msra.mxu0 0
    %714 = vmatprep.subr.bf16.mxu0 0
    %715 = vmatpush2.bf16.msra.mxu0 0
    %716 = vmatprep.mubr.bf16.mxu0 0
    %717 = vmatmul.mubr.bf16.gmra.mxu0 %v679
    %v718 = vpop.f32.mrf.mxu0
    %v719 = vadd.f32 0.0, %v718
    %v720 = vpop.f32.mrf.mxu0
    %v721 = vpop.f32.mrf.mxu0
    %v722 = vpop.f32.mrf.mxu0
    %723 = vdwg.mxu0
    %724 = vrot.lane.b32.xlu0 %v331, 56
    %v725 = vpop.permute.xlu0 %724
    %v727 = vsel %vm335, %v675, 0
    %v730 = vsel %vm460, %v725, 0
    %732 = vmatprep.subr.bf16.mxu0 0
    %733 = vmatpush1.bf16.msra.mxu0 0
    %734 = vmatprep.subr.bf16.mxu0 0
    %735 = vmatpush1.bf16.msra.mxu0 0
    %736 = vmatprep.subr.bf16.mxu0 0
    %737 = vmatpush1.bf16.msra.mxu0 0
    %738 = vmatprep.subr.bf16.mxu0 0
    %739 = vmatpush1.bf16.msra.mxu0 0
    %740 = vmatprep.subr.bf16.mxu0 0
    %741 = vmatpush1.bf16.msra.mxu0 0
    %742 = vmatprep.subr.bf16.mxu0 0
    %743 = vmatpush1.bf16.msra.mxu0 0
    %744 = vmatprep.subr.bf16.mxu0 0
    %745 = vmatpush1.bf16.msra.mxu0 0
    %746 = vmatprep.subr.bf16.mxu0 0
    %747 = vmatpush1.bf16.msra.mxu0 %v730
    %748 = vmatprep.subr.bf16.mxu0 0
    %749 = vmatpush2.bf16.msra.mxu0 0
    %750 = vmatprep.subr.bf16.mxu0 0
    %751 = vmatpush2.bf16.msra.mxu0 0
    %752 = vmatprep.subr.bf16.mxu0 0
    %753 = vmatpush2.bf16.msra.mxu0 0
    %754 = vmatprep.subr.bf16.mxu0 0
    %755 = vmatpush2.bf16.msra.mxu0 0
    %756 = vmatprep.subr.bf16.mxu0 0
    %757 = vmatpush2.bf16.msra.mxu0 0
    %758 = vmatprep.subr.bf16.mxu0 0
    %759 = vmatpush2.bf16.msra.mxu0 0
    %760 = vmatprep.subr.bf16.mxu0 0
    %761 = vmatpush2.bf16.msra.mxu0 0
    %762 = vmatprep.subr.bf16.mxu0 0
    %763 = vmatpush2.bf16.msra.mxu0 0
    %764 = vmatprep.mubr.bf16.mxu0 0
    %765 = vmatmul.mubr.bf16.gmra.mxu0 %v727
    %v766 = vpop.f32.mrf.mxu0
    %v767 = vadd.f32 0.0, %v766
    %v768 = vpop.f32.mrf.mxu0
    %v769 = vpop.f32.mrf.mxu0
    %v770 = vpop.f32.mrf.mxu0
    %771 = vdwg.mxu0
    %772 = vrot.lane.b32.xlu0 %v330, 112
    %v773 = vpop.permute.xlu0 %772
    %774 = vrot.lane.b32.xlu0 %v330, 80
    %v775 = vpop.permute.xlu0 %774
    %v777 = vsel %vm335, %v773, 0
    %v780 = vsel %vm335, %v775, 0
    %782 = vmatprep.subr.bf16.mxu0 0
    %783 = vmatpush1.bf16.xpose.msra.mxu0 0
    %784 = vmatprep.subr.bf16.mxu0 0
    %785 = vmatpush1.bf16.xpose.msra.mxu0 0
    %786 = vmatprep.subr.bf16.mxu0 0
    %787 = vmatpush1.bf16.xpose.msra.mxu0 0
    %788 = vmatprep.subr.bf16.mxu0 0
    %789 = vmatpush1.bf16.xpose.msra.mxu0 0
    %790 = vmatprep.subr.bf16.mxu0 0
    %791 = vmatpush1.bf16.xpose.msra.mxu0 0
    %792 = vmatprep.subr.bf16.mxu0 0
    %793 = vmatpush1.bf16.xpose.msra.mxu0 0
    %794 = vmatprep.subr.bf16.mxu0 0
    %795 = vmatpush1.bf16.xpose.msra.mxu0 0
    %796 = vmatprep.subr.bf16.mxu0 0
    %797 = vmatpush1.bf16.xpose.msra.mxu0 %v780
    %798 = vmatprep.subr.bf16.mxu0 0
    %799 = vmatpush2.bf16.xpose.msra.mxu0 0
    %800 = vmatprep.subr.bf16.mxu0 0
    %801 = vmatpush2.bf16.xpose.msra.mxu0 0
    %802 = vmatprep.subr.bf16.mxu0 0
    %803 = vmatpush2.bf16.xpose.msra.mxu0 0
    %804 = vmatprep.subr.bf16.mxu0 0
    %805 = vmatpush2.bf16.xpose.msra.mxu0 0
    %806 = vmatprep.subr.bf16.mxu0 0
    %807 = vmatpush2.bf16.xpose.msra.mxu0 0
    %808 = vmatprep.subr.bf16.mxu0 0
    %809 = vmatpush2.bf16.xpose.msra.mxu0 0
    %810 = vmatprep.subr.bf16.mxu0 0
    %811 = vmatpush2.bf16.xpose.msra.mxu0 0
    %812 = vmatprep.subr.bf16.mxu0 0
    %813 = vmatpush2.bf16.xpose.msra.mxu0 0
    %814 = vmatprep.mubr.bf16.mxu0 0
    %815 = vmatmul.mubr.bf16.gmra.mxu0 %v777
    %v816 = vpop.f32.mrf.mxu0
    %v817 = vadd.f32 0.0, %v816
    %v818 = vpop.f32.mrf.mxu0
    %v819 = vpop.f32.mrf.mxu0
    %v820 = vpop.f32.mrf.mxu0
    %821 = vdwg.mxu0
    %822 = vrot.lane.b32.xlu0 %v331, 112
    %v823 = vpop.permute.xlu0 %822
    %824 = vrot.lane.b32.xlu0 %v331, 80
    %v825 = vpop.permute.xlu0 %824
    %v827 = vsel %vm335, %v823, 0
    %v830 = vsel %vm335, %v825, 0
    %832 = vmatprep.subr.bf16.mxu0 0
    %833 = vmatpush1.bf16.xpose.msra.mxu0 0
    %834 = vmatprep.subr.bf16.mxu0 0
    %835 = vmatpush1.bf16.xpose.msra.mxu0 0
    %836 = vmatprep.subr.bf16.mxu0 0
    %837 = vmatpush1.bf16.xpose.msra.mxu0 0
    %838 = vmatprep.subr.bf16.mxu0 0
    %839 = vmatpush1.bf16.xpose.msra.mxu0 0
    %840 = vmatprep.subr.bf16.mxu0 0
    %841 = vmatpush1.bf16.xpose.msra.mxu0 0
    %842 = vmatprep.subr.bf16.mxu0 0
    %843 = vmatpush1.bf16.xpose.msra.mxu0 0
    %844 = vmatprep.subr.bf16.mxu0 0
    %845 = vmatpush1.bf16.xpose.msra.mxu0 0
    %846 = vmatprep.subr.bf16.mxu0 0
    %847 = vmatpush1.bf16.xpose.msra.mxu0 %v830
    %848 = vmatprep.subr.bf16.mxu0 0
    %849 = vmatpush2.bf16.xpose.msra.mxu0 0
    %850 = vmatprep.subr.bf16.mxu0 0
    %851 = vmatpush2.bf16.xpose.msra.mxu0 0
    %852 = vmatprep.subr.bf16.mxu0 0
    %853 = vmatpush2.bf16.xpose.msra.mxu0 0
    %854 = vmatprep.subr.bf16.mxu0 0
    %855 = vmatpush2.bf16.xpose.msra.mxu0 0
    %856 = vmatprep.subr.bf16.mxu0 0
    %857 = vmatpush2.bf16.xpose.msra.mxu0 0
    %858 = vmatprep.subr.bf16.mxu0 0
    %859 = vmatpush2.bf16.xpose.msra.mxu0 0
    %860 = vmatprep.subr.bf16.mxu0 0
    %861 = vmatpush2.bf16.xpose.msra.mxu0 0
    %862 = vmatprep.subr.bf16.mxu0 0
    %863 = vmatpush2.bf16.xpose.msra.mxu0 0
    %864 = vmatprep.mubr.bf16.mxu0 0
    %865 = vmatmul.mubr.bf16.gmra.mxu0 %v827
    %v866 = vpop.f32.mrf.mxu0
    %v867 = vadd.f32 0.0, %v866
    %v868 = vpop.f32.mrf.mxu0
    %v869 = vpop.f32.mrf.mxu0
    %v870 = vpop.f32.mrf.mxu0
    %871 = vdwg.mxu0
    %v872 = vsel %vm335, %v817, -inf
    %873 = vmax.xlane.f32.xlu0 %v872
    %v874 = vpop.xlane.xlu0 %873
    %v875 = vsel %vm335, %v867, -inf
    %876 = vmax.xlane.f32.xlu0 %v875
    %v877 = vpop.xlane.xlu0 %876
    %v878 = vsub.f32 %v817, %v874
    %v879 = vsub.f32 %v867, %v877
    %v880 = vmul.f32 %v878, 1.442695
    %v881 = vpow.pop %v880
    %v882 = vmul.f32 %v879, 1.442695
    %v883 = vpow.pop %v882
    %v884 = vsel %vm335, %v881, 0.0
    %885 = vadd.xlane.f32.xlu0 %v884
    %v886 = vpop.xlane.xlu0 %885
    %v887 = vsel %vm335, %v883, 0.0
    %888 = vadd.xlane.f32.xlu0 %v887
    %v889 = vpop.xlane.xlu0 %888
    %v890 = vrcp.pop %v886
    %v891 = vmul.f32 %v881, %v890
    %v892 = vrcp.pop %v889
    %v893 = vmul.f32 %v883, %v892
    %v894 = vpack.c.bf16 %v891, %v891
    %v895 = vpack.c.bf16 %v893, %v893
    %896 = vrot.lane.b32.xlu0 %v330, 48
    %v897 = vpop.permute.xlu0 %896
    %v899 = vsel %vm335, %v894, 0
    %v902 = vsel %vm460, %v897, 0
    %904 = vmatprep.subr.bf16.mxu0 0
    %905 = vmatpush1.bf16.msra.mxu0 0
    %906 = vmatprep.subr.bf16.mxu0 0
    %907 = vmatpush1.bf16.msra.mxu0 0
    %908 = vmatprep.subr.bf16.mxu0 0
    %909 = vmatpush1.bf16.msra.mxu0 0
    %910 = vmatprep.subr.bf16.mxu0 0
    %911 = vmatpush1.bf16.msra.mxu0 0
    %912 = vmatprep.subr.bf16.mxu0 0
    %913 = vmatpush1.bf16.msra.mxu0 0
    %914 = vmatprep.subr.bf16.mxu0 0
    %915 = vmatpush1.bf16.msra.mxu0 0
    %916 = vmatprep.subr.bf16.mxu0 0
    %917 = vmatpush1.bf16.msra.mxu0 0
    %918 = vmatprep.subr.bf16.mxu0 0
    %919 = vmatpush1.bf16.msra.mxu0 %v902
    %920 = vmatprep.subr.bf16.mxu0 0
    %921 = vmatpush2.bf16.msra.mxu0 0
    %922 = vmatprep.subr.bf16.mxu0 0
    %923 = vmatpush2.bf16.msra.mxu0 0
    %924 = vmatprep.subr.bf16.mxu0 0
    %925 = vmatpush2.bf16.msra.mxu0 0
    %926 = vmatprep.subr.bf16.mxu0 0
    %927 = vmatpush2.bf16.msra.mxu0 0
    %928 = vmatprep.subr.bf16.mxu0 0
    %929 = vmatpush2.bf16.msra.mxu0 0
    %930 = vmatprep.subr.bf16.mxu0 0
    %931 = vmatpush2.bf16.msra.mxu0 0
    %932 = vmatprep.subr.bf16.mxu0 0
    %933 = vmatpush2.bf16.msra.mxu0 0
    %934 = vmatprep.subr.bf16.mxu0 0
    %935 = vmatpush2.bf16.msra.mxu0 0
    %936 = vmatprep.mubr.bf16.mxu0 0
    %937 = vmatmul.mubr.bf16.gmra.mxu0 %v899
    %v938 = vpop.f32.mrf.mxu0
    %v939 = vadd.f32 0.0, %v938
    %v940 = vpop.f32.mrf.mxu0
    %v941 = vpop.f32.mrf.mxu0
    %v942 = vpop.f32.mrf.mxu0
    %943 = vdwg.mxu0
    %944 = vrot.lane.b32.xlu0 %v331, 48
    %v945 = vpop.permute.xlu0 %944
    %v947 = vsel %vm335, %v895, 0
    %v950 = vsel %vm460, %v945, 0
    %952 = vmatprep.subr.bf16.mxu0 0
    %953 = vmatpush1.bf16.msra.mxu0 0
    %954 = vmatprep.subr.bf16.mxu0 0
    %955 = vmatpush1.bf16.msra.mxu0 0
    %956 = vmatprep.subr.bf16.mxu0 0
    %957 = vmatpush1.bf16.msra.mxu0 0
    %958 = vmatprep.subr.bf16.mxu0 0
    %959 = vmatpush1.bf16.msra.mxu0 0
    %960 = vmatprep.subr.bf16.mxu0 0
    %961 = vmatpush1.bf16.msra.mxu0 0
    %962 = vmatprep.subr.bf16.mxu0 0
    %963 = vmatpush1.bf16.msra.mxu0 0
    %964 = vmatprep.subr.bf16.mxu0 0
    %965 = vmatpush1.bf16.msra.mxu0 0
    %966 = vmatprep.subr.bf16.mxu0 0
    %967 = vmatpush1.bf16.msra.mxu0 %v950
    %968 = vmatprep.subr.bf16.mxu0 0
    %969 = vmatpush2.bf16.msra.mxu0 0
    %970 = vmatprep.subr.bf16.mxu0 0
    %971 = vmatpush2.bf16.msra.mxu0 0
    %972 = vmatprep.subr.bf16.mxu0 0
    %973 = vmatpush2.bf16.msra.mxu0 0
    %974 = vmatprep.subr.bf16.mxu0 0
    %975 = vmatpush2.bf16.msra.mxu0 0
    %976 = vmatprep.subr.bf16.mxu0 0
    %977 = vmatpush2.bf16.msra.mxu0 0
    %978 = vmatprep.subr.bf16.mxu0 0
    %979 = vmatpush2.bf16.msra.mxu0 0
    %980 = vmatprep.subr.bf16.mxu0 0
    %981 = vmatpush2.bf16.msra.mxu0 0
    %982 = vmatprep.subr.bf16.mxu0 0
    %983 = vmatpush2.bf16.msra.mxu0 0
    %984 = vmatprep.mubr.bf16.mxu0 0
    %985 = vmatmul.mubr.bf16.gmra.mxu0 %v947
    %v986 = vpop.f32.mrf.mxu0
    %v987 = vadd.f32 0.0, %v986
    %v988 = vpop.f32.mrf.mxu0
    %v989 = vpop.f32.mrf.mxu0
    %v990 = vpop.f32.mrf.mxu0
    %991 = vdwg.mxu0
    %992 = vrot.lane.b32.xlu0 %v330, 104
    %v993 = vpop.permute.xlu0 %992
    %994 = vrot.lane.b32.xlu0 %v330, 72
    %v995 = vpop.permute.xlu0 %994
    %v997 = vsel %vm335, %v993, 0
    %v1000 = vsel %vm335, %v995, 0
    %1002 = vmatprep.subr.bf16.mxu0 0
    %1003 = vmatpush1.bf16.xpose.msra.mxu0 0
    %1004 = vmatprep.subr.bf16.mxu0 0
    %1005 = vmatpush1.bf16.xpose.msra.mxu0 0
    %1006 = vmatprep.subr.bf16.mxu0 0
    %1007 = vmatpush1.bf16.xpose.msra.mxu0 0
    %1008 = vmatprep.subr.bf16.mxu0 0
    %1009 = vmatpush1.bf16.xpose.msra.mxu0 0
    %1010 = vmatprep.subr.bf16.mxu0 0
    %1011 = vmatpush1.bf16.xpose.msra.mxu0 0
    %1012 = vmatprep.subr.bf16.mxu0 0
    %1013 = vmatpush1.bf16.xpose.msra.mxu0 0
    %1014 = vmatprep.subr.bf16.mxu0 0
    %1015 = vmatpush1.bf16.xpose.msra.mxu0 0
    %1016 = vmatprep.subr.bf16.mxu0 0
    %1017 = vmatpush1.bf16.xpose.msra.mxu0 %v1000
    %1018 = vmatprep.subr.bf16.mxu0 0
    %1019 = vmatpush2.bf16.xpose.msra.mxu0 0
    %1020 = vmatprep.subr.bf16.mxu0 0
    %1021 = vmatpush2.bf16.xpose.msra.mxu0 0
    %1022 = vmatprep.subr.bf16.mxu0 0
    %1023 = vmatpush2.bf16.xpose.msra.mxu0 0
    %1024 = vmatprep.subr.bf16.mxu0 0
    %1025 = vmatpush2.bf16.xpose.msra.mxu0 0
    %1026 = vmatprep.subr.bf16.mxu0 0
    %1027 = vmatpush2.bf16.xpose.msra.mxu0 0
    %1028 = vmatprep.subr.bf16.mxu0 0
    %1029 = vmatpush2.bf16.xpose.msra.mxu0 0
    %1030 = vmatprep.subr.bf16.mxu0 0
    %1031 = vmatpush2.bf16.xpose.msra.mxu0 0
    %1032 = vmatprep.subr.bf16.mxu0 0
    %1033 = vmatpush2.bf16.xpose.msra.mxu0 0
    %1034 = vmatprep.mubr.bf16.mxu0 0
    %1035 = vmatmul.mubr.bf16.gmra.mxu0 %v997
    %v1036 = vpop.f32.mrf.mxu0
    %v1037 = vadd.f32 0.0, %v1036
    %v1038 = vpop.f32.mrf.mxu0
    %v1039 = vpop.f32.mrf.mxu0
    %v1040 = vpop.f32.mrf.mxu0
    %1041 = vdwg.mxu0
    %1042 = vrot.lane.b32.xlu0 %v331, 104
    %v1043 = vpop.permute.xlu0 %1042
    %1044 = vrot.lane.b32.xlu0 %v331, 72
    %v1045 = vpop.permute.xlu0 %1044
    %v1047 = vsel %vm335, %v1043, 0
    %v1050 = vsel %vm335, %v1045, 0
    %1052 = vmatprep.subr.bf16.mxu0 0
    %1053 = vmatpush1.bf16.xpose.msra.mxu0 0
    %1054 = vmatprep.subr.bf16.mxu0 0
    %1055 = vmatpush1.bf16.xpose.msra.mxu0 0
    %1056 = vmatprep.subr.bf16.mxu0 0
    %1057 = vmatpush1.bf16.xpose.msra.mxu0 0
    %1058 = vmatprep.subr.bf16.mxu0 0
    %1059 = vmatpush1.bf16.xpose.msra.mxu0 0
    %1060 = vmatprep.subr.bf16.mxu0 0
    %1061 = vmatpush1.bf16.xpose.msra.mxu0 0
    %1062 = vmatprep.subr.bf16.mxu0 0
    %1063 = vmatpush1.bf16.xpose.msra.mxu0 0
    %1064 = vmatprep.subr.bf16.mxu0 0
    %1065 = vmatpush1.bf16.xpose.msra.mxu0 0
    %1066 = vmatprep.subr.bf16.mxu0 0
    %1067 = vmatpush1.bf16.xpose.msra.mxu0 %v1050
    %1068 = vmatprep.subr.bf16.mxu0 0
    %1069 = vmatpush2.bf16.xpose.msra.mxu0 0
    %1070 = vmatprep.subr.bf16.mxu0 0
    %1071 = vmatpush2.bf16.xpose.msra.mxu0 0
    %1072 = vmatprep.subr.bf16.mxu0 0
    %1073 = vmatpush2.bf16.xpose.msra.mxu0 0
    %1074 = vmatprep.subr.bf16.mxu0 0
    %1075 = vmatpush2.bf16.xpose.msra.mxu0 0
    %1076 = vmatprep.subr.bf16.mxu0 0
    %1077 = vmatpush2.bf16.xpose.msra.mxu0 0
    %1078 = vmatprep.subr.bf16.mxu0 0
    %1079 = vmatpush2.bf16.xpose.msra.mxu0 0
    %1080 = vmatprep.subr.bf16.mxu0 0
    %1081 = vmatpush2.bf16.xpose.msra.mxu0 0
    %1082 = vmatprep.subr.bf16.mxu0 0
    %1083 = vmatpush2.bf16.xpose.msra.mxu0 0
    %1084 = vmatprep.mubr.bf16.mxu0 0
    %1085 = vmatmul.mubr.bf16.gmra.mxu0 %v1047
    %v1086 = vpop.f32.mrf.mxu0
    %v1087 = vadd.f32 0.0, %v1086
    %v1088 = vpop.f32.mrf.mxu0
    %v1089 = vpop.f32.mrf.mxu0
    %v1090 = vpop.f32.mrf.mxu0
    %1091 = vdwg.mxu0
    %v1092 = vsel %vm335, %v1037, -inf
    %1093 = vmax.xlane.f32.xlu0 %v1092
    %v1094 = vpop.xlane.xlu0 %1093
    %v1095 = vsel %vm335, %v1087, -inf
    %1096 = vmax.xlane.f32.xlu0 %v1095
    %v1097 = vpop.xlane.xlu0 %1096
    %v1098 = vsub.f32 %v1037, %v1094
    %v1099 = vsub.f32 %v1087, %v1097
    %v1100 = vmul.f32 %v1098, 1.442695
    %v1101 = vpow.pop %v1100
    %v1102 = vmul.f32 %v1099, 1.442695
    %v1103 = vpow.pop %v1102
    %v1104 = vsel %vm335, %v1101, 0.0
    %1105 = vadd.xlane.f32.xlu0 %v1104
    %v1106 = vpop.xlane.xlu0 %1105
    %v1107 = vsel %vm335, %v1103, 0.0
    %1108 = vadd.xlane.f32.xlu0 %v1107
    %v1109 = vpop.xlane.xlu0 %1108
    %v1110 = vrcp.pop %v1106
    %v1111 = vmul.f32 %v1101, %v1110
    %v1112 = vrcp.pop %v1109
    %v1113 = vmul.f32 %v1103, %v1112
    %v1114 = vpack.c.bf16 %v1111, %v1111
    %v1115 = vpack.c.bf16 %v1113, %v1113
    %1116 = vrot.lane.b32.xlu0 %v330, 40
    %v1117 = vpop.permute.xlu0 %1116
    %v1119 = vsel %vm335, %v1114, 0
    %v1122 = vsel %vm460, %v1117, 0
    %1124 = vmatprep.subr.bf16.mxu0 0
    %1125 = vmatpush1.bf16.msra.mxu0 0
    %1126 = vmatprep.subr.bf16.mxu0 0
    %1127 = vmatpush1.bf16.msra.mxu0 0
    %1128 = vmatprep.subr.bf16.mxu0 0
    %1129 = vmatpush1.bf16.msra.mxu0 0
    %1130 = vmatprep.subr.bf16.mxu0 0
    %1131 = vmatpush1.bf16.msra.mxu0 0
    %1132 = vmatprep.subr.bf16.mxu0 0
    %1133 = vmatpush1.bf16.msra.mxu0 0
    %1134 = vmatprep.subr.bf16.mxu0 0
    %1135 = vmatpush1.bf16.msra.mxu0 0
    %1136 = vmatprep.subr.bf16.mxu0 0
    %1137 = vmatpush1.bf16.msra.mxu0 0
    %1138 = vmatprep.subr.bf16.mxu0 0
    %1139 = vmatpush1.bf16.msra.mxu0 %v1122
    %1140 = vmatprep.subr.bf16.mxu0 0
    %1141 = vmatpush2.bf16.msra.mxu0 0
    %1142 = vmatprep.subr.bf16.mxu0 0
    %1143 = vmatpush2.bf16.msra.mxu0 0
    %1144 = vmatprep.subr.bf16.mxu0 0
    %1145 = vmatpush2.bf16.msra.mxu0 0
    %1146 = vmatprep.subr.bf16.mxu0 0
    %1147 = vmatpush2.bf16.msra.mxu0 0
    %1148 = vmatprep.subr.bf16.mxu0 0
    %1149 = vmatpush2.bf16.msra.mxu0 0
    %1150 = vmatprep.subr.bf16.mxu0 0
    %1151 = vmatpush2.bf16.msra.mxu0 0
    %1152 = vmatprep.subr.bf16.mxu0 0
    %1153 = vmatpush2.bf16.msra.mxu0 0
    %1154 = vmatprep.subr.bf16.mxu0 0
    %1155 = vmatpush2.bf16.msra.mxu0 0
    %1156 = vmatprep.mubr.bf16.mxu0 0
    %1157 = vmatmul.mubr.bf16.gmra.mxu0 %v1119
    %v1158 = vpop.f32.mrf.mxu0
    %v1159 = vadd.f32 0.0, %v1158
    %v1160 = vpop.f32.mrf.mxu0
    %v1161 = vpop.f32.mrf.mxu0
    %v1162 = vpop.f32.mrf.mxu0
    %1163 = vdwg.mxu0
    %1164 = vrot.lane.b32.xlu0 %v331, 40
    %v1165 = vpop.permute.xlu0 %1164
    %v1167 = vsel %vm335, %v1115, 0
    %v1170 = vsel %vm460, %v1165, 0
    %1172 = vmatprep.subr.bf16.mxu0 0
    %1173 = vmatpush1.bf16.msra.mxu0 0
    %1174 = vmatprep.subr.bf16.mxu0 0
    %1175 = vmatpush1.bf16.msra.mxu0 0
    %1176 = vmatprep.subr.bf16.mxu0 0
    %1177 = vmatpush1.bf16.msra.mxu0 0
    %1178 = vmatprep.subr.bf16.mxu0 0
    %1179 = vmatpush1.bf16.msra.mxu0 0
    %1180 = vmatprep.subr.bf16.mxu0 0
    %1181 = vmatpush1.bf16.msra.mxu0 0
    %1182 = vmatprep.subr.bf16.mxu0 0
    %1183 = vmatpush1.bf16.msra.mxu0 0
    %1184 = vmatprep.subr.bf16.mxu0 0
    %1185 = vmatpush1.bf16.msra.mxu0 0
    %1186 = vmatprep.subr.bf16.mxu0 0
    %1187 = vmatpush1.bf16.msra.mxu0 %v1170
    %1188 = vmatprep.subr.bf16.mxu0 0
    %1189 = vmatpush2.bf16.msra.mxu0 0
    %1190 = vmatprep.subr.bf16.mxu0 0
    %1191 = vmatpush2.bf16.msra.mxu0 0
    %1192 = vmatprep.subr.bf16.mxu0 0
    %1193 = vmatpush2.bf16.msra.mxu0 0
    %1194 = vmatprep.subr.bf16.mxu0 0
    %1195 = vmatpush2.bf16.msra.mxu0 0
    %1196 = vmatprep.subr.bf16.mxu0 0
    %1197 = vmatpush2.bf16.msra.mxu0 0
    %1198 = vmatprep.subr.bf16.mxu0 0
    %1199 = vmatpush2.bf16.msra.mxu0 0
    %1200 = vmatprep.subr.bf16.mxu0 0
    %1201 = vmatpush2.bf16.msra.mxu0 0
    %1202 = vmatprep.subr.bf16.mxu0 0
    %1203 = vmatpush2.bf16.msra.mxu0 0
    %1204 = vmatprep.mubr.bf16.mxu0 0
    %1205 = vmatmul.mubr.bf16.gmra.mxu0 %v1167
    %v1206 = vpop.f32.mrf.mxu0
    %v1207 = vadd.f32 0.0, %v1206
    %v1208 = vpop.f32.mrf.mxu0
    %v1209 = vpop.f32.mrf.mxu0
    %v1210 = vpop.f32.mrf.mxu0
    %1211 = vdwg.mxu0
    %1214 = vrot.lane.b32.xlu0 %v719, 8
    %v1215 = vpop.permute.xlu0 %1214
    %1216 = vrot.lane.b32.xlu0 %v767, 8
    %v1217 = vpop.permute.xlu0 %1216
    %1222 = vrot.lane.b32.xlu0 %v939, 16
    %v1223 = vpop.permute.xlu0 %1222
    %1224 = vrot.lane.b32.xlu0 %v987, 16
    %v1225 = vpop.permute.xlu0 %1224
    %1230 = vrot.lane.b32.xlu0 %v1159, 24
    %v1231 = vpop.permute.xlu0 %1230
    %1232 = vrot.lane.b32.xlu0 %v1207, 24
    %v1233 = vpop.permute.xlu0 %1232
    %v1236 = vsel %vm335, %v499, %v1215
    %v1237 = vsel %vm335, %v547, %v1217
    %v1238 = vsel %vm216, %v1236, %v1223
    %v1239 = vsel %vm216, %v1237, %v1225
    %vm1240 = vcmask 195584
    %v1241 = vsel %vm1240, %v1238, %v1231
    %v1242 = vsel %vm1240, %v1239, %v1233
    %v1243 = vld [vmem:[#allocation5] sm:$0xf]
    %v1244 = vld [vmem:[#allocation5 + $0x4] sm:$0xf]
    %v1245 = vld [vmem:[#allocation5 + $0x8] sm:$0xf]
    %v1246 = vld [vmem:[#allocation5 + $0xc] sm:$0xf]
    %v1247 = vld [vmem:[%s6] sm:$0x1]
    %v1248 = vpack.c.bf16 %v1242, %v1241
    %v1250 = vlaneseq
    %v1251 = vshrl.u32 %v1250, 7
    %v1252 = vsub.s32 0, %v1251
    %v1253 = vrot.slane %v1247, %v1252
    %v1259 = vunpack.c.l.b16 %v1243
    %v1260 = vunpack.c.l.b16 %v1244
    %v1261 = vunpack.c.l.b16 %v1245
    %v1262 = vunpack.c.l.b16 %v1246
    %v1263 = vpack.c.b16 %v1260, %v1259
    %v1264 = vpack.c.b16 %v1262, %v1261
    %v1268 = vsel %vm285, %v1248, 0
    %1270 = vmatprep.subr.bf16.mxu0 0
    %1271 = vmatpush1.bf16.msra.mxu0 0
    %1272 = vmatprep.subr.bf16.mxu0 0
    %1273 = vmatpush1.bf16.msra.mxu0 0
    %1274 = vmatprep.subr.bf16.mxu0 0
    %1275 = vmatpush1.bf16.msra.mxu0 0
    %1276 = vmatprep.subr.bf16.mxu0 0
    %1277 = vmatpush1.bf16.msra.mxu0 0
    %1278 = vmatprep.subr.bf16.mxu0 0
    %1279 = vmatpush1.bf16.msra.mxu0 0
    %1280 = vmatprep.subr.bf16.mxu0 0
    %1281 = vmatpush1.bf16.msra.mxu0 0
    %1282 = vmatprep.subr.bf16.mxu0 0
    %1283 = vmatpush1.bf16.msra.mxu0 %v1264
    %1284 = vmatprep.subr.bf16.mxu0 0
    %1285 = vmatpush1.bf16.msra.mxu0 %v1263
    %1286 = vmatprep.subr.bf16.mxu0 0
    %1287 = vmatpush2.bf16.msra.mxu0 0
    %1288 = vmatprep.subr.bf16.mxu0 0
    %1289 = vmatpush2.bf16.msra.mxu0 0
    %1290 = vmatprep.subr.bf16.mxu0 0
    %1291 = vmatpush2.bf16.msra.mxu0 0
    %1292 = vmatprep.subr.bf16.mxu0 0
    %1293 = vmatpush2.bf16.msra.mxu0 0
    %1294 = vmatprep.subr.bf16.mxu0 0
    %1295 = vmatpush2.bf16.msra.mxu0 0
    %1296 = vmatprep.subr.bf16.mxu0 0
    %1297 = vmatpush2.bf16.msra.mxu0 0
    %1298 = vmatprep.subr.bf16.mxu0 0
    %1299 = vmatpush2.bf16.msra.mxu0 0
    %1300 = vmatprep.subr.bf16.mxu0 0
    %1301 = vmatpush2.bf16.msra.mxu0 0
    %1302 = vmatprep.mubr.bf16.mxu0 0
    %1303 = vmatmul.mubr.bf16.gmra.mxu0 %v1268
    %v1304 = vpop.f32.mrf.mxu0
    %v1305 = vadd.f32 %v1253, %v1304
    %v1306 = vpop.f32.mrf.mxu0
    %v1307 = vpop.f32.mrf.mxu0
    %v1308 = vadd.f32 %v1253, %v1307
    %v1309 = vpop.f32.mrf.mxu0
    %1310 = vdwg.mxu0
    %v1311 = vadd.f32 %v255, %v1305
    %v1312 = vadd.f32 %v258, %v1308
    %v1313 = vld [vmem:[#allocation7] sm:$0x1]
    %v1314 = vld [vmem:[#allocation8] sm:$0x1]
    %v1315 = vsel %vm285, %v1311, 0.0
    %1316 = vadd.xlane.f32.xlu0 %v1315
    %v1317 = vpop.xlane.xlu0 %1316
    %v1318 = vsel %vm285, %v1312, 0.0
    %1319 = vadd.xlane.f32.xlu0 %v1318
    %v1320 = vpop.xlane.xlu0 %1319
    %v1321 = vrcp.pop 32.0
    %v1322 = vmul.f32 %v1317, %v1321
    %v1323 = vmul.f32 %v1320, %v1321
    %v1324 = vsub.f32 %v1311, %v1322
    %v1325 = vsub.f32 %v1312, %v1323
    %v1326 = vmul.f32 %v1324, %v1324
    %v1327 = vmul.f32 %v1325, %v1325
    %v1328 = vsel %vm285, %v1326, 0.0
    %1329 = vadd.xlane.f32.xlu0 %v1328
    %v1330 = vpop.xlane.xlu0 %1329
    %v1331 = vsel %vm285, %v1327, 0.0
    %1332 = vadd.xlane.f32.xlu0 %v1331
    %v1333 = vpop.xlane.xlu0 %1332
    %v1334 = vmul.f32 %v1330, %v1321
    %v1335 = vmul.f32 %v1333, %v1321
    %v1336 = vadd.f32 %v1334, 1e-12
    %v1337 = vadd.f32 %v1335, 1e-12
    %v1338 = vrsqrt.pop %v1336
    %v1339 = vrsqrt.pop %v1337
    %v1340 = vmul.f32 %v1324, %v1338
    %v1341 = vmul.f32 %v1325, %v1339
    %v1343 = vlaneseq
    %v1344 = vshrl.u32 %v1343, 7
    %v1345 = vsub.s32 0, %v1344
    %v1346 = vrot.slane %v1313, %v1345
    %v1348 = vmul.f32 %v1340, %v1346
    %v1349 = vmul.f32 %v1341, %v1346
    %v1351 = vlaneseq
    %v1352 = vshrl.u32 %v1351, 7
    %v1353 = vsub.s32 0, %v1352
    %v1354 = vrot.slane %v1314, %v1353
    %v1356 = vadd.f32 %v1348, %v1354
    %v1357 = vadd.f32 %v1349, %v1354
    %v1358 = vld [vmem:[#allocation10] sm:$0xf]
    %v1359 = vld [vmem:[#allocation10 + $0x4] sm:$0xf]
    %v1360 = vld [vmem:[#allocation10 + $0x8] sm:$0xf]
    %v1361 = vld [vmem:[#allocation10 + $0xc] sm:$0xf]
    %v1362 = vld [vmem:[#allocation11] sm:$0x1]
    %v1363 = vpack.c.bf16 %v1357, %v1356
    %v1365 = vlaneseq
    %v1366 = vshrl.u32 %v1365, 7
    %v1367 = vsub.s32 0, %v1366
    %v1368 = vrot.slane %v1362, %v1367
    %v1374 = vunpack.c.l.b16 %v1358
    %v1375 = vunpack.c.l.b16 %v1359
    %v1376 = vunpack.c.l.b16 %v1360
    %v1377 = vunpack.c.l.b16 %v1361
    %v1378 = vpack.c.b16 %v1375, %v1374
    %v1379 = vpack.c.b16 %v1377, %v1376
    %v1383 = vsel %vm285, %v1363, 0
    %1385 = vmatprep.subr.bf16.mxu0 0
    %1386 = vmatpush1.bf16.msra.mxu0 0
    %1387 = vmatprep.subr.bf16.mxu0 0
    %1388 = vmatpush1.bf16.msra.mxu0 0
    %1389 = vmatprep.subr.bf16.mxu0 0
    %1390 = vmatpush1.bf16.msra.mxu0 0
    %1391 = vmatprep.subr.bf16.mxu0 0
    %1392 = vmatpush1.bf16.msra.mxu0 0
    %1393 = vmatprep.subr.bf16.mxu0 0
    %1394 = vmatpush1.bf16.msra.mxu0 0
    %1395 = vmatprep.subr.bf16.mxu0 0
    %1396 = vmatpush1.bf16.msra.mxu0 0
    %1397 = vmatprep.subr.bf16.mxu0 0
    %1398 = vmatpush1.bf16.msra.mxu0 %v1379
    %1399 = vmatprep.subr.bf16.mxu0 0
    %1400 = vmatpush1.bf16.msra.mxu0 %v1378
    %1401 = vmatprep.subr.bf16.mxu0 0
    %1402 = vmatpush2.bf16.msra.mxu0 0
    %1403 = vmatprep.subr.bf16.mxu0 0
    %1404 = vmatpush2.bf16.msra.mxu0 0
    %1405 = vmatprep.subr.bf16.mxu0 0
    %1406 = vmatpush2.bf16.msra.mxu0 0
    %1407 = vmatprep.subr.bf16.mxu0 0
    %1408 = vmatpush2.bf16.msra.mxu0 0
    %1409 = vmatprep.subr.bf16.mxu0 0
    %1410 = vmatpush2.bf16.msra.mxu0 0
    %1411 = vmatprep.subr.bf16.mxu0 0
    %1412 = vmatpush2.bf16.msra.mxu0 0
    %1413 = vmatprep.subr.bf16.mxu0 0
    %1414 = vmatpush2.bf16.msra.mxu0 0
    %1415 = vmatprep.subr.bf16.mxu0 0
    %1416 = vmatpush2.bf16.msra.mxu0 0
    %1417 = vmatprep.mubr.bf16.mxu0 0
    %1418 = vmatmul.mubr.bf16.gmra.mxu0 %v1383
    %v1419 = vpop.f32.mrf.mxu0
    %v1420 = vadd.f32 %v1368, %v1419
    %v1421 = vpop.f32.mrf.mxu0
    %v1422 = vpop.f32.mrf.mxu0
    %v1423 = vadd.f32 %v1368, %v1422
    %v1424 = vpop.f32.mrf.mxu0
    %1425 = vdwg.mxu0
    %v1426 = vmax.f32 %v1420, 0.0
    %v1427 = vmax.f32 %v1423, 0.0
    %v1428 = vld [vmem:[%s11] sm:$0xf]
    %v1429 = vld [vmem:[%s11 + $0x4] sm:$0xf]
    %v1430 = vld [vmem:[%s11 + $0x8] sm:$0xf]
    %v1431 = vld [vmem:[%s11 + $0xc] sm:$0xf]
    %v1432 = vld [vmem:[%s11 + $0x10] sm:$0xf]
    %v1433 = vld [vmem:[%s11 + $0x14] sm:$0xf]
    %v1434 = vld [vmem:[%s11 + $0x18] sm:$0xf]
    %v1435 = vld [vmem:[%s11 + $0x1c] sm:$0xf]
    %v1436 = vld [vmem:[#allocation13] sm:$0x1]
    %v1437 = vpack.c.bf16 %v1427, %v1426
    %v1439 = vlaneseq
    %v1440 = vshrl.u32 %v1439, 7
    %v1441 = vsub.s32 0, %v1440
    %v1442 = vrot.slane %v1436, %v1441
    %v1452 = vunpack.c.l.b16 %v1428
    %v1453 = vunpack.c.l.b16 %v1429
    %v1454 = vunpack.c.l.b16 %v1430
    %v1455 = vunpack.c.l.b16 %v1431
    %v1456 = vunpack.c.l.b16 %v1432
    %v1457 = vunpack.c.l.b16 %v1433
    %v1458 = vunpack.c.l.b16 %v1434
    %v1459 = vunpack.c.l.b16 %v1435
    %v1460 = vpack.c.b16 %v1453, %v1452
    %v1461 = vpack.c.b16 %v1455, %v1454
    %v1462 = vpack.c.b16 %v1457, %v1456
    %v1463 = vpack.c.b16 %v1459, %v1458
    %vm1468 = vcmask 523264
    %v1470 = vsel %vm1468, %v1437, 0
    %1472 = vmatprep.subr.bf16.mxu0 0
    %1473 = vmatpush1.bf16.msra.mxu0 0
    %1474 = vmatprep.subr.bf16.mxu0 0
    %1475 = vmatpush1.bf16.msra.mxu0 0
    %1476 = vmatprep.subr.bf16.mxu0 0
    %1477 = vmatpush1.bf16.msra.mxu0 0
    %1478 = vmatprep.subr.bf16.mxu0 0
    %1479 = vmatpush1.bf16.msra.mxu0 0
    %1480 = vmatprep.subr.bf16.mxu0 0
    %1481 = vmatpush1.bf16.msra.mxu0 %v1463
    %1482 = vmatprep.subr.bf16.mxu0 0
    %1483 = vmatpush1.bf16.msra.mxu0 %v1462
    %1484 = vmatprep.subr.bf16.mxu0 0
    %1485 = vmatpush1.bf16.msra.mxu0 %v1461
    %1486 = vmatprep.subr.bf16.mxu0 0
    %1487 = vmatpush1.bf16.msra.mxu0 %v1460
    %1488 = vmatprep.subr.bf16.mxu0 0
    %1489 = vmatpush2.bf16.msra.mxu0 0
    %1490 = vmatprep.subr.bf16.mxu0 0
    %1491 = vmatpush2.bf16.msra.mxu0 0
    %1492 = vmatprep.subr.bf16.mxu0 0
    %1493 = vmatpush2.bf16.msra.mxu0 0
    %1494 = vmatprep.subr.bf16.mxu0 0
    %1495 = vmatpush2.bf16.msra.mxu0 0
    %1496 = vmatprep.subr.bf16.mxu0 0
    %1497 = vmatpush2.bf16.msra.mxu0 0
    %1498 = vmatprep.subr.bf16.mxu0 0
    %1499 = vmatpush2.bf16.msra.mxu0 0
    %1500 = vmatprep.subr.bf16.mxu0 0
    %1501 = vmatpush2.bf16.msra.mxu0 0
    %1502 = vmatprep.subr.bf16.mxu0 0
    %1503 = vmatpush2.bf16.msra.mxu0 0
    %1504 = vmatprep.mubr.bf16.mxu0 0
    %1505 = vmatmul.mubr.bf16.gmra.mxu0 %v1470
    %v1506 = vpop.f32.mrf.mxu0
    %v1507 = vadd.f32 %v1442, %v1506
    %v1508 = vpop.f32.mrf.mxu0
    %v1509 = vpop.f32.mrf.mxu0
    %v1510 = vadd.f32 %v1442, %v1509
    %v1511 = vpop.f32.mrf.mxu0
    %1512 = vdwg.mxu0
    %v1513 = vadd.f32 %v1356, %v1507
    %v1514 = vadd.f32 %v1357, %v1510
    %v1515 = vld [vmem:[#allocation14] sm:$0x1]
    %v1516 = vld [vmem:[#allocation16] sm:$0x1]
    %v1517 = vsel %vm285, %v1513, 0.0
    %1518 = vadd.xlane.f32.xlu0 %v1517
    %v1519 = vpop.xlane.xlu0 %1518
    %v1520 = vsel %vm285, %v1514, 0.0
    %1521 = vadd.xlane.f32.xlu0 %v1520
    %v1522 = vpop.xlane.xlu0 %1521
    %v1523 = vmul.f32 %v1519, %v1321
    %v1524 = vmul.f32 %v1522, %v1321
    %v1525 = vsub.f32 %v1513, %v1523
    %v1526 = vsub.f32 %v1514, %v1524
    %v1527 = vmul.f32 %v1525, %v1525
    %v1528 = vmul.f32 %v1526, %v1526
    %v1529 = vsel %vm285, %v1527, 0.0
    %1530 = vadd.xlane.f32.xlu0 %v1529
    %v1531 = vpop.xlane.xlu0 %1530
    %v1532 = vsel %vm285, %v1528, 0.0
    %1533 = vadd.xlane.f32.xlu0 %v1532
    %v1534 = vpop.xlane.xlu0 %1533
    %v1535 = vmul.f32 %v1531, %v1321
    %v1536 = vmul.f32 %v1534, %v1321
    %v1537 = vadd.f32 %v1535, 1e-12
    %v1538 = vadd.f32 %v1536, 1e-12
    %v1539 = vrsqrt.pop %v1537
    %v1540 = vrsqrt.pop %v1538
    %v1541 = vmul.f32 %v1525, %v1539
    %v1542 = vmul.f32 %v1526, %v1540
    %v1544 = vlaneseq
    %v1545 = vshrl.u32 %v1544, 7
    %v1546 = vsub.s32 0, %v1545
    %v1547 = vrot.slane %v1515, %v1546
    %v1549 = vmul.f32 %v1541, %v1547
    %v1550 = vmul.f32 %v1542, %v1547
    %v1552 = vlaneseq
    %v1553 = vshrl.u32 %v1552, 7
    %v1554 = vsub.s32 0, %v1553
    %v1555 = vrot.slane %v1516, %v1554
    %v1557 = vadd.f32 %v1549, %v1555
    %v1558 = vadd.f32 %v1550, %v1555
    %s1559 = scalar_lea.vmem [#allocation2], 16
    %v1560 = vld [vmem:[%s1559] sm:$0xf]
    %v1561 = vld [vmem:[%s1559 + $0x4] sm:$0xf]
    %v1562 = vld [vmem:[%s1559 + $0x8] sm:$0xf]
    %v1563 = vld [vmem:[%s1559 + $0xc] sm:$0xf]
    %s1564 = scalar_lea.vmem %s4, 1
    %v1565 = vld [vmem:[%s1564] sm:$0x1]
    %v1566 = vpack.c.bf16 %v1558, %v1557
    %v1568 = vlaneseq
    %v1569 = vshrl.u32 %v1568, 7
    %v1570 = vsub.s32 0, %v1569
    %v1571 = vrot.slane %v1565, %v1570
    %v1577 = vunpack.c.l.b16 %v1560
    %v1578 = vunpack.c.l.b16 %v1561
    %v1579 = vunpack.c.l.b16 %v1562
    %v1580 = vunpack.c.l.b16 %v1563
    %v1581 = vpack.c.b16 %v1578, %v1577
    %v1582 = vpack.c.b16 %v1580, %v1579
    %v1586 = vsel %vm285, %v1566, 0
    %1588 = vmatprep.subr.bf16.mxu0 0
    %1589 = vmatpush1.bf16.msra.mxu0 0
    %1590 = vmatprep.subr.bf16.mxu0 0
    %1591 = vmatpush1.bf16.msra.mxu0 0
    %1592 = vmatprep.subr.bf16.mxu0 0
    %1593 = vmatpush1.bf16.msra.mxu0 0
    %1594 = vmatprep.subr.bf16.mxu0 0
    %1595 = vmatpush1.bf16.msra.mxu0 0
    %1596 = vmatprep.subr.bf16.mxu0 0
    %1597 = vmatpush1.bf16.msra.mxu0 0
    %1598 = vmatprep.subr.bf16.mxu0 0
    %1599 = vmatpush1.bf16.msra.mxu0 0
    %1600 = vmatprep.subr.bf16.mxu0 0
    %1601 = vmatpush1.bf16.msra.mxu0 %v1582
    %1602 = vmatprep.subr.bf16.mxu0 0
    %1603 = vmatpush1.bf16.msra.mxu0 %v1581
    %1604 = vmatprep.subr.bf16.mxu0 0
    %1605 = vmatpush2.bf16.msra.mxu0 0
    %1606 = vmatprep.subr.bf16.mxu0 0
    %1607 = vmatpush2.bf16.msra.mxu0 0
    %1608 = vmatprep.subr.bf16.mxu0 0
    %1609 = vmatpush2.bf16.msra.mxu0 0
    %1610 = vmatprep.subr.bf16.mxu0 0
    %1611 = vmatpush2.bf16.msra.mxu0 0
    %1612 = vmatprep.subr.bf16.mxu0 0
    %1613 = vmatpush2.bf16.msra.mxu0 0
    %1614 = vmatprep.subr.bf16.mxu0 0
    %1615 = vmatpush2.bf16.msra.mxu0 0
    %1616 = vmatprep.subr.bf16.mxu0 0
    %1617 = vmatpush2.bf16.msra.mxu0 0
    %1618 = vmatprep.subr.bf16.mxu0 0
    %1619 = vmatpush2.bf16.msra.mxu0 0
    %1620 = vmatprep.mubr.bf16.mxu0 0
    %1621 = vmatmul.mubr.bf16.gmra.mxu0 %v1586
    %v1622 = vpop.f32.mrf.mxu0
    %v1623 = vadd.f32 %v1571, %v1622
    %v1624 = vpop.f32.mrf.mxu0
    %v1625 = vpop.f32.mrf.mxu0
    %v1626 = vadd.f32 %v1571, %v1625
    %v1627 = vpop.f32.mrf.mxu0
    %1628 = vdwg.mxu0
    %v1629 = vpack.c.bf16 %v1623, %v1623
    %v1630 = vpack.c.bf16 %v1626, %v1626
    %1632 = vrot.lane.b32.xlu0 %v1629, 96
    %v1633 = vpop.permute.xlu0 %1632
    %v1635 = vsel %vm335, %v1629, 0
    %v1638 = vsel %vm335, %v1633, 0
    %1640 = vmatprep.subr.bf16.mxu0 0
    %1641 = vmatpush1.bf16.xpose.msra.mxu0 0
    %1642 = vmatprep.subr.bf16.mxu0 0
    %1643 = vmatpush1.bf16.xpose.msra.mxu0 0
    %1644 = vmatprep.subr.bf16.mxu0 0
    %1645 = vmatpush1.bf16.xpose.msra.mxu0 0
    %1646 = vmatprep.subr.bf16.mxu0 0
    %1647 = vmatpush1.bf16.xpose.msra.mxu0 0
    %1648 = vmatprep.subr.bf16.mxu0 0
    %1649 = vmatpush1.bf16.xpose.msra.mxu0 0
    %1650 = vmatprep.subr.bf16.mxu0 0
    %1651 = vmatpush1.bf16.xpose.msra.mxu0 0
    %1652 = vmatprep.subr.bf16.mxu0 0
    %1653 = vmatpush1.bf16.xpose.msra.mxu0 0
    %1654 = vmatprep.subr.bf16.mxu0 0
    %1655 = vmatpush1.bf16.xpose.msra.mxu0 %v1638
    %1656 = vmatprep.subr.bf16.mxu0 0
    %1657 = vmatpush2.bf16.xpose.msra.mxu0 0
    %1658 = vmatprep.subr.bf16.mxu0 0
    %1659 = vmatpush2.bf16.xpose.msra.mxu0 0
    %1660 = vmatprep.subr.bf16.mxu0 0
    %1661 = vmatpush2.bf16.xpose.msra.mxu0 0
    %1662 = vmatprep.subr.bf16.mxu0 0
    %1663 = vmatpush2.bf16.xpose.msra.mxu0 0
    %1664 = vmatprep.subr.bf16.mxu0 0
    %1665 = vmatpush2.bf16.xpose.msra.mxu0 0
    %1666 = vmatprep.subr.bf16.mxu0 0
    %1667 = vmatpush2.bf16.xpose.msra.mxu0 0
    %1668 = vmatprep.subr.bf16.mxu0 0
    %1669 = vmatpush2.bf16.xpose.msra.mxu0 0
    %1670 = vmatprep.subr.bf16.mxu0 0
    %1671 = vmatpush2.bf16.xpose.msra.mxu0 0
    %1672 = vmatprep.mubr.bf16.mxu0 0
    %1673 = vmatmul.mubr.bf16.gmra.mxu0 %v1635
    %v1674 = vpop.f32.mrf.mxu0
    %v1675 = vadd.f32 0.0, %v1674
    %v1676 = vpop.f32.mrf.mxu0
    %v1677 = vpop.f32.mrf.mxu0
    %v1678 = vpop.f32.mrf.mxu0
    %1679 = vdwg.mxu0
    %1681 = vrot.lane.b32.xlu0 %v1630, 96
    %v1682 = vpop.permute.xlu0 %1681
    %v1684 = vsel %vm335, %v1630, 0
    %v1687 = vsel %vm335, %v1682, 0
    %1689 = vmatprep.subr.bf16.mxu0 0
    %1690 = vmatpush1.bf16.xpose.msra.mxu0 0
    %1691 = vmatprep.subr.bf16.mxu0 0
    %1692 = vmatpush1.bf16.xpose.msra.mxu0 0
    %1693 = vmatprep.subr.bf16.mxu0 0
    %1694 = vmatpush1.bf16.xpose.msra.mxu0 0
    %1695 = vmatprep.subr.bf16.mxu0 0
    %1696 = vmatpush1.bf16.xpose.msra.mxu0 0
    %1697 = vmatprep.subr.bf16.mxu0 0
    %1698 = vmatpush1.bf16.xpose.msra.mxu0 0
    %1699 = vmatprep.subr.bf16.mxu0 0
    %1700 = vmatpush1.bf16.xpose.msra.mxu0 0
    %1701 = vmatprep.subr.bf16.mxu0 0
    %1702 = vmatpush1.bf16.xpose.msra.mxu0 0
    %1703 = vmatprep.subr.bf16.mxu0 0
    %1704 = vmatpush1.bf16.xpose.msra.mxu0 %v1687
    %1705 = vmatprep.subr.bf16.mxu0 0
    %1706 = vmatpush2.bf16.xpose.msra.mxu0 0
    %1707 = vmatprep.subr.bf16.mxu0 0
    %1708 = vmatpush2.bf16.xpose.msra.mxu0 0
    %1709 = vmatprep.subr.bf16.mxu0 0
    %1710 = vmatpush2.bf16.xpose.msra.mxu0 0
    %1711 = vmatprep.subr.bf16.mxu0 0
    %1712 = vmatpush2.bf16.xpose.msra.mxu0 0
    %1713 = vmatprep.subr.bf16.mxu0 0
    %1714 = vmatpush2.bf16.xpose.msra.mxu0 0
    %1715 = vmatprep.subr.bf16.mxu0 0
    %1716 = vmatpush2.bf16.xpose.msra.mxu0 0
    %1717 = vmatprep.subr.bf16.mxu0 0
    %1718 = vmatpush2.bf16.xpose.msra.mxu0 0
    %1719 = vmatprep.subr.bf16.mxu0 0
    %1720 = vmatpush2.bf16.xpose.msra.mxu0 0
    %1721 = vmatprep.mubr.bf16.mxu0 0
    %1722 = vmatmul.mubr.bf16.gmra.mxu0 %v1684
    %v1723 = vpop.f32.mrf.mxu0
    %v1724 = vadd.f32 0.0, %v1723
    %v1725 = vpop.f32.mrf.mxu0
    %v1726 = vpop.f32.mrf.mxu0
    %v1727 = vpop.f32.mrf.mxu0
    %1728 = vdwg.mxu0
    %v1729 = vsel %vm335, %v1675, -inf
    %1730 = vmax.xlane.f32.xlu0 %v1729
    %v1731 = vpop.xlane.xlu0 %1730
    %v1732 = vsel %vm335, %v1724, -inf
    %1733 = vmax.xlane.f32.xlu0 %v1732
    %v1734 = vpop.xlane.xlu0 %1733
    %v1735 = vsub.f32 %v1675, %v1731
    %v1736 = vsub.f32 %v1724, %v1734
    %v1737 = vmul.f32 %v1735, 1.442695
    %v1738 = vpow.pop %v1737
    %v1739 = vmul.f32 %v1736, 1.442695
    %v1740 = vpow.pop %v1739
    %v1741 = vsel %vm335, %v1738, 0.0
    %1742 = vadd.xlane.f32.xlu0 %v1741
    %v1743 = vpop.xlane.xlu0 %1742
    %v1744 = vsel %vm335, %v1740, 0.0
    %1745 = vadd.xlane.f32.xlu0 %v1744
    %v1746 = vpop.xlane.xlu0 %1745
    %v1747 = vrcp.pop %v1743
    %v1748 = vmul.f32 %v1738, %v1747
    %v1749 = vrcp.pop %v1746
    %v1750 = vmul.f32 %v1740, %v1749
    %v1751 = vpack.c.bf16 %v1748, %v1748
    %v1752 = vpack.c.bf16 %v1750, %v1750
    %1753 = vrot.lane.b32.xlu0 %v1629, 64
    %v1754 = vpop.permute.xlu0 %1753
    %v1756 = vsel %vm335, %v1751, 0
    %v1759 = vsel %vm460, %v1754, 0
    %1761 = vmatprep.subr.bf16.mxu0 0
    %1762 = vmatpush1.bf16.msra.mxu0 0
    %1763 = vmatprep.subr.bf16.mxu0 0
    %1764 = vmatpush1.bf16.msra.mxu0 0
    %1765 = vmatprep.subr.bf16.mxu0 0
    %1766 = vmatpush1.bf16.msra.mxu0 0
    %1767 = vmatprep.subr.bf16.mxu0 0
    %1768 = vmatpush1.bf16.msra.mxu0 0
    %1769 = vmatprep.subr.bf16.mxu0 0
    %1770 = vmatpush1.bf16.msra.mxu0 0
    %1771 = vmatprep.subr.bf16.mxu0 0
    %1772 = vmatpush1.bf16.msra.mxu0 0
    %1773 = vmatprep.subr.bf16.mxu0 0
    %1774 = vmatpush1.bf16.msra.mxu0 0
    %1775 = vmatprep.subr.bf16.mxu0 0
    %1776 = vmatpush1.bf16.msra.mxu0 %v1759
    %1777 = vmatprep.subr.bf16.mxu0 0
    %1778 = vmatpush2.bf16.msra.mxu0 0
    %1779 = vmatprep.subr.bf16.mxu0 0
    %1780 = vmatpush2.bf16.msra.mxu0 0
    %1781 = vmatprep.subr.bf16.mxu0 0
    %1782 = vmatpush2.bf16.msra.mxu0 0
    %1783 = vmatprep.subr.bf16.mxu0 0
    %1784 = vmatpush2.bf16.msra.mxu0 0
    %1785 = vmatprep.subr.bf16.mxu0 0
    %1786 = vmatpush2.bf16.msra.mxu0 0
    %1787 = vmatprep.subr.bf16.mxu0 0
    %1788 = vmatpush2.bf16.msra.mxu0 0
    %1789 = vmatprep.subr.bf16.mxu0 0
    %1790 = vmatpush2.bf16.msra.mxu0 0
    %1791 = vmatprep.subr.bf16.mxu0 0
    %1792 = vmatpush2.bf16.msra.mxu0 0
    %1793 = vmatprep.mubr.bf16.mxu0 0
    %1794 = vmatmul.mubr.bf16.gmra.mxu0 %v1756
    %v1795 = vpop.f32.mrf.mxu0
    %v1796 = vadd.f32 0.0, %v1795
    %v1797 = vpop.f32.mrf.mxu0
    %v1798 = vpop.f32.mrf.mxu0
    %v1799 = vpop.f32.mrf.mxu0
    %1800 = vdwg.mxu0
    %1801 = vrot.lane.b32.xlu0 %v1630, 64
    %v1802 = vpop.permute.xlu0 %1801
    %v1804 = vsel %vm335, %v1752, 0
    %v1807 = vsel %vm460, %v1802, 0
    %1809 = vmatprep.subr.bf16.mxu0 0
    %1810 = vmatpush1.bf16.msra.mxu0 0
    %1811 = vmatprep.subr.bf16.mxu0 0
    %1812 = vmatpush1.bf16.msra.mxu0 0
    %1813 = vmatprep.subr.bf16.mxu0 0
    %1814 = vmatpush1.bf16.msra.mxu0 0
    %1815 = vmatprep.subr.bf16.mxu0 0
    %1816 = vmatpush1.bf16.msra.mxu0 0
    %1817 = vmatprep.subr.bf16.mxu0 0
    %1818 = vmatpush1.bf16.msra.mxu0 0
    %1819 = vmatprep.subr.bf16.mxu0 0
    %1820 = vmatpush1.bf16.msra.mxu0 0
    %1821 = vmatprep.subr.bf16.mxu0 0
    %1822 = vmatpush1.bf16.msra.mxu0 0
    %1823 = vmatprep.subr.bf16.mxu0 0
    %1824 = vmatpush1.bf16.msra.mxu0 %v1807
    %1825 = vmatprep.subr.bf16.mxu0 0
    %1826 = vmatpush2.bf16.msra.mxu0 0
    %1827 = vmatprep.subr.bf16.mxu0 0
    %1828 = vmatpush2.bf16.msra.mxu0 0
    %1829 = vmatprep.subr.bf16.mxu0 0
    %1830 = vmatpush2.bf16.msra.mxu0 0
    %1831 = vmatprep.subr.bf16.mxu0 0
    %1832 = vmatpush2.bf16.msra.mxu0 0
    %1833 = vmatprep.subr.bf16.mxu0 0
    %1834 = vmatpush2.bf16.msra.mxu0 0
    %1835 = vmatprep.subr.bf16.mxu0 0
    %1836 = vmatpush2.bf16.msra.mxu0 0
    %1837 = vmatprep.subr.bf16.mxu0 0
    %1838 = vmatpush2.bf16.msra.mxu0 0
    %1839 = vmatprep.subr.bf16.mxu0 0
    %1840 = vmatpush2.bf16.msra.mxu0 0
    %1841 = vmatprep.mubr.bf16.mxu0 0
    %1842 = vmatmul.mubr.bf16.gmra.mxu0 %v1804
    %v1843 = vpop.f32.mrf.mxu0
    %v1844 = vadd.f32 0.0, %v1843
    %v1845 = vpop.f32.mrf.mxu0
    %v1846 = vpop.f32.mrf.mxu0
    %v1847 = vpop.f32.mrf.mxu0
    %1848 = vdwg.mxu0
    %1849 = vrot.lane.b32.xlu0 %v1629, 120
    %v1850 = vpop.permute.xlu0 %1849
    %1851 = vrot.lane.b32.xlu0 %v1629, 88
    %v1852 = vpop.permute.xlu0 %1851
    %v1854 = vsel %vm335, %v1850, 0
    %v1857 = vsel %vm335, %v1852, 0
    %1859 = vmatprep.subr.bf16.mxu0 0
    %1860 = vmatpush1.bf16.xpose.msra.mxu0 0
    %1861 = vmatprep.subr.bf16.mxu0 0
    %1862 = vmatpush1.bf16.xpose.msra.mxu0 0
    %1863 = vmatprep.subr.bf16.mxu0 0
    %1864 = vmatpush1.bf16.xpose.msra.mxu0 0
    %1865 = vmatprep.subr.bf16.mxu0 0
    %1866 = vmatpush1.bf16.xpose.msra.mxu0 0
    %1867 = vmatprep.subr.bf16.mxu0 0
    %1868 = vmatpush1.bf16.xpose.msra.mxu0 0
    %1869 = vmatprep.subr.bf16.mxu0 0
    %1870 = vmatpush1.bf16.xpose.msra.mxu0 0
    %1871 = vmatprep.subr.bf16.mxu0 0
    %1872 = vmatpush1.bf16.xpose.msra.mxu0 0
    %1873 = vmatprep.subr.bf16.mxu0 0
    %1874 = vmatpush1.bf16.xpose.msra.mxu0 %v1857
    %1875 = vmatprep.subr.bf16.mxu0 0
    %1876 = vmatpush2.bf16.xpose.msra.mxu0 0
    %1877 = vmatprep.subr.bf16.mxu0 0
    %1878 = vmatpush2.bf16.xpose.msra.mxu0 0
    %1879 = vmatprep.subr.bf16.mxu0 0
    %1880 = vmatpush2.bf16.xpose.msra.mxu0 0
    %1881 = vmatprep.subr.bf16.mxu0 0
    %1882 = vmatpush2.bf16.xpose.msra.mxu0 0
    %1883 = vmatprep.subr.bf16.mxu0 0
    %1884 = vmatpush2.bf16.xpose.msra.mxu0 0
    %1885 = vmatprep.subr.bf16.mxu0 0
    %1886 = vmatpush2.bf16.xpose.msra.mxu0 0
    %1887 = vmatprep.subr.bf16.mxu0 0
    %1888 = vmatpush2.bf16.xpose.msra.mxu0 0
    %1889 = vmatprep.subr.bf16.mxu0 0
    %1890 = vmatpush2.bf16.xpose.msra.mxu0 0
    %1891 = vmatprep.mubr.bf16.mxu0 0
    %1892 = vmatmul.mubr.bf16.gmra.mxu0 %v1854
    %v1893 = vpop.f32.mrf.mxu0
    %v1894 = vadd.f32 0.0, %v1893
    %v1895 = vpop.f32.mrf.mxu0
    %v1896 = vpop.f32.mrf.mxu0
    %v1897 = vpop.f32.mrf.mxu0
    %1898 = vdwg.mxu0
    %1899 = vrot.lane.b32.xlu0 %v1630, 120
    %v1900 = vpop.permute.xlu0 %1899
    %1901 = vrot.lane.b32.xlu0 %v1630, 88
    %v1902 = vpop.permute.xlu0 %1901
    %v1904 = vsel %vm335, %v1900, 0
    %v1907 = vsel %vm335, %v1902, 0
    %1909 = vmatprep.subr.bf16.mxu0 0
    %1910 = vmatpush1.bf16.xpose.msra.mxu0 0
    %1911 = vmatprep.subr.bf16.mxu0 0
    %1912 = vmatpush1.bf16.xpose.msra.mxu0 0
    %1913 = vmatprep.subr.bf16.mxu0 0
    %1914 = vmatpush1.bf16.xpose.msra.mxu0 0
    %1915 = vmatprep.subr.bf16.mxu0 0
    %1916 = vmatpush1.bf16.xpose.msra.mxu0 0
    %1917 = vmatprep.subr.bf16.mxu0 0
    %1918 = vmatpush1.bf16.xpose.msra.mxu0 0
    %1919 = vmatprep.subr.bf16.mxu0 0
    %1920 = vmatpush1.bf16.xpose.msra.mxu0 0
    %1921 = vmatprep.subr.bf16.mxu0 0
    %1922 = vmatpush1.bf16.xpose.msra.mxu0 0
    %1923 = vmatprep.subr.bf16.mxu0 0
    %1924 = vmatpush1.bf16.xpose.msra.mxu0 %v1907
    %1925 = vmatprep.subr.bf16.mxu0 0
    %1926 = vmatpush2.bf16.xpose.msra.mxu0 0
    %1927 = vmatprep.subr.bf16.mxu0 0
    %1928 = vmatpush2.bf16.xpose.msra.mxu0 0
    %1929 = vmatprep.subr.bf16.mxu0 0
    %1930 = vmatpush2.bf16.xpose.msra.mxu0 0
    %1931 = vmatprep.subr.bf16.mxu0 0
    %1932 = vmatpush2.bf16.xpose.msra.mxu0 0
    %1933 = vmatprep.subr.bf16.mxu0 0
    %1934 = vmatpush2.bf16.xpose.msra.mxu0 0
    %1935 = vmatprep.subr.bf16.mxu0 0
    %1936 = vmatpush2.bf16.xpose.msra.mxu0 0
    %1937 = vmatprep.subr.bf16.mxu0 0
    %1938 = vmatpush2.bf16.xpose.msra.mxu0 0
    %1939 = vmatprep.subr.bf16.mxu0 0
    %1940 = vmatpush2.bf16.xpose.msra.mxu0 0
    %1941 = vmatprep.mubr.bf16.mxu0 0
    %1942 = vmatmul.mubr.bf16.gmra.mxu0 %v1904
    %v1943 = vpop.f32.mrf.mxu0
    %v1944 = vadd.f32 0.0, %v1943
    %v1945 = vpop.f32.mrf.mxu0
    %v1946 = vpop.f32.mrf.mxu0
    %v1947 = vpop.f32.mrf.mxu0
    %1948 = vdwg.mxu0
    %v1949 = vsel %vm335, %v1894, -inf
    %1950 = vmax.xlane.f32.xlu0 %v1949
    %v1951 = vpop.xlane.xlu0 %1950
    %v1952 = vsel %vm335, %v1944, -inf
    %1953 = vmax.xlane.f32.xlu0 %v1952
    %v1954 = vpop.xlane.xlu0 %1953
    %v1955 = vsub.f32 %v1894, %v1951
    %v1956 = vsub.f32 %v1944, %v1954
    %v1957 = vmul.f32 %v1955, 1.442695
    %v1958 = vpow.pop %v1957
    %v1959 = vmul.f32 %v1956, 1.442695
    %v1960 = vpow.pop %v1959
    %v1961 = vsel %vm335, %v1958, 0.0
    %1962 = vadd.xlane.f32.xlu0 %v1961
    %v1963 = vpop.xlane.xlu0 %1962
    %v1964 = vsel %vm335, %v1960, 0.0
    %1965 = vadd.xlane.f32.xlu0 %v1964
    %v1966 = vpop.xlane.xlu0 %1965
    %v1967 = vrcp.pop %v1963
    %v1968 = vmul.f32 %v1958, %v1967
    %v1969 = vrcp.pop %v1966
    %v1970 = vmul.f32 %v1960, %v1969
    %v1971 = vpack.c.bf16 %v1968, %v1968
    %v1972 = vpack.c.bf16 %v1970, %v1970
    %1973 = vrot.lane.b32.xlu0 %v1629, 56
    %v1974 = vpop.permute.xlu0 %1973
    %v1976 = vsel %vm335, %v1971, 0
    %v1979 = vsel %vm460, %v1974, 0
    %1981 = vmatprep.subr.bf16.mxu0 0
    %1982 = vmatpush1.bf16.msra.mxu0 0
    %1983 = vmatprep.subr.bf16.mxu0 0
    %1984 = vmatpush1.bf16.msra.mxu0 0
    %1985 = vmatprep.subr.bf16.mxu0 0
    %1986 = vmatpush1.bf16.msra.mxu0 0
    %1987 = vmatprep.subr.bf16.mxu0 0
    %1988 = vmatpush1.bf16.msra.mxu0 0
    %1989 = vmatprep.subr.bf16.mxu0 0
    %1990 = vmatpush1.bf16.msra.mxu0 0
    %1991 = vmatprep.subr.bf16.mxu0 0
    %1992 = vmatpush1.bf16.msra.mxu0 0
    %1993 = vmatprep.subr.bf16.mxu0 0
    %1994 = vmatpush1.bf16.msra.mxu0 0
    %1995 = vmatprep.subr.bf16.mxu0 0
    %1996 = vmatpush1.bf16.msra.mxu0 %v1979
    %1997 = vmatprep.subr.bf16.mxu0 0
    %1998 = vmatpush2.bf16.msra.mxu0 0
    %1999 = vmatprep.subr.bf16.mxu0 0
    %2000 = vmatpush2.bf16.msra.mxu0 0
    %2001 = vmatprep.subr.bf16.mxu0 0
    %2002 = vmatpush2.bf16.msra.mxu0 0
    %2003 = vmatprep.subr.bf16.mxu0 0
    %2004 = vmatpush2.bf16.msra.mxu0 0
    %2005 = vmatprep.subr.bf16.mxu0 0
    %2006 = vmatpush2.bf16.msra.mxu0 0
    %2007 = vmatprep.subr.bf16.mxu0 0
    %2008 = vmatpush2.bf16.msra.mxu0 0
    %2009 = vmatprep.subr.bf16.mxu0 0
    %2010 = vmatpush2.bf16.msra.mxu0 0
    %2011 = vmatprep.subr.bf16.mxu0 0
    %2012 = vmatpush2.bf16.msra.mxu0 0
    %2013 = vmatprep.mubr.bf16.mxu0 0
    %2014 = vmatmul.mubr.bf16.gmra.mxu0 %v1976
    %v2015 = vpop.f32.mrf.mxu0
    %v2016 = vadd.f32 0.0, %v2015
    %v2017 = vpop.f32.mrf.mxu0
    %v2018 = vpop.f32.mrf.mxu0
    %v2019 = vpop.f32.mrf.mxu0
    %2020 = vdwg.mxu0
    %2021 = vrot.lane.b32.xlu0 %v1630, 56
    %v2022 = vpop.permute.xlu0 %2021
    %v2024 = vsel %vm335, %v1972, 0
    %v2027 = vsel %vm460, %v2022, 0
    %2029 = vmatprep.subr.bf16.mxu0 0
    %2030 = vmatpush1.bf16.msra.mxu0 0
    %2031 = vmatprep.subr.bf16.mxu0 0
    %2032 = vmatpush1.bf16.msra.mxu0 0
    %2033 = vmatprep.subr.bf16.mxu0 0
    %2034 = vmatpush1.bf16.msra.mxu0 0
    %2035 = vmatprep.subr.bf16.mxu0 0
    %2036 = vmatpush1.bf16.msra.mxu0 0
    %2037 = vmatprep.subr.bf16.mxu0 0
    %2038 = vmatpush1.bf16.msra.mxu0 0
    %2039 = vmatprep.subr.bf16.mxu0 0
    %2040 = vmatpush1.bf16.msra.mxu0 0
    %2041 = vmatprep.subr.bf16.mxu0 0
    %2042 = vmatpush1.bf16.msra.mxu0 0
    %2043 = vmatprep.subr.bf16.mxu0 0
    %2044 = vmatpush1.bf16.msra.mxu0 %v2027
    %2045 = vmatprep.subr.bf16.mxu0 0
    %2046 = vmatpush2.bf16.msra.mxu0 0
    %2047 = vmatprep.subr.bf16.mxu0 0
    %2048 = vmatpush2.bf16.msra.mxu0 0
    %2049 = vmatprep.subr.bf16.mxu0 0
    %2050 = vmatpush2.bf16.msra.mxu0 0
    %2051 = vmatprep.subr.bf16.mxu0 0
    %2052 = vmatpush2.bf16.msra.mxu0 0
    %2053 = vmatprep.subr.bf16.mxu0 0
    %2054 = vmatpush2.bf16.msra.mxu0 0
    %2055 = vmatprep.subr.bf16.mxu0 0
    %2056 = vmatpush2.bf16.msra.mxu0 0
    %2057 = vmatprep.subr.bf16.mxu0 0
    %2058 = vmatpush2.bf16.msra.mxu0 0
    %2059 = vmatprep.subr.bf16.mxu0 0
    %2060 = vmatpush2.bf16.msra.mxu0 0
    %2061 = vmatprep.mubr.bf16.mxu0 0
    %2062 = vmatmul.mubr.bf16.gmra.mxu0 %v2024
    %v2063 = vpop.f32.mrf.mxu0
    %v2064 = vadd.f32 0.0, %v2063
    %v2065 = vpop.f32.mrf.mxu0
    %v2066 = vpop.f32.mrf.mxu0
    %v2067 = vpop.f32.mrf.mxu0
    %2068 = vdwg.mxu0
    %2069 = vrot.lane.b32.xlu0 %v1629, 112
    %v2070 = vpop.permute.xlu0 %2069
    %2071 = vrot.lane.b32.xlu0 %v1629, 80
    %v2072 = vpop.permute.xlu0 %2071
    %v2074 = vsel %vm335, %v2070, 0
    %v2077 = vsel %vm335, %v2072, 0
    %2079 = vmatprep.subr.bf16.mxu0 0
    %2080 = vmatpush1.bf16.xpose.msra.mxu0 0
    %2081 = vmatprep.subr.bf16.mxu0 0
    %2082 = vmatpush1.bf16.xpose.msra.mxu0 0
    %2083 = vmatprep.subr.bf16.mxu0 0
    %2084 = vmatpush1.bf16.xpose.msra.mxu0 0
    %2085 = vmatprep.subr.bf16.mxu0 0
    %2086 = vmatpush1.bf16.xpose.msra.mxu0 0
    %2087 = vmatprep.subr.bf16.mxu0 0
    %2088 = vmatpush1.bf16.xpose.msra.mxu0 0
    %2089 = vmatprep.subr.bf16.mxu0 0
    %2090 = vmatpush1.bf16.xpose.msra.mxu0 0
    %2091 = vmatprep.subr.bf16.mxu0 0
    %2092 = vmatpush1.bf16.xpose.msra.mxu0 0
    %2093 = vmatprep.subr.bf16.mxu0 0
    %2094 = vmatpush1.bf16.xpose.msra.mxu0 %v2077
    %2095 = vmatprep.subr.bf16.mxu0 0
    %2096 = vmatpush2.bf16.xpose.msra.mxu0 0
    %2097 = vmatprep.subr.bf16.mxu0 0
    %2098 = vmatpush2.bf16.xpose.msra.mxu0 0
    %2099 = vmatprep.subr.bf16.mxu0 0
    %2100 = vmatpush2.bf16.xpose.msra.mxu0 0
    %2101 = vmatprep.subr.bf16.mxu0 0
    %2102 = vmatpush2.bf16.xpose.msra.mxu0 0
    %2103 = vmatprep.subr.bf16.mxu0 0
    %2104 = vmatpush2.bf16.xpose.msra.mxu0 0
    %2105 = vmatprep.subr.bf16.mxu0 0
    %2106 = vmatpush2.bf16.xpose.msra.mxu0 0
    %2107 = vmatprep.subr.bf16.mxu0 0
    %2108 = vmatpush2.bf16.xpose.msra.mxu0 0
    %2109 = vmatprep.subr.bf16.mxu0 0
    %2110 = vmatpush2.bf16.xpose.msra.mxu0 0
    %2111 = vmatprep.mubr.bf16.mxu0 0
    %2112 = vmatmul.mubr.bf16.gmra.mxu0 %v2074
    %v2113 = vpop.f32.mrf.mxu0
    %v2114 = vadd.f32 0.0, %v2113
    %v2115 = vpop.f32.mrf.mxu0
    %v2116 = vpop.f32.mrf.mxu0
    %v2117 = vpop.f32.mrf.mxu0
    %2118 = vdwg.mxu0
    %2119 = vrot.lane.b32.xlu0 %v1630, 112
    %v2120 = vpop.permute.xlu0 %2119
    %2121 = vrot.lane.b32.xlu0 %v1630, 80
    %v2122 = vpop.permute.xlu0 %2121
    %v2124 = vsel %vm335, %v2120, 0
    %v2127 = vsel %vm335, %v2122, 0
    %2129 = vmatprep.subr.bf16.mxu0 0
    %2130 = vmatpush1.bf16.xpose.msra.mxu0 0
    %2131 = vmatprep.subr.bf16.mxu0 0
    %2132 = vmatpush1.bf16.xpose.msra.mxu0 0
    %2133 = vmatprep.subr.bf16.mxu0 0
    %2134 = vmatpush1.bf16.xpose.msra.mxu0 0
    %2135 = vmatprep.subr.bf16.mxu0 0
    %2136 = vmatpush1.bf16.xpose.msra.mxu0 0
    %2137 = vmatprep.subr.bf16.mxu0 0
    %2138 = vmatpush1.bf16.xpose.msra.mxu0 0
    %2139 = vmatprep.subr.bf16.mxu0 0
    %2140 = vmatpush1.bf16.xpose.msra.mxu0 0
    %2141 = vmatprep.subr.bf16.mxu0 0
    %2142 = vmatpush1.bf16.xpose.msra.mxu0 0
    %2143 = vmatprep.subr.bf16.mxu0 0
    %2144 = vmatpush1.bf16.xpose.msra.mxu0 %v2127
    %2145 = vmatprep.subr.bf16.mxu0 0
    %2146 = vmatpush2.bf16.xpose.msra.mxu0 0
    %2147 = vmatprep.subr.bf16.mxu0 0
    %2148 = vmatpush2.bf16.xpose.msra.mxu0 0
    %2149 = vmatprep.subr.bf16.mxu0 0
    %2150 = vmatpush2.bf16.xpose.msra.mxu0 0
    %2151 = vmatprep.subr.bf16.mxu0 0
    %2152 = vmatpush2.bf16.xpose.msra.mxu0 0
    %2153 = vmatprep.subr.bf16.mxu0 0
    %2154 = vmatpush2.bf16.xpose.msra.mxu0 0
    %2155 = vmatprep.subr.bf16.mxu0 0
    %2156 = vmatpush2.bf16.xpose.msra.mxu0 0
    %2157 = vmatprep.subr.bf16.mxu0 0
    %2158 = vmatpush2.bf16.xpose.msra.mxu0 0
    %2159 = vmatprep.subr.bf16.mxu0 0
    %2160 = vmatpush2.bf16.xpose.msra.mxu0 0
    %2161 = vmatprep.mubr.bf16.mxu0 0
    %2162 = vmatmul.mubr.bf16.gmra.mxu0 %v2124
    %v2163 = vpop.f32.mrf.mxu0
    %v2164 = vadd.f32 0.0, %v2163
    %v2165 = vpop.f32.mrf.mxu0
    %v2166 = vpop.f32.mrf.mxu0
    %v2167 = vpop.f32.mrf.mxu0
    %2168 = vdwg.mxu0
    %v2169 = vsel %vm335, %v2114, -inf
    %2170 = vmax.xlane.f32.xlu0 %v2169
    %v2171 = vpop.xlane.xlu0 %2170
    %v2172 = vsel %vm335, %v2164, -inf
    %2173 = vmax.xlane.f32.xlu0 %v2172
    %v2174 = vpop.xlane.xlu0 %2173
    %v2175 = vsub.f32 %v2114, %v2171
    %v2176 = vsub.f32 %v2164, %v2174
    %v2177 = vmul.f32 %v2175, 1.442695
    %v2178 = vpow.pop %v2177
    %v2179 = vmul.f32 %v2176, 1.442695
    %v2180 = vpow.pop %v2179
    %v2181 = vsel %vm335, %v2178, 0.0
    %2182 = vadd.xlane.f32.xlu0 %v2181
    %v2183 = vpop.xlane.xlu0 %2182
    %v2184 = vsel %vm335, %v2180, 0.0
    %2185 = vadd.xlane.f32.xlu0 %v2184
    %v2186 = vpop.xlane.xlu0 %2185
    %v2187 = vrcp.pop %v2183
    %v2188 = vmul.f32 %v2178, %v2187
    %v2189 = vrcp.pop %v2186
    %v2190 = vmul.f32 %v2180, %v2189
    %v2191 = vpack.c.bf16 %v2188, %v2188
    %v2192 = vpack.c.bf16 %v2190, %v2190
    %2193 = vrot.lane.b32.xlu0 %v1629, 48
    %v2194 = vpop.permute.xlu0 %2193
    %v2196 = vsel %vm335, %v2191, 0
    %v2199 = vsel %vm460, %v2194, 0
    %2201 = vmatprep.subr.bf16.mxu0 0
    %2202 = vmatpush1.bf16.msra.mxu0 0
    %2203 = vmatprep.subr.bf16.mxu0 0
    %2204 = vmatpush1.bf16.msra.mxu0 0
    %2205 = vmatprep.subr.bf16.mxu0 0
    %2206 = vmatpush1.bf16.msra.mxu0 0
    %2207 = vmatprep.subr.bf16.mxu0 0
    %2208 = vmatpush1.bf16.msra.mxu0 0
    %2209 = vmatprep.subr.bf16.mxu0 0
    %2210 = vmatpush1.bf16.msra.mxu0 0
    %2211 = vmatprep.subr.bf16.mxu0 0
    %2212 = vmatpush1.bf16.msra.mxu0 0
    %2213 = vmatprep.subr.bf16.mxu0 0
    %2214 = vmatpush1.bf16.msra.mxu0 0
    %2215 = vmatprep.subr.bf16.mxu0 0
    %2216 = vmatpush1.bf16.msra.mxu0 %v2199
    %2217 = vmatprep.subr.bf16.mxu0 0
    %2218 = vmatpush2.bf16.msra.mxu0 0
    %2219 = vmatprep.subr.bf16.mxu0 0
    %2220 = vmatpush2.bf16.msra.mxu0 0
    %2221 = vmatprep.subr.bf16.mxu0 0
    %2222 = vmatpush2.bf16.msra.mxu0 0
    %2223 = vmatprep.subr.bf16.mxu0 0
    %2224 = vmatpush2.bf16.msra.mxu0 0
    %2225 = vmatprep.subr.bf16.mxu0 0
    %2226 = vmatpush2.bf16.msra.mxu0 0
    %2227 = vmatprep.subr.bf16.mxu0 0
    %2228 = vmatpush2.bf16.msra.mxu0 0
    %2229 = vmatprep.subr.bf16.mxu0 0
    %2230 = vmatpush2.bf16.msra.mxu0 0
    %2231 = vmatprep.subr.bf16.mxu0 0
    %2232 = vmatpush2.bf16.msra.mxu0 0
    %2233 = vmatprep.mubr.bf16.mxu0 0
    %2234 = vmatmul.mubr.bf16.gmra.mxu0 %v2196
    %v2235 = vpop.f32.mrf.mxu0
    %v2236 = vadd.f32 0.0, %v2235
    %v2237 = vpop.f32.mrf.mxu0
    %v2238 = vpop.f32.mrf.mxu0
    %v2239 = vpop.f32.mrf.mxu0
    %2240 = vdwg.mxu0
    %2241 = vrot.lane.b32.xlu0 %v1630, 48
    %v2242 = vpop.permute.xlu0 %2241
    %v2244 = vsel %vm335, %v2192, 0
    %v2247 = vsel %vm460, %v2242, 0
    %2249 = vmatprep.subr.bf16.mxu0 0
    %2250 = vmatpush1.bf16.msra.mxu0 0
    %2251 = vmatprep.subr.bf16.mxu0 0
    %2252 = vmatpush1.bf16.msra.mxu0 0
    %2253 = vmatprep.subr.bf16.mxu0 0
    %2254 = vmatpush1.bf16.msra.mxu0 0
    %2255 = vmatprep.subr.bf16.mxu0 0
    %2256 = vmatpush1.bf16.msra.mxu0 0
    %2257 = vmatprep.subr.bf16.mxu0 0
    %2258 = vmatpush1.bf16.msra.mxu0 0
    %2259 = vmatprep.subr.bf16.mxu0 0
    %2260 = vmatpush1.bf16.msra.mxu0 0
    %2261 = vmatprep.subr.bf16.mxu0 0
    %2262 = vmatpush1.bf16.msra.mxu0 0
    %2263 = vmatprep.subr.bf16.mxu0 0
    %2264 = vmatpush1.bf16.msra.mxu0 %v2247
    %2265 = vmatprep.subr.bf16.mxu0 0
    %2266 = vmatpush2.bf16.msra.mxu0 0
    %2267 = vmatprep.subr.bf16.mxu0 0
    %2268 = vmatpush2.bf16.msra.mxu0 0
    %2269 = vmatprep.subr.bf16.mxu0 0
    %2270 = vmatpush2.bf16.msra.mxu0 0
    %2271 = vmatprep.subr.bf16.mxu0 0
    %2272 = vmatpush2.bf16.msra.mxu0 0
    %2273 = vmatprep.subr.bf16.mxu0 0
    %2274 = vmatpush2.bf16.msra.mxu0 0
    %2275 = vmatprep.subr.bf16.mxu0 0
    %2276 = vmatpush2.bf16.msra.mxu0 0
    %2277 = vmatprep.subr.bf16.mxu0 0
    %2278 = vmatpush2.bf16.msra.mxu0 0
    %2279 = vmatprep.subr.bf16.mxu0 0
    %2280 = vmatpush2.bf16.msra.mxu0 0
    %2281 = vmatprep.mubr.bf16.mxu0 0
    %2282 = vmatmul.mubr.bf16.gmra.mxu0 %v2244
    %v2283 = vpop.f32.mrf.mxu0
    %v2284 = vadd.f32 0.0, %v2283
    %v2285 = vpop.f32.mrf.mxu0
    %v2286 = vpop.f32.mrf.mxu0
    %v2287 = vpop.f32.mrf.mxu0
    %2288 = vdwg.mxu0
    %2289 = vrot.lane.b32.xlu0 %v1629, 104
    %v2290 = vpop.permute.xlu0 %2289
    %2291 = vrot.lane.b32.xlu0 %v1629, 72
    %v2292 = vpop.permute.xlu0 %2291
    %v2294 = vsel %vm335, %v2290, 0
    %v2297 = vsel %vm335, %v2292, 0
    %2299 = vmatprep.subr.bf16.mxu0 0
    %2300 = vmatpush1.bf16.xpose.msra.mxu0 0
    %2301 = vmatprep.subr.bf16.mxu0 0
    %2302 = vmatpush1.bf16.xpose.msra.mxu0 0
    %2303 = vmatprep.subr.bf16.mxu0 0
    %2304 = vmatpush1.bf16.xpose.msra.mxu0 0
    %2305 = vmatprep.subr.bf16.mxu0 0
    %2306 = vmatpush1.bf16.xpose.msra.mxu0 0
    %2307 = vmatprep.subr.bf16.mxu0 0
    %2308 = vmatpush1.bf16.xpose.msra.mxu0 0
    %2309 = vmatprep.subr.bf16.mxu0 0
    %2310 = vmatpush1.bf16.xpose.msra.mxu0 0
    %2311 = vmatprep.subr.bf16.mxu0 0
    %2312 = vmatpush1.bf16.xpose.msra.mxu0 0
    %2313 = vmatprep.subr.bf16.mxu0 0
    %2314 = vmatpush1.bf16.xpose.msra.mxu0 %v2297
    %2315 = vmatprep.subr.bf16.mxu0 0
    %2316 = vmatpush2.bf16.xpose.msra.mxu0 0
    %2317 = vmatprep.subr.bf16.mxu0 0
    %2318 = vmatpush2.bf16.xpose.msra.mxu0 0
    %2319 = vmatprep.subr.bf16.mxu0 0
    %2320 = vmatpush2.bf16.xpose.msra.mxu0 0
    %2321 = vmatprep.subr.bf16.mxu0 0
    %2322 = vmatpush2.bf16.xpose.msra.mxu0 0
    %2323 = vmatprep.subr.bf16.mxu0 0
    %2324 = vmatpush2.bf16.xpose.msra.mxu0 0
    %2325 = vmatprep.subr.bf16.mxu0 0
    %2326 = vmatpush2.bf16.xpose.msra.mxu0 0
    %2327 = vmatprep.subr.bf16.mxu0 0
    %2328 = vmatpush2.bf16.xpose.msra.mxu0 0
    %2329 = vmatprep.subr.bf16.mxu0 0
    %2330 = vmatpush2.bf16.xpose.msra.mxu0 0
    %2331 = vmatprep.mubr.bf16.mxu0 0
    %2332 = vmatmul.mubr.bf16.gmra.mxu0 %v2294
    %v2333 = vpop.f32.mrf.mxu0
    %v2334 = vadd.f32 0.0, %v2333
    %v2335 = vpop.f32.mrf.mxu0
    %v2336 = vpop.f32.mrf.mxu0
    %v2337 = vpop.f32.mrf.mxu0
    %2338 = vdwg.mxu0
    %2339 = vrot.lane.b32.xlu0 %v1630, 104
    %v2340 = vpop.permute.xlu0 %2339
    %2341 = vrot.lane.b32.xlu0 %v1630, 72
    %v2342 = vpop.permute.xlu0 %2341
    %v2344 = vsel %vm335, %v2340, 0
    %v2347 = vsel %vm335, %v2342, 0
    %2349 = vmatprep.subr.bf16.mxu0 0
    %2350 = vmatpush1.bf16.xpose.msra.mxu0 0
    %2351 = vmatprep.subr.bf16.mxu0 0
    %2352 = vmatpush1.bf16.xpose.msra.mxu0 0
    %2353 = vmatprep.subr.bf16.mxu0 0
    %2354 = vmatpush1.bf16.xpose.msra.mxu0 0
    %2355 = vmatprep.subr.bf16.mxu0 0
    %2356 = vmatpush1.bf16.xpose.msra.mxu0 0
    %2357 = vmatprep.subr.bf16.mxu0 0
    %2358 = vmatpush1.bf16.xpose.msra.mxu0 0
    %2359 = vmatprep.subr.bf16.mxu0 0
    %2360 = vmatpush1.bf16.xpose.msra.mxu0 0
    %2361 = vmatprep.subr.bf16.mxu0 0
    %2362 = vmatpush1.bf16.xpose.msra.mxu0 0
    %2363 = vmatprep.subr.bf16.mxu0 0
    %2364 = vmatpush1.bf16.xpose.msra.mxu0 %v2347
    %2365 = vmatprep.subr.bf16.mxu0 0
    %2366 = vmatpush2.bf16.xpose.msra.mxu0 0
    %2367 = vmatprep.subr.bf16.mxu0 0
    %2368 = vmatpush2.bf16.xpose.msra.mxu0 0
    %2369 = vmatprep.subr.bf16.mxu0 0
    %2370 = vmatpush2.bf16.xpose.msra.mxu0 0
    %2371 = vmatprep.subr.bf16.mxu0 0
    %2372 = vmatpush2.bf16.xpose.msra.mxu0 0
    %2373 = vmatprep.subr.bf16.mxu0 0
    %2374 = vmatpush2.bf16.xpose.msra.mxu0 0
    %2375 = vmatprep.subr.bf16.mxu0 0
    %2376 = vmatpush2.bf16.xpose.msra.mxu0 0
    %2377 = vmatprep.subr.bf16.mxu0 0
    %2378 = vmatpush2.bf16.xpose.msra.mxu0 0
    %2379 = vmatprep.subr.bf16.mxu0 0
    %2380 = vmatpush2.bf16.xpose.msra.mxu0 0
    %2381 = vmatprep.mubr.bf16.mxu0 0
    %2382 = vmatmul.mubr.bf16.gmra.mxu0 %v2344
    %v2383 = vpop.f32.mrf.mxu0
    %v2384 = vadd.f32 0.0, %v2383
    %v2385 = vpop.f32.mrf.mxu0
    %v2386 = vpop.f32.mrf.mxu0
    %v2387 = vpop.f32.mrf.mxu0
    %2388 = vdwg.mxu0
    %v2389 = vsel %vm335, %v2334, -inf
    %2390 = vmax.xlane.f32.xlu0 %v2389
    %v2391 = vpop.xlane.xlu0 %2390
    %v2392 = vsel %vm335, %v2384, -inf
    %2393 = vmax.xlane.f32.xlu0 %v2392
    %v2394 = vpop.xlane.xlu0 %2393
    %v2395 = vsub.f32 %v2334, %v2391
    %v2396 = vsub.f32 %v2384, %v2394
    %v2397 = vmul.f32 %v2395, 1.442695
    %v2398 = vpow.pop %v2397
    %v2399 = vmul.f32 %v2396, 1.442695
    %v2400 = vpow.pop %v2399
    %v2401 = vsel %vm335, %v2398, 0.0
    %2402 = vadd.xlane.f32.xlu0 %v2401
    %v2403 = vpop.xlane.xlu0 %2402
    %v2404 = vsel %vm335, %v2400, 0.0
    %2405 = vadd.xlane.f32.xlu0 %v2404
    %v2406 = vpop.xlane.xlu0 %2405
    %v2407 = vrcp.pop %v2403
    %v2408 = vmul.f32 %v2398, %v2407
    %v2409 = vrcp.pop %v2406
    %v2410 = vmul.f32 %v2400, %v2409
    %v2411 = vpack.c.bf16 %v2408, %v2408
    %v2412 = vpack.c.bf16 %v2410, %v2410
    %2413 = vrot.lane.b32.xlu0 %v1629, 40
    %v2414 = vpop.permute.xlu0 %2413
    %v2416 = vsel %vm335, %v2411, 0
    %v2419 = vsel %vm460, %v2414, 0
    %2421 = vmatprep.subr.bf16.mxu0 0
    %2422 = vmatpush1.bf16.msra.mxu0 0
    %2423 = vmatprep.subr.bf16.mxu0 0
    %2424 = vmatpush1.bf16.msra.mxu0 0
    %2425 = vmatprep.subr.bf16.mxu0 0
    %2426 = vmatpush1.bf16.msra.mxu0 0
    %2427 = vmatprep.subr.bf16.mxu0 0
    %2428 = vmatpush1.bf16.msra.mxu0 0
    %2429 = vmatprep.subr.bf16.mxu0 0
    %2430 = vmatpush1.bf16.msra.mxu0 0
    %2431 = vmatprep.subr.bf16.mxu0 0
    %2432 = vmatpush1.bf16.msra.mxu0 0
    %2433 = vmatprep.subr.bf16.mxu0 0
    %2434 = vmatpush1.bf16.msra.mxu0 0
    %2435 = vmatprep.subr.bf16.mxu0 0
    %2436 = vmatpush1.bf16.msra.mxu0 %v2419
    %2437 = vmatprep.subr.bf16.mxu0 0
    %2438 = vmatpush2.bf16.msra.mxu0 0
    %2439 = vmatprep.subr.bf16.mxu0 0
    %2440 = vmatpush2.bf16.msra.mxu0 0
    %2441 = vmatprep.subr.bf16.mxu0 0
    %2442 = vmatpush2.bf16.msra.mxu0 0
    %2443 = vmatprep.subr.bf16.mxu0 0
    %2444 = vmatpush2.bf16.msra.mxu0 0
    %2445 = vmatprep.subr.bf16.mxu0 0
    %2446 = vmatpush2.bf16.msra.mxu0 0
    %2447 = vmatprep.subr.bf16.mxu0 0
    %2448 = vmatpush2.bf16.msra.mxu0 0
    %2449 = vmatprep.subr.bf16.mxu0 0
    %2450 = vmatpush2.bf16.msra.mxu0 0
    %2451 = vmatprep.subr.bf16.mxu0 0
    %2452 = vmatpush2.bf16.msra.mxu0 0
    %2453 = vmatprep.mubr.bf16.mxu0 0
    %2454 = vmatmul.mubr.bf16.gmra.mxu0 %v2416
    %v2455 = vpop.f32.mrf.mxu0
    %v2456 = vadd.f32 0.0, %v2455
    %v2457 = vpop.f32.mrf.mxu0
    %v2458 = vpop.f32.mrf.mxu0
    %v2459 = vpop.f32.mrf.mxu0
    %2460 = vdwg.mxu0
    %2461 = vrot.lane.b32.xlu0 %v1630, 40
    %v2462 = vpop.permute.xlu0 %2461
    %v2464 = vsel %vm335, %v2412, 0
    %v2467 = vsel %vm460, %v2462, 0
    %2469 = vmatprep.subr.bf16.mxu0 0
    %2470 = vmatpush1.bf16.msra.mxu0 0
    %2471 = vmatprep.subr.bf16.mxu0 0
    %2472 = vmatpush1.bf16.msra.mxu0 0
    %2473 = vmatprep.subr.bf16.mxu0 0
    %2474 = vmatpush1.bf16.msra.mxu0 0
    %2475 = vmatprep.subr.bf16.mxu0 0
    %2476 = vmatpush1.bf16.msra.mxu0 0
    %2477 = vmatprep.subr.bf16.mxu0 0
    %2478 = vmatpush1.bf16.msra.mxu0 0
    %2479 = vmatprep.subr.bf16.mxu0 0
    %2480 = vmatpush1.bf16.msra.mxu0 0
    %2481 = vmatprep.subr.bf16.mxu0 0
    %2482 = vmatpush1.bf16.msra.mxu0 0
    %2483 = vmatprep.subr.bf16.mxu0 0
    %2484 = vmatpush1.bf16.msra.mxu0 %v2467
    %2485 = vmatprep.subr.bf16.mxu0 0
    %2486 = vmatpush2.bf16.msra.mxu0 0
    %2487 = vmatprep.subr.bf16.mxu0 0
    %2488 = vmatpush2.bf16.msra.mxu0 0
    %2489 = vmatprep.subr.bf16.mxu0 0
    %2490 = vmatpush2.bf16.msra.mxu0 0
    %2491 = vmatprep.subr.bf16.mxu0 0
    %2492 = vmatpush2.bf16.msra.mxu0 0
    %2493 = vmatprep.subr.bf16.mxu0 0
    %2494 = vmatpush2.bf16.msra.mxu0 0
    %2495 = vmatprep.subr.bf16.mxu0 0
    %2496 = vmatpush2.bf16.msra.mxu0 0
    %2497 = vmatprep.subr.bf16.mxu0 0
    %2498 = vmatpush2.bf16.msra.mxu0 0
    %2499 = vmatprep.subr.bf16.mxu0 0
    %2500 = vmatpush2.bf16.msra.mxu0 0
    %2501 = vmatprep.mubr.bf16.mxu0 0
    %2502 = vmatmul.mubr.bf16.gmra.mxu0 %v2464
    %v2503 = vpop.f32.mrf.mxu0
    %v2504 = vadd.f32 0.0, %v2503
    %v2505 = vpop.f32.mrf.mxu0
    %v2506 = vpop.f32.mrf.mxu0
    %v2507 = vpop.f32.mrf.mxu0
    %2508 = vdwg.mxu0
    %2511 = vrot.lane.b32.xlu0 %v2016, 8
    %v2512 = vpop.permute.xlu0 %2511
    %2513 = vrot.lane.b32.xlu0 %v2064, 8
    %v2514 = vpop.permute.xlu0 %2513
    %2519 = vrot.lane.b32.xlu0 %v2236, 16
    %v2520 = vpop.permute.xlu0 %2519
    %2521 = vrot.lane.b32.xlu0 %v2284, 16
    %v2522 = vpop.permute.xlu0 %2521
    %2527 = vrot.lane.b32.xlu0 %v2456, 24
    %v2528 = vpop.permute.xlu0 %2527
    %2529 = vrot.lane.b32.xlu0 %v2504, 24
    %v2530 = vpop.permute.xlu0 %2529
    %v2533 = vsel %vm335, %v1796, %v2512
    %v2534 = vsel %vm335, %v1844, %v2514
    %v2535 = vsel %vm216, %v2533, %v2520
    %v2536 = vsel %vm216, %v2534, %v2522
    %v2537 = vsel %vm1240, %v2535, %v2528
    %v2538 = vsel %vm1240, %v2536, %v2530
    %s2539 = scalar_lea.vmem [#allocation5], 16
    %v2540 = vld [vmem:[%s2539] sm:$0xf]
    %v2541 = vld [vmem:[%s2539 + $0x4] sm:$0xf]
    %v2542 = vld [vmem:[%s2539 + $0x8] sm:$0xf]
    %v2543 = vld [vmem:[%s2539 + $0xc] sm:$0xf]
    %s2544 = scalar_lea.vmem %s6, 1
    %v2545 = vld [vmem:[%s2544] sm:$0x1]
    %v2546 = vpack.c.bf16 %v2538, %v2537
    %v2548 = vlaneseq
    %v2549 = vshrl.u32 %v2548, 7
    %v2550 = vsub.s32 0, %v2549
    %v2551 = vrot.slane %v2545, %v2550
    %v2557 = vunpack.c.l.b16 %v2540
    %v2558 = vunpack.c.l.b16 %v2541
    %v2559 = vunpack.c.l.b16 %v2542
    %v2560 = vunpack.c.l.b16 %v2543
    %v2561 = vpack.c.b16 %v2558, %v2557
    %v2562 = vpack.c.b16 %v2560, %v2559
    %v2566 = vsel %vm285, %v2546, 0
    %2568 = vmatprep.subr.bf16.mxu0 0
    %2569 = vmatpush1.bf16.msra.mxu0 0
    %2570 = vmatprep.subr.bf16.mxu0 0
    %2571 = vmatpush1.bf16.msra.mxu0 0
    %2572 = vmatprep.subr.bf16.mxu0 0
    %2573 = vmatpush1.bf16.msra.mxu0 0
    %2574 = vmatprep.subr.bf16.mxu0 0
    %2575 = vmatpush1.bf16.msra.mxu0 0
    %2576 = vmatprep.subr.bf16.mxu0 0
    %2577 = vmatpush1.bf16.msra.mxu0 0
    %2578 = vmatprep.subr.bf16.mxu0 0
    %2579 = vmatpush1.bf16.msra.mxu0 0
    %2580 = vmatprep.subr.bf16.mxu0 0
    %2581 = vmatpush1.bf16.msra.mxu0 %v2562
    %2582 = vmatprep.subr.bf16.mxu0 0
    %2583 = vmatpush1.bf16.msra.mxu0 %v2561
    %2584 = vmatprep.subr.bf16.mxu0 0
    %2585 = vmatpush2.bf16.msra.mxu0 0
    %2586 = vmatprep.subr.bf16.mxu0 0
    %2587 = vmatpush2.bf16.msra.mxu0 0
    %2588 = vmatprep.subr.bf16.mxu0 0
    %2589 = vmatpush2.bf16.msra.mxu0 0
    %2590 = vmatprep.subr.bf16.mxu0 0
    %2591 = vmatpush2.bf16.msra.mxu0 0
    %2592 = vmatprep.subr.bf16.mxu0 0
    %2593 = vmatpush2.bf16.msra.mxu0 0
    %2594 = vmatprep.subr.bf16.mxu0 0
    %2595 = vmatpush2.bf16.msra.mxu0 0
    %2596 = vmatprep.subr.bf16.mxu0 0
    %2597 = vmatpush2.bf16.msra.mxu0 0
    %2598 = vmatprep.subr.bf16.mxu0 0
    %2599 = vmatpush2.bf16.msra.mxu0 0
    %2600 = vmatprep.mubr.bf16.mxu0 0
    %2601 = vmatmul.mubr.bf16.gmra.mxu0 %v2566
    %v2602 = vpop.f32.mrf.mxu0
    %v2603 = vadd.f32 %v2551, %v2602
    %v2604 = vpop.f32.mrf.mxu0
    %v2605 = vpop.f32.mrf.mxu0
    %v2606 = vadd.f32 %v2551, %v2605
    %v2607 = vpop.f32.mrf.mxu0
    %2608 = vdwg.mxu0
    %v2609 = vadd.f32 %v1557, %v2603
    %v2610 = vadd.f32 %v1558, %v2606
    %s2611 = scalar_lea.vmem [#allocation7], 1
    %v2612 = vld [vmem:[%s2611] sm:$0x1]
    %s2613 = scalar_lea.vmem [#allocation8], 1
    %v2614 = vld [vmem:[%s2613] sm:$0x1]
    %v2615 = vsel %vm285, %v2609, 0.0
    %2616 = vadd.xlane.f32.xlu0 %v2615
    %v2617 = vpop.xlane.xlu0 %2616
    %v2618 = vsel %vm285, %v2610, 0.0
    %2619 = vadd.xlane.f32.xlu0 %v2618
    %v2620 = vpop.xlane.xlu0 %2619
    %v2621 = vmul.f32 %v2617, %v1321
    %v2622 = vmul.f32 %v2620, %v1321
    %v2623 = vsub.f32 %v2609, %v2621
    %v2624 = vsub.f32 %v2610, %v2622
    %v2625 = vmul.f32 %v2623, %v2623
    %v2626 = vmul.f32 %v2624, %v2624
    %v2627 = vsel %vm285, %v2625, 0.0
    %2628 = vadd.xlane.f32.xlu0 %v2627
    %v2629 = vpop.xlane.xlu0 %2628
    %v2630 = vsel %vm285, %v2626, 0.0
    %2631 = vadd.xlane.f32.xlu0 %v2630
    %v2632 = vpop.xlane.xlu0 %2631
    %v2633 = vmul.f32 %v2629, %v1321
    %v2634 = vmul.f32 %v2632, %v1321
    %v2635 = vadd.f32 %v2633, 1e-12
    %v2636 = vadd.f32 %v2634, 1e-12
    %v2637 = vrsqrt.pop %v2635
    %v2638 = vrsqrt.pop %v2636
    %v2639 = vmul.f32 %v2623, %v2637
    %v2640 = vmul.f32 %v2624, %v2638
    %v2642 = vlaneseq
    %v2643 = vshrl.u32 %v2642, 7
    %v2644 = vsub.s32 0, %v2643
    %v2645 = vrot.slane %v2612, %v2644
    %v2647 = vmul.f32 %v2639, %v2645
    %v2648 = vmul.f32 %v2640, %v2645
    %v2650 = vlaneseq
    %v2651 = vshrl.u32 %v2650, 7
    %v2652 = vsub.s32 0, %v2651
    %v2653 = vrot.slane %v2614, %v2652
    %v2655 = vadd.f32 %v2647, %v2653
    %v2656 = vadd.f32 %v2648, %v2653
    %s2657 = scalar_lea.vmem [#allocation10], 16
    %v2658 = vld [vmem:[%s2657] sm:$0xf]
    %v2659 = vld [vmem:[%s2657 + $0x4] sm:$0xf]
    %v2660 = vld [vmem:[%s2657 + $0x8] sm:$0xf]
    %v2661 = vld [vmem:[%s2657 + $0xc] sm:$0xf]
    %s2662 = scalar_lea.vmem [#allocation11], 1
    %v2663 = vld [vmem:[%s2662] sm:$0x1]
    %v2664 = vpack.c.bf16 %v2656, %v2655
    %v2666 = vlaneseq
    %v2667 = vshrl.u32 %v2666, 7
    %v2668 = vsub.s32 0, %v2667
    %v2669 = vrot.slane %v2663, %v2668
    %v2675 = vunpack.c.l.b16 %v2658
    %v2676 = vunpack.c.l.b16 %v2659
    %v2677 = vunpack.c.l.b16 %v2660
    %v2678 = vunpack.c.l.b16 %v2661
    %v2679 = vpack.c.b16 %v2676, %v2675
    %v2680 = vpack.c.b16 %v2678, %v2677
    %v2684 = vsel %vm285, %v2664, 0
    %2686 = vmatprep.subr.bf16.mxu0 0
    %2687 = vmatpush1.bf16.msra.mxu0 0
    %2688 = vmatprep.subr.bf16.mxu0 0
    %2689 = vmatpush1.bf16.msra.mxu0 0
    %2690 = vmatprep.subr.bf16.mxu0 0
    %2691 = vmatpush1.bf16.msra.mxu0 0
    %2692 = vmatprep.subr.bf16.mxu0 0
    %2693 = vmatpush1.bf16.msra.mxu0 0
    %2694 = vmatprep.subr.bf16.mxu0 0
    %2695 = vmatpush1.bf16.msra.mxu0 0
    %2696 = vmatprep.subr.bf16.mxu0 0
    %2697 = vmatpush1.bf16.msra.mxu0 0
    %2698 = vmatprep.subr.bf16.mxu0 0
    %2699 = vmatpush1.bf16.msra.mxu0 %v2680
    %2700 = vmatprep.subr.bf16.mxu0 0
    %2701 = vmatpush1.bf16.msra.mxu0 %v2679
    %2702 = vmatprep.subr.bf16.mxu0 0
    %2703 = vmatpush2.bf16.msra.mxu0 0
    %2704 = vmatprep.subr.bf16.mxu0 0
    %2705 = vmatpush2.bf16.msra.mxu0 0
    %2706 = vmatprep.subr.bf16.mxu0 0
    %2707 = vmatpush2.bf16.msra.mxu0 0
    %2708 = vmatprep.subr.bf16.mxu0 0
    %2709 = vmatpush2.bf16.msra.mxu0 0
    %2710 = vmatprep.subr.bf16.mxu0 0
    %2711 = vmatpush2.bf16.msra.mxu0 0
    %2712 = vmatprep.subr.bf16.mxu0 0
    %2713 = vmatpush2.bf16.msra.mxu0 0
    %2714 = vmatprep.subr.bf16.mxu0 0
    %2715 = vmatpush2.bf16.msra.mxu0 0
    %2716 = vmatprep.subr.bf16.mxu0 0
    %2717 = vmatpush2.bf16.msra.mxu0 0
    %2718 = vmatprep.mubr.bf16.mxu0 0
    %2719 = vmatmul.mubr.bf16.gmra.mxu0 %v2684
    %v2720 = vpop.f32.mrf.mxu0
    %v2721 = vadd.f32 %v2669, %v2720
    %v2722 = vpop.f32.mrf.mxu0
    %v2723 = vpop.f32.mrf.mxu0
    %v2724 = vadd.f32 %v2669, %v2723
    %v2725 = vpop.f32.mrf.mxu0
    %2726 = vdwg.mxu0
    %v2727 = vmax.f32 %v2721, 0.0
    %v2728 = vmax.f32 %v2724, 0.0
    %s2729 = scalar_lea.vmem %s11, 32
    %v2730 = vld [vmem:[%s2729] sm:$0xf]
    %v2731 = vld [vmem:[%s2729 + $0x4] sm:$0xf]
    %v2732 = vld [vmem:[%s2729 + $0x8] sm:$0xf]
    %v2733 = vld [vmem:[%s2729 + $0xc] sm:$0xf]
    %v2734 = vld [vmem:[%s2729 + $0x10] sm:$0xf]
    %v2735 = vld [vmem:[%s2729 + $0x14] sm:$0xf]
    %v2736 = vld [vmem:[%s2729 + $0x18] sm:$0xf]
    %v2737 = vld [vmem:[%s2729 + $0x1c] sm:$0xf]
    %s2738 = scalar_lea.vmem [#allocation13], 1
    %v2739 = vld [vmem:[%s2738] sm:$0x1]
    %v2740 = vpack.c.bf16 %v2728, %v2727
    %v2742 = vlaneseq
    %v2743 = vshrl.u32 %v2742, 7
    %v2744 = vsub.s32 0, %v2743
    %v2745 = vrot.slane %v2739, %v2744
    %v2755 = vunpack.c.l.b16 %v2730
    %v2756 = vunpack.c.l.b16 %v2731
    %v2757 = vunpack.c.l.b16 %v2732
    %v2758 = vunpack.c.l.b16 %v2733
    %v2759 = vunpack.c.l.b16 %v2734
    %v2760 = vunpack.c.l.b16 %v2735
    %v2761 = vunpack.c.l.b16 %v2736
    %v2762 = vunpack.c.l.b16 %v2737
    %v2763 = vpack.c.b16 %v2756, %v2755
    %v2764 = vpack.c.b16 %v2758, %v2757
    %v2765 = vpack.c.b16 %v2760, %v2759
    %v2766 = vpack.c.b16 %v2762, %v2761
    %v2772 = vsel %vm1468, %v2740, 0
    %2774 = vmatprep.subr.bf16.mxu0 0
    %2775 = vmatpush1.bf16.msra.mxu0 0
    %2776 = vmatprep.subr.bf16.mxu0 0
    %2777 = vmatpush1.bf16.msra.mxu0 0
    %2778 = vmatprep.subr.bf16.mxu0 0
    %2779 = vmatpush1.bf16.msra.mxu0 0
    %2780 = vmatprep.subr.bf16.mxu0 0
    %2781 = vmatpush1.bf16.msra.mxu0 0
    %2782 = vmatprep.subr.bf16.mxu0 0
    %2783 = vmatpush1.bf16.msra.mxu0 %v2766
    %2784 = vmatprep.subr.bf16.mxu0 0
    %2785 = vmatpush1.bf16.msra.mxu0 %v2765
    %2786 = vmatprep.subr.bf16.mxu0 0
    %2787 = vmatpush1.bf16.msra.mxu0 %v2764
    %2788 = vmatprep.subr.bf16.mxu0 0
    %2789 = vmatpush1.bf16.msra.mxu0 %v2763
    %2790 = vmatprep.subr.bf16.mxu0 0
    %2791 = vmatpush2.bf16.msra.mxu0 0
    %2792 = vmatprep.subr.bf16.mxu0 0
    %2793 = vmatpush2.bf16.msra.mxu0 0
    %2794 = vmatprep.subr.bf16.mxu0 0
    %2795 = vmatpush2.bf16.msra.mxu0 0
    %2796 = vmatprep.subr.bf16.mxu0 0
    %2797 = vmatpush2.bf16.msra.mxu0 0
    %2798 = vmatprep.subr.bf16.mxu0 0
    %2799 = vmatpush2.bf16.msra.mxu0 0
    %2800 = vmatprep.subr.bf16.mxu0 0
    %2801 = vmatpush2.bf16.msra.mxu0 0
    %2802 = vmatprep.subr.bf16.mxu0 0
    %2803 = vmatpush2.bf16.msra.mxu0 0
    %2804 = vmatprep.subr.bf16.mxu0 0
    %2805 = vmatpush2.bf16.msra.mxu0 0
    %2806 = vmatprep.mubr.bf16.mxu0 0
    %2807 = vmatmul.mubr.bf16.gmra.mxu0 %v2772
    %v2808 = vpop.f32.mrf.mxu0
    %v2809 = vadd.f32 %v2745, %v2808
    %v2810 = vpop.f32.mrf.mxu0
    %v2811 = vpop.f32.mrf.mxu0
    %v2812 = vadd.f32 %v2745, %v2811
    %v2813 = vpop.f32.mrf.mxu0
    %2814 = vdwg.mxu0
    %v2815 = vadd.f32 %v2655, %v2809
    %v2816 = vadd.f32 %v2656, %v2812
    %s2817 = scalar_lea.vmem [#allocation14], 1
    %v2818 = vld [vmem:[%s2817] sm:$0x1]
    %s2819 = scalar_lea.vmem [#allocation16], 1
    %v2820 = vld [vmem:[%s2819] sm:$0x1]
    %v2821 = vsel %vm285, %v2815, 0.0
    %2822 = vadd.xlane.f32.xlu0 %v2821
    %v2823 = vpop.xlane.xlu0 %2822
    %v2824 = vsel %vm285, %v2816, 0.0
    %2825 = vadd.xlane.f32.xlu0 %v2824
    %v2826 = vpop.xlane.xlu0 %2825
    %v2827 = vmul.f32 %v2823, %v1321
    %v2828 = vmul.f32 %v2826, %v1321
    %v2829 = vsub.f32 %v2815, %v2827
    %v2830 = vsub.f32 %v2816, %v2828
    %v2831 = vmul.f32 %v2829, %v2829
    %v2832 = vmul.f32 %v2830, %v2830
    %v2833 = vsel %vm285, %v2831, 0.0
    %2834 = vadd.xlane.f32.xlu0 %v2833
    %v2835 = vpop.xlane.xlu0 %2834
    %v2836 = vsel %vm285, %v2832, 0.0
    %2837 = vadd.xlane.f32.xlu0 %v2836
    %v2838 = vpop.xlane.xlu0 %2837
    %v2839 = vmul.f32 %v2835, %v1321
    %v2840 = vmul.f32 %v2838, %v1321
    %v2841 = vadd.f32 %v2839, 1e-12
    %v2842 = vadd.f32 %v2840, 1e-12
    %v2843 = vrsqrt.pop %v2841
    %v2844 = vrsqrt.pop %v2842
    %v2845 = vmul.f32 %v2829, %v2843
    %v2846 = vmul.f32 %v2830, %v2844
    %v2848 = vlaneseq
    %v2849 = vshrl.u32 %v2848, 7
    %v2850 = vsub.s32 0, %v2849
    %v2851 = vrot.slane %v2818, %v2850
    %v2853 = vmul.f32 %v2845, %v2851
    %v2854 = vmul.f32 %v2846, %v2851
    %v2856 = vlaneseq
    %v2857 = vshrl.u32 %v2856, 7
    %v2858 = vsub.s32 0, %v2857
    %v2859 = vrot.slane %v2820, %v2858
    %v2861 = vadd.f32 %v2853, %v2859
    %v2862 = vadd.f32 %v2854, %v2859
    %v2864 = vrot.slane %v2862, 7
    %vm2866 = vcmask 1040384
    %v2867 = vsel %vm2866, %v2861, %v2864
    %v2868 = vld [vmem:[%s15] sm:$0xf]
    %v2869 = vld [vmem:[%s15 + $0x4] sm:$0xf]
    %v2870 = vld [vmem:[%s15 + $0x8] sm:$0xf]
    %v2871 = vld [vmem:[%s15 + $0xc] sm:$0xf]
    %v2872 = vpack.c.bf16 %v2867, %v2867
    %v2874 = vrot.slane %v2861, 1
    %v2876 = vsel %vm2866, %v2874, %v2862
    %s2877 = scalar_lea.vmem %s15, 16
    %v2878 = vld [vmem:[%s2877] sm:$0xf]
    %v2879 = vld [vmem:[%s2877 + $0x4] sm:$0xf]
    %v2880 = vld [vmem:[%s2877 + $0x8] sm:$0xf]
    %v2881 = vld [vmem:[%s2877 + $0xc] sm:$0xf]
    %v2882 = vpack.c.bf16 %v2876, %v2876
    %v2887 = vunpack.c.l.b16 %v2878
    %v2888 = vunpack.c.l.b16 %v2879
    %v2889 = vunpack.c.l.b16 %v2880
    %v2890 = vunpack.c.l.b16 %v2881
    %v2891 = vpack.c.b16 %v2888, %v2887
    %v2892 = vpack.c.b16 %v2890, %v2889
    %v2896 = vsel %vm285, %v2882, 0
    %2898 = vmatprep.subr.bf16.mxu0 0
    %2899 = vmatpush1.bf16.msra.mxu0 0
    %2900 = vmatprep.subr.bf16.mxu0 0
    %2901 = vmatpush1.bf16.msra.mxu0 0
    %2902 = vmatprep.subr.bf16.mxu0 0
    %2903 = vmatpush1.bf16.msra.mxu0 0
    %2904 = vmatprep.subr.bf16.mxu0 0
    %2905 = vmatpush1.bf16.msra.mxu0 0
    %2906 = vmatprep.subr.bf16.mxu0 0
    %2907 = vmatpush1.bf16.msra.mxu0 0
    %2908 = vmatprep.subr.bf16.mxu0 0
    %2909 = vmatpush1.bf16.msra.mxu0 0
    %2910 = vmatprep.subr.bf16.mxu0 0
    %2911 = vmatpush1.bf16.msra.mxu0 %v2892
    %2912 = vmatprep.subr.bf16.mxu0 0
    %2913 = vmatpush1.bf16.msra.mxu0 %v2891
    %2914 = vmatprep.subr.bf16.mxu0 0
    %2915 = vmatpush2.bf16.msra.mxu0 0
    %2916 = vmatprep.subr.bf16.mxu0 0
    %2917 = vmatpush2.bf16.msra.mxu0 0
    %2918 = vmatprep.subr.bf16.mxu0 0
    %2919 = vmatpush2.bf16.msra.mxu0 0
    %2920 = vmatprep.subr.bf16.mxu0 0
    %2921 = vmatpush2.bf16.msra.mxu0 0
    %2922 = vmatprep.subr.bf16.mxu0 0
    %2923 = vmatpush2.bf16.msra.mxu0 0
    %2924 = vmatprep.subr.bf16.mxu0 0
    %2925 = vmatpush2.bf16.msra.mxu0 0
    %2926 = vmatprep.subr.bf16.mxu0 0
    %2927 = vmatpush2.bf16.msra.mxu0 0
    %2928 = vmatprep.subr.bf16.mxu0 0
    %2929 = vmatpush2.bf16.msra.mxu0 0
    %2930 = vmatprep.mubr.bf16.mxu0 0
    %2931 = vmatmul.mubr.bf16.gmra.mxu0 %v2896
    %v2932 = vpop.f32.mrf.mxu0
    %v2933 = vadd.f32 0.0, %v2932
    %v2934 = vpop.f32.mrf.mxu0
    %v2935 = vpop.f32.mrf.mxu0
    %v2936 = vpop.f32.mrf.mxu0
    %2937 = vdwg.mxu0
    %v2942 = vunpack.c.l.b16 %v2868
    %v2943 = vunpack.c.l.b16 %v2869
    %v2944 = vunpack.c.l.b16 %v2870
    %v2945 = vunpack.c.l.b16 %v2871
    %v2946 = vpack.c.b16 %v2943, %v2942
    %v2947 = vpack.c.b16 %v2945, %v2944
    %v2951 = vsel %vm285, %v2872, 0
    %2953 = vmatprep.subr.bf16.mxu0 0
    %2954 = vmatpush1.bf16.msra.mxu0 0
    %2955 = vmatprep.subr.bf16.mxu0 0
    %2956 = vmatpush1.bf16.msra.mxu0 0
    %2957 = vmatprep.subr.bf16.mxu0 0
    %2958 = vmatpush1.bf16.msra.mxu0 0
    %2959 = vmatprep.subr.bf16.mxu0 0
    %2960 = vmatpush1.bf16.msra.mxu0 0
    %2961 = vmatprep.subr.bf16.mxu0 0
    %2962 = vmatpush1.bf16.msra.mxu0 0
    %2963 = vmatprep.subr.bf16.mxu0 0
    %2964 = vmatpush1.bf16.msra.mxu0 0
    %2965 = vmatprep.subr.bf16.mxu0 0
    %2966 = vmatpush1.bf16.msra.mxu0 %v2947
    %2967 = vmatprep.subr.bf16.mxu0 0
    %2968 = vmatpush1.bf16.msra.mxu0 %v2946
    %2969 = vmatprep.subr.bf16.mxu0 0
    %2970 = vmatpush2.bf16.msra.mxu0 0
    %2971 = vmatprep.subr.bf16.mxu0 0
    %2972 = vmatpush2.bf16.msra.mxu0 0
    %2973 = vmatprep.subr.bf16.mxu0 0
    %2974 = vmatpush2.bf16.msra.mxu0 0
    %2975 = vmatprep.subr.bf16.mxu0 0
    %2976 = vmatpush2.bf16.msra.mxu0 0
    %2977 = vmatprep.subr.bf16.mxu0 0
    %2978 = vmatpush2.bf16.msra.mxu0 0
    %2979 = vmatprep.subr.bf16.mxu0 0
    %2980 = vmatpush2.bf16.msra.mxu0 0
    %2981 = vmatprep.subr.bf16.mxu0 0
    %2982 = vmatpush2.bf16.msra.mxu0 0
    %2983 = vmatprep.subr.bf16.mxu0 0
    %2984 = vmatpush2.bf16.msra.mxu0 0
    %2985 = vmatprep.mubr.bf16.mxu0 0
    %2986 = vmatmul.mubr.bf16.gmra.mxu0 %v2951
    %v2987 = vpop.f32.mrf.mxu0
    %v2988 = vadd.f32 %v2933, %v2987
    %v2989 = vpop.f32.mrf.mxu0
    %v2990 = vpop.f32.mrf.mxu0
    %v2991 = vpop.f32.mrf.mxu0
    %2992 = vdwg.mxu0
    %v2993 = vrot.slane %v2861, 2
    %v2995 = vrot.slane %v2862, 1
    %v2997 = vsel %vm2866, %v2993, %v2995
    %s2998 = scalar_lea.vmem %s15, 32
    %v2999 = vld [vmem:[%s2998] sm:$0xf]
    %v3000 = vld [vmem:[%s2998 + $0x4] sm:$0xf]
    %v3001 = vld [vmem:[%s2998 + $0x8] sm:$0xf]
    %v3002 = vld [vmem:[%s2998 + $0xc] sm:$0xf]
    %v3003 = vpack.c.bf16 %v2997, %v2997
    %v3008 = vunpack.c.l.b16 %v2999
    %v3009 = vunpack.c.l.b16 %v3000
    %v3010 = vunpack.c.l.b16 %v3001
    %v3011 = vunpack.c.l.b16 %v3002
    %v3012 = vpack.c.b16 %v3009, %v3008
    %v3013 = vpack.c.b16 %v3011, %v3010
    %v3017 = vsel %vm285, %v3003, 0
    %3019 = vmatprep.subr.bf16.mxu0 0
    %3020 = vmatpush1.bf16.msra.mxu0 0
    %3021 = vmatprep.subr.bf16.mxu0 0
    %3022 = vmatpush1.bf16.msra.mxu0 0
    %3023 = vmatprep.subr.bf16.mxu0 0
    %3024 = vmatpush1.bf16.msra.mxu0 0
    %3025 = vmatprep.subr.bf16.mxu0 0
    %3026 = vmatpush1.bf16.msra.mxu0 0
    %3027 = vmatprep.subr.bf16.mxu0 0
    %3028 = vmatpush1.bf16.msra.mxu0 0
    %3029 = vmatprep.subr.bf16.mxu0 0
    %3030 = vmatpush1.bf16.msra.mxu0 0
    %3031 = vmatprep.subr.bf16.mxu0 0
    %3032 = vmatpush1.bf16.msra.mxu0 %v3013
    %3033 = vmatprep.subr.bf16.mxu0 0
    %3034 = vmatpush1.bf16.msra.mxu0 %v3012
    %3035 = vmatprep.subr.bf16.mxu0 0
    %3036 = vmatpush2.bf16.msra.mxu0 0
    %3037 = vmatprep.subr.bf16.mxu0 0
    %3038 = vmatpush2.bf16.msra.mxu0 0
    %3039 = vmatprep.subr.bf16.mxu0 0
    %3040 = vmatpush2.bf16.msra.mxu0 0
    %3041 = vmatprep.subr.bf16.mxu0 0
    %3042 = vmatpush2.bf16.msra.mxu0 0
    %3043 = vmatprep.subr.bf16.mxu0 0
    %3044 = vmatpush2.bf16.msra.mxu0 0
    %3045 = vmatprep.subr.bf16.mxu0 0
    %3046 = vmatpush2.bf16.msra.mxu0 0
    %3047 = vmatprep.subr.bf16.mxu0 0
    %3048 = vmatpush2.bf16.msra.mxu0 0
    %3049 = vmatprep.subr.bf16.mxu0 0
    %3050 = vmatpush2.bf16.msra.mxu0 0
    %3051 = vmatprep.mubr.bf16.mxu0 0
    %3052 = vmatmul.mubr.bf16.gmra.mxu0 %v3017
    %v3053 = vpop.f32.mrf.mxu0
    %v3054 = vadd.f32 0.0, %v3053
    %v3055 = vpop.f32.mrf.mxu0
    %v3056 = vpop.f32.mrf.mxu0
    %v3057 = vpop.f32.mrf.mxu0
    %3058 = vdwg.mxu0
    %v3059 = vadd.f32 %v2988, %v3054
    %v3060 = vrot.slane %v2861, 3
    %v3062 = vrot.slane %v2862, 2
    %v3064 = vsel %vm2866, %v3060, %v3062
    %s3065 = scalar_lea.vmem %s15, 48
    %v3066 = vld [vmem:[%s3065] sm:$0xf]
    %v3067 = vld [vmem:[%s3065 + $0x4] sm:$0xf]
    %v3068 = vld [vmem:[%s3065 + $0x8] sm:$0xf]
    %v3069 = vld [vmem:[%s3065 + $0xc] sm:$0xf]
    %v3070 = vpack.c.bf16 %v3064, %v3064
    %v3075 = vunpack.c.l.b16 %v3066
    %v3076 = vunpack.c.l.b16 %v3067
    %v3077 = vunpack.c.l.b16 %v3068
    %v3078 = vunpack.c.l.b16 %v3069
    %v3079 = vpack.c.b16 %v3076, %v3075
    %v3080 = vpack.c.b16 %v3078, %v3077
    %v3084 = vsel %vm285, %v3070, 0
    %3086 = vmatprep.subr.bf16.mxu0 0
    %3087 = vmatpush1.bf16.msra.mxu0 0
    %3088 = vmatprep.subr.bf16.mxu0 0
    %3089 = vmatpush1.bf16.msra.mxu0 0
    %3090 = vmatprep.subr.bf16.mxu0 0
    %3091 = vmatpush1.bf16.msra.mxu0 0
    %3092 = vmatprep.subr.bf16.mxu0 0
    %3093 = vmatpush1.bf16.msra.mxu0 0
    %3094 = vmatprep.subr.bf16.mxu0 0
    %3095 = vmatpush1.bf16.msra.mxu0 0
    %3096 = vmatprep.subr.bf16.mxu0 0
    %3097 = vmatpush1.bf16.msra.mxu0 0
    %3098 = vmatprep.subr.bf16.mxu0 0
    %3099 = vmatpush1.bf16.msra.mxu0 %v3080
    %3100 = vmatprep.subr.bf16.mxu0 0
    %3101 = vmatpush1.bf16.msra.mxu0 %v3079
    %3102 = vmatprep.subr.bf16.mxu0 0
    %3103 = vmatpush2.bf16.msra.mxu0 0
    %3104 = vmatprep.subr.bf16.mxu0 0
    %3105 = vmatpush2.bf16.msra.mxu0 0
    %3106 = vmatprep.subr.bf16.mxu0 0
    %3107 = vmatpush2.bf16.msra.mxu0 0
    %3108 = vmatprep.subr.bf16.mxu0 0
    %3109 = vmatpush2.bf16.msra.mxu0 0
    %3110 = vmatprep.subr.bf16.mxu0 0
    %3111 = vmatpush2.bf16.msra.mxu0 0
    %3112 = vmatprep.subr.bf16.mxu0 0
    %3113 = vmatpush2.bf16.msra.mxu0 0
    %3114 = vmatprep.subr.bf16.mxu0 0
    %3115 = vmatpush2.bf16.msra.mxu0 0
    %3116 = vmatprep.subr.bf16.mxu0 0
    %3117 = vmatpush2.bf16.msra.mxu0 0
    %3118 = vmatprep.mubr.bf16.mxu0 0
    %3119 = vmatmul.mubr.bf16.gmra.mxu0 %v3084
    %v3120 = vpop.f32.mrf.mxu0
    %v3121 = vadd.f32 0.0, %v3120
    %v3122 = vpop.f32.mrf.mxu0
    %v3123 = vpop.f32.mrf.mxu0
    %v3124 = vpop.f32.mrf.mxu0
    %3125 = vdwg.mxu0
    %v3126 = vadd.f32 %v3059, %v3121
    %v3127 = vrot.slane %v2861, 4
    %v3129 = vrot.slane %v2862, 3
    %v3131 = vsel %vm2866, %v3127, %v3129
    %s3132 = scalar_lea.vmem %s15, 64
    %v3133 = vld [vmem:[%s3132] sm:$0xf]
    %v3134 = vld [vmem:[%s3132 + $0x4] sm:$0xf]
    %v3135 = vld [vmem:[%s3132 + $0x8] sm:$0xf]
    %v3136 = vld [vmem:[%s3132 + $0xc] sm:$0xf]
    %v3137 = vpack.c.bf16 %v3131, %v3131
    %v3142 = vunpack.c.l.b16 %v3133
    %v3143 = vunpack.c.l.b16 %v3134
    %v3144 = vunpack.c.l.b16 %v3135
    %v3145 = vunpack.c.l.b16 %v3136
    %v3146 = vpack.c.b16 %v3143, %v3142
    %v3147 = vpack.c.b16 %v3145, %v3144
    %v3151 = vsel %vm285, %v3137, 0
    %3153 = vmatprep.subr.bf16.mxu0 0
    %3154 = vmatpush1.bf16.msra.mxu0 0
    %3155 = vmatprep.subr.bf16.mxu0 0
    %3156 = vmatpush1.bf16.msra.mxu0 0
    %3157 = vmatprep.subr.bf16.mxu0 0
    %3158 = vmatpush1.bf16.msra.mxu0 0
    %3159 = vmatprep.subr.bf16.mxu0 0
    %3160 = vmatpush1.bf16.msra.mxu0 0
    %3161 = vmatprep.subr.bf16.mxu0 0
    %3162 = vmatpush1.bf16.msra.mxu0 0
    %3163 = vmatprep.subr.bf16.mxu0 0
    %3164 = vmatpush1.bf16.msra.mxu0 0
    %3165 = vmatprep.subr.bf16.mxu0 0
    %3166 = vmatpush1.bf16.msra.mxu0 %v3147
    %3167 = vmatprep.subr.bf16.mxu0 0
    %3168 = vmatpush1.bf16.msra.mxu0 %v3146
    %3169 = vmatprep.subr.bf16.mxu0 0
    %3170 = vmatpush2.bf16.msra.mxu0 0
    %3171 = vmatprep.subr.bf16.mxu0 0
    %3172 = vmatpush2.bf16.msra.mxu0 0
    %3173 = vmatprep.subr.bf16.mxu0 0
    %3174 = vmatpush2.bf16.msra.mxu0 0
    %3175 = vmatprep.subr.bf16.mxu0 0
    %3176 = vmatpush2.bf16.msra.mxu0 0
    %3177 = vmatprep.subr.bf16.mxu0 0
    %3178 = vmatpush2.bf16.msra.mxu0 0
    %3179 = vmatprep.subr.bf16.mxu0 0
    %3180 = vmatpush2.bf16.msra.mxu0 0
    %3181 = vmatprep.subr.bf16.mxu0 0
    %3182 = vmatpush2.bf16.msra.mxu0 0
    %3183 = vmatprep.subr.bf16.mxu0 0
    %3184 = vmatpush2.bf16.msra.mxu0 0
    %3185 = vmatprep.mubr.bf16.mxu0 0
    %3186 = vmatmul.mubr.bf16.gmra.mxu0 %v3151
    %v3187 = vpop.f32.mrf.mxu0
    %v3188 = vadd.f32 0.0, %v3187
    %v3189 = vpop.f32.mrf.mxu0
    %v3190 = vpop.f32.mrf.mxu0
    %v3191 = vpop.f32.mrf.mxu0
    %3192 = vdwg.mxu0
    %v3193 = vadd.f32 %v3126, %v3188
    %v3194 = vrot.slane %v2861, 5
    %v3196 = vrot.slane %v2862, 4
    %v3198 = vsel %vm2866, %v3194, %v3196
    %s3199 = scalar_lea.vmem %s15, 80
    %v3200 = vld [vmem:[%s3199] sm:$0xf]
    %v3201 = vld [vmem:[%s3199 + $0x4] sm:$0xf]
    %v3202 = vld [vmem:[%s3199 + $0x8] sm:$0xf]
    %v3203 = vld [vmem:[%s3199 + $0xc] sm:$0xf]
    %v3204 = vpack.c.bf16 %v3198, %v3198
    %v3209 = vunpack.c.l.b16 %v3200
    %v3210 = vunpack.c.l.b16 %v3201
    %v3211 = vunpack.c.l.b16 %v3202
    %v3212 = vunpack.c.l.b16 %v3203
    %v3213 = vpack.c.b16 %v3210, %v3209
    %v3214 = vpack.c.b16 %v3212, %v3211
    %v3218 = vsel %vm285, %v3204, 0
    %3220 = vmatprep.subr.bf16.mxu0 0
    %3221 = vmatpush1.bf16.msra.mxu0 0
    %3222 = vmatprep.subr.bf16.mxu0 0
    %3223 = vmatpush1.bf16.msra.mxu0 0
    %3224 = vmatprep.subr.bf16.mxu0 0
    %3225 = vmatpush1.bf16.msra.mxu0 0
    %3226 = vmatprep.subr.bf16.mxu0 0
    %3227 = vmatpush1.bf16.msra.mxu0 0
    %3228 = vmatprep.subr.bf16.mxu0 0
    %3229 = vmatpush1.bf16.msra.mxu0 0
    %3230 = vmatprep.subr.bf16.mxu0 0
    %3231 = vmatpush1.bf16.msra.mxu0 0
    %3232 = vmatprep.subr.bf16.mxu0 0
    %3233 = vmatpush1.bf16.msra.mxu0 %v3214
    %3234 = vmatprep.subr.bf16.mxu0 0
    %3235 = vmatpush1.bf16.msra.mxu0 %v3213
    %3236 = vmatprep.subr.bf16.mxu0 0
    %3237 = vmatpush2.bf16.msra.mxu0 0
    %3238 = vmatprep.subr.bf16.mxu0 0
    %3239 = vmatpush2.bf16.msra.mxu0 0
    %3240 = vmatprep.subr.bf16.mxu0 0
    %3241 = vmatpush2.bf16.msra.mxu0 0
    %3242 = vmatprep.subr.bf16.mxu0 0
    %3243 = vmatpush2.bf16.msra.mxu0 0
    %3244 = vmatprep.subr.bf16.mxu0 0
    %3245 = vmatpush2.bf16.msra.mxu0 0
    %3246 = vmatprep.subr.bf16.mxu0 0
    %3247 = vmatpush2.bf16.msra.mxu0 0
    %3248 = vmatprep.subr.bf16.mxu0 0
    %3249 = vmatpush2.bf16.msra.mxu0 0
    %3250 = vmatprep.subr.bf16.mxu0 0
    %3251 = vmatpush2.bf16.msra.mxu0 0
    %3252 = vmatprep.mubr.bf16.mxu0 0
    %3253 = vmatmul.mubr.bf16.gmra.mxu0 %v3218
    %v3254 = vpop.f32.mrf.mxu0
    %v3255 = vadd.f32 0.0, %v3254
    %v3256 = vpop.f32.mrf.mxu0
    %v3257 = vpop.f32.mrf.mxu0
    %v3258 = vpop.f32.mrf.mxu0
    %3259 = vdwg.mxu0
    %v3260 = vadd.f32 %v3193, %v3255
    %v3261 = vrot.slane %v2861, 6
    %v3263 = vrot.slane %v2862, 5
    %v3265 = vsel %vm2866, %v3261, %v3263
    %s3266 = scalar_lea.vmem %s15, 96
    %v3267 = vld [vmem:[%s3266] sm:$0xf]
    %v3268 = vld [vmem:[%s3266 + $0x4] sm:$0xf]
    %v3269 = vld [vmem:[%s3266 + $0x8] sm:$0xf]
    %v3270 = vld [vmem:[%s3266 + $0xc] sm:$0xf]
    %v3271 = vpack.c.bf16 %v3265, %v3265
    %v3276 = vunpack.c.l.b16 %v3267
    %v3277 = vunpack.c.l.b16 %v3268
    %v3278 = vunpack.c.l.b16 %v3269
    %v3279 = vunpack.c.l.b16 %v3270
    %v3280 = vpack.c.b16 %v3277, %v3276
    %v3281 = vpack.c.b16 %v3279, %v3278
    %v3285 = vsel %vm285, %v3271, 0
    %3287 = vmatprep.subr.bf16.mxu0 0
    %3288 = vmatpush1.bf16.msra.mxu0 0
    %3289 = vmatprep.subr.bf16.mxu0 0
    %3290 = vmatpush1.bf16.msra.mxu0 0
    %3291 = vmatprep.subr.bf16.mxu0 0
    %3292 = vmatpush1.bf16.msra.mxu0 0
    %3293 = vmatprep.subr.bf16.mxu0 0
    %3294 = vmatpush1.bf16.msra.mxu0 0
    %3295 = vmatprep.subr.bf16.mxu0 0
    %3296 = vmatpush1.bf16.msra.mxu0 0
    %3297 = vmatprep.subr.bf16.mxu0 0
    %3298 = vmatpush1.bf16.msra.mxu0 0
    %3299 = vmatprep.subr.bf16.mxu0 0
    %3300 = vmatpush1.bf16.msra.mxu0 %v3281
    %3301 = vmatprep.subr.bf16.mxu0 0
    %3302 = vmatpush1.bf16.msra.mxu0 %v3280
    %3303 = vmatprep.subr.bf16.mxu0 0
    %3304 = vmatpush2.bf16.msra.mxu0 0
    %3305 = vmatprep.subr.bf16.mxu0 0
    %3306 = vmatpush2.bf16.msra.mxu0 0
    %3307 = vmatprep.subr.bf16.mxu0 0
    %3308 = vmatpush2.bf16.msra.mxu0 0
    %3309 = vmatprep.subr.bf16.mxu0 0
    %3310 = vmatpush2.bf16.msra.mxu0 0
    %3311 = vmatprep.subr.bf16.mxu0 0
    %3312 = vmatpush2.bf16.msra.mxu0 0
    %3313 = vmatprep.subr.bf16.mxu0 0
    %3314 = vmatpush2.bf16.msra.mxu0 0
    %3315 = vmatprep.subr.bf16.mxu0 0
    %3316 = vmatpush2.bf16.msra.mxu0 0
    %3317 = vmatprep.subr.bf16.mxu0 0
    %3318 = vmatpush2.bf16.msra.mxu0 0
    %3319 = vmatprep.mubr.bf16.mxu0 0
    %3320 = vmatmul.mubr.bf16.gmra.mxu0 %v3285
    %v3321 = vpop.f32.mrf.mxu0
    %v3322 = vadd.f32 0.0, %v3321
    %v3323 = vpop.f32.mrf.mxu0
    %v3324 = vpop.f32.mrf.mxu0
    %v3325 = vpop.f32.mrf.mxu0
    %3326 = vdwg.mxu0
    %v3327 = vadd.f32 %v3260, %v3322
    %v3328 = vrot.slane %v2861, 7
    %v3330 = vrot.slane %v2862, 6
    %v3332 = vsel %vm2866, %v3328, %v3330
    %s3333 = scalar_lea.vmem %s15, 112
    %v3334 = vld [vmem:[%s3333] sm:$0xf]
    %v3335 = vld [vmem:[%s3333 + $0x4] sm:$0xf]
    %v3336 = vld [vmem:[%s3333 + $0x8] sm:$0xf]
    %v3337 = vld [vmem:[%s3333 + $0xc] sm:$0xf]
    %v3338 = vpack.c.bf16 %v3332, %v3332
    %v3343 = vunpack.c.l.b16 %v3334
    %v3344 = vunpack.c.l.b16 %v3335
    %v3345 = vunpack.c.l.b16 %v3336
    %v3346 = vunpack.c.l.b16 %v3337
    %v3347 = vpack.c.b16 %v3344, %v3343
    %v3348 = vpack.c.b16 %v3346, %v3345
    %v3352 = vsel %vm285, %v3338, 0
    %3354 = vmatprep.subr.bf16.mxu0 0
    %3355 = vmatpush1.bf16.msra.mxu0 0
    %3356 = vmatprep.subr.bf16.mxu0 0
    %3357 = vmatpush1.bf16.msra.mxu0 0
    %3358 = vmatprep.subr.bf16.mxu0 0
    %3359 = vmatpush1.bf16.msra.mxu0 0
    %3360 = vmatprep.subr.bf16.mxu0 0
    %3361 = vmatpush1.bf16.msra.mxu0 0
    %3362 = vmatprep.subr.bf16.mxu0 0
    %3363 = vmatpush1.bf16.msra.mxu0 0
    %3364 = vmatprep.subr.bf16.mxu0 0
    %3365 = vmatpush1.bf16.msra.mxu0 0
    %3366 = vmatprep.subr.bf16.mxu0 0
    %3367 = vmatpush1.bf16.msra.mxu0 %v3348
    %3368 = vmatprep.subr.bf16.mxu0 0
    %3369 = vmatpush1.bf16.msra.mxu0 %v3347
    %3370 = vmatprep.subr.bf16.mxu0 0
    %3371 = vmatpush2.bf16.msra.mxu0 0
    %3372 = vmatprep.subr.bf16.mxu0 0
    %3373 = vmatpush2.bf16.msra.mxu0 0
    %3374 = vmatprep.subr.bf16.mxu0 0
    %3375 = vmatpush2.bf16.msra.mxu0 0
    %3376 = vmatprep.subr.bf16.mxu0 0
    %3377 = vmatpush2.bf16.msra.mxu0 0
    %3378 = vmatprep.subr.bf16.mxu0 0
    %3379 = vmatpush2.bf16.msra.mxu0 0
    %3380 = vmatprep.subr.bf16.mxu0 0
    %3381 = vmatpush2.bf16.msra.mxu0 0
    %3382 = vmatprep.subr.bf16.mxu0 0
    %3383 = vmatpush2.bf16.msra.mxu0 0
    %3384 = vmatprep.subr.bf16.mxu0 0
    %3385 = vmatpush2.bf16.msra.mxu0 0
    %3386 = vmatprep.mubr.bf16.mxu0 0
    %3387 = vmatmul.mubr.bf16.gmra.mxu0 %v3352
    %v3388 = vpop.f32.mrf.mxu0
    %v3389 = vadd.f32 0.0, %v3388
    %v3390 = vpop.f32.mrf.mxu0
    %v3391 = vpop.f32.mrf.mxu0
    %v3392 = vpop.f32.mrf.mxu0
    %3393 = vdwg.mxu0
    %v3394 = vadd.f32 %v3327, %v3389
    %v3395 = vld [vmem:[#allocation17] sm:$0x1]
    %v3397 = vlaneseq
    %v3398 = vshrl.u32 %v3397, 7
    %v3399 = vsub.s32 0, %v3398
    %v3400 = vrot.slane %v3395, %v3399
    %v3402 = vadd.f32 %v3394, %v3400
    %v3403 = vmax.f32 %v3402, 0.0
    %v3404 = vld [vmem:[%s17] sm:$0xf]
    %v3405 = vld [vmem:[%s17 + $0x4] sm:$0xf]
    %v3406 = vld [vmem:[%s17 + $0x8] sm:$0xf]
    %v3407 = vld [vmem:[%s17 + $0xc] sm:$0xf]
    %v3408 = vld [vmem:[%s17 + $0x10] sm:$0xf]
    %v3409 = vld [vmem:[%s17 + $0x14] sm:$0xf]
    %v3410 = vld [vmem:[%s17 + $0x18] sm:$0xf]
    %v3411 = vld [vmem:[%s17 + $0x1c] sm:$0xf]
    %v3412 = vld [vmem:[%s18] sm:$0x1]
    %v3413 = vpack.c.bf16 %v3403, %v3403
    %v3415 = vlaneseq
    %v3416 = vshrl.u32 %v3415, 7
    %v3417 = vsub.s32 0, %v3416
    %v3418 = vrot.slane %v3412, %v3417
    %v3428 = vunpack.c.l.b16 %v3404
    %v3429 = vunpack.c.l.b16 %v3405
    %v3430 = vunpack.c.l.b16 %v3406
    %v3431 = vunpack.c.l.b16 %v3407
    %v3432 = vunpack.c.l.b16 %v3408
    %v3433 = vunpack.c.l.b16 %v3409
    %v3434 = vunpack.c.l.b16 %v3410
    %v3435 = vunpack.c.l.b16 %v3411
    %v3436 = vpack.c.b16 %v3429, %v3428
    %v3437 = vpack.c.b16 %v3431, %v3430
    %v3438 = vpack.c.b16 %v3433, %v3432
    %v3439 = vpack.c.b16 %v3435, %v3434
    %v3445 = vsel %vm1468, %v3413, 0
    %3447 = vmatprep.subr.bf16.mxu0 0
    %3448 = vmatpush1.bf16.msra.mxu0 0
    %3449 = vmatprep.subr.bf16.mxu0 0
    %3450 = vmatpush1.bf16.msra.mxu0 0
    %3451 = vmatprep.subr.bf16.mxu0 0
    %3452 = vmatpush1.bf16.msra.mxu0 0
    %3453 = vmatprep.subr.bf16.mxu0 0
    %3454 = vmatpush1.bf16.msra.mxu0 0
    %3455 = vmatprep.subr.bf16.mxu0 0
    %3456 = vmatpush1.bf16.msra.mxu0 %v3439
    %3457 = vmatprep.subr.bf16.mxu0 0
    %3458 = vmatpush1.bf16.msra.mxu0 %v3438
    %3459 = vmatprep.subr.bf16.mxu0 0
    %3460 = vmatpush1.bf16.msra.mxu0 %v3437
    %3461 = vmatprep.subr.bf16.mxu0 0
    %3462 = vmatpush1.bf16.msra.mxu0 %v3436
    %3463 = vmatprep.subr.bf16.mxu0 0
    %3464 = vmatpush2.bf16.msra.mxu0 0
    %3465 = vmatprep.subr.bf16.mxu0 0
    %3466 = vmatpush2.bf16.msra.mxu0 0
    %3467 = vmatprep.subr.bf16.mxu0 0
    %3468 = vmatpush2.bf16.msra.mxu0 0
    %3469 = vmatprep.subr.bf16.mxu0 0
    %3470 = vmatpush2.bf16.msra.mxu0 0
    %3471 = vmatprep.subr.bf16.mxu0 0
    %3472 = vmatpush2.bf16.msra.mxu0 0
    %3473 = vmatprep.subr.bf16.mxu0 0
    %3474 = vmatpush2.bf16.msra.mxu0 0
    %3475 = vmatprep.subr.bf16.mxu0 0
    %3476 = vmatpush2.bf16.msra.mxu0 0
    %3477 = vmatprep.subr.bf16.mxu0 0
    %3478 = vmatpush2.bf16.msra.mxu0 0
    %3479 = vmatprep.mubr.bf16.mxu0 0
    %3480 = vmatmul.mubr.bf16.gmra.mxu0 %v3445
    %v3481 = vpop.f32.mrf.mxu0
    %v3482 = vadd.f32 %v3418, %v3481
    %v3483 = vpop.f32.mrf.mxu0
    %v3484 = vpop.f32.mrf.mxu0
    %v3485 = vpop.f32.mrf.mxu0
    %3486 = vdwg.mxu0
    %vm3487 = vcmask 17408
    %3488 = vst.msk [vmem:[#allocation19] sm:$0x3] %vm3487, %v3482
    // Predicated region
    $region118: #{tpu_custom_call.1} parent=1 // pred_check
      _
    $region119: #{tpu_custom_call.1} parent=1 // pred_check_branch
      %3490 = sbr.rel (0) target = $region121
    $region120: #{tpu_custom_call.1} parent=1 // pred_region
      %s3492 = ssub.s32 32, 32
      %3493 = vsyncadd [#allocation4], %s3492
      %s3495 = sshll.u32 [#allocation19], 4
      %s3496 = int_to_ptr.vmem [resolvable:$true] %s3495
      %3498 = dma.vmem_to_hbm [thread:$0]  %s3496, 32, %s19, [#allocation4]
    $region121: #{tpu_custom_call.1} parent=1 // pred_fallthru
      _
    // Predicated region
    $region122: #{tpu_custom_call.1} parent=1 // pred_check
      _
    $region123: #{tpu_custom_call.1} parent=1 // pred_check_branch
      %3500 = sbr.rel (0) target = $region125
    $region124: #{tpu_custom_call.1} parent=1 // pred_region
      %3501 = dma.done [#allocation4], 32
    $region125: #{tpu_custom_call.1} parent=1 // pred_fallthru
      _
    %3502 = vsyncpa [#allocation3], 1
    %3503 = vsyncpa [#allocation6], 1
    %3504 = vsyncpa [#allocation9], 1
    %3505 = vsyncpa [#allocation12], 1
    %3506 = vsyncpa [#allocation15], 1
    %3507 = vsyncpa [#allocation18], 1
    %3508 = vsyncpa [#allocation4], 1

</llo_original>
